<compile_context>
chip_gen: v7x
topology: tpu7x:2x2x1
jax: 0.10.0
libtpu: 0.0.40
codegen_flags: <defaults>
</compile_context>

<pallas_src>
import jax
import jax.numpy as jnp
from jax.experimental import pallas as pl
from jax.experimental.pallas import tpu as pltpu

# ----- module constants (from Sine.__init__) --------------------------------
HIDDEN = 1024                      # Linear(1024, 1024) hidden width
COORD_DIMS = (32, 32)
GRID_SIZE = COORD_DIMS[0] * COORD_DIMS[1]          # pde.grid_size = 1024
ORDER = 2
N_DIM = 1
# pde.n_orders: tensor-product derivative multi-indices up to `order` in 2 dims.
N_ORDERS = (ORDER + 1) ** len(COORD_DIMS)          # = 9 (assumption, PDEDenseLayer not given)
IV_DIM = 2 * COORD_DIMS[0] - 1 + 2 * COORD_DIMS[1] - 3   # = 124
STEP_SIZE = 0.05
M_PAD = 8                          # sublane padding of the single coeff row
LANE = 128
N_HEADS = LANE + GRID_SIZE         # cf head padded to 128 lanes + rhs head 1024 = 1152

# ----- streaming configuration ------------------------------------------------
TK = 256                           # K rows streamed per DMA chunk
NK = HIDDEN // TK                  # 4 chunks per weight matrix
N_CHUNKS = 3 * NK                  # w1, w2, wh -> 12 chunks total
N_BUF = 3                          # triple buffer: 1 compute slot + 2 DMAs in flight


# ----- Pallas kernel: fully fused MLP with streamed weights ------------------
def _sine_mlp_kernel(x_ref, b1_ref, b2_ref, bh_ref,      # VMEM (auto-copied, tiny)
                     w1_hbm, w2_hbm, wh_hbm,              # HBM refs (pl.ANY)
                     o_ref,                                # VMEM output (8, 1152) f32
                     wbuf, sem):                           # scratch: weight chunks + DMA sems
    """heads = [cf_nn | rhs_nn](relu(relu(x@W1+b1)@W2+b2)).

    The three weight matrices are streamed HBM->VMEM as 12 K-chunks of shape
    (TK, N) bf16 through a triple-buffered manual DMA pipeline; each chunk's
    partial matmul is computed while the next chunks are still in flight, so
    compute hides entirely under the (dominant) HBM weight stream.
    """
    srcs = [w1_hbm] * NK + [w2_hbm] * NK + [wh_hbm] * NK
    rows = list(range(NK)) * 3

    def copy(idx):
        src = srcs[idx]
        n = src.shape[1]                 # 1024 for w1/w2, 1152 for wh
        slot = idx % N_BUF
        return pltpu.make_async_copy(
            src.at[pl.ds(rows[idx] * TK, TK), :],
            wbuf.at[slot, :, :n],
            sem.at[slot])

    # Prime the pipeline: two chunks in flight before any compute starts.
    copy(0).start()
    copy(1).start()

    idx = 0

    def consume(act_bf16, n_out):
        """Stream NK chunks of the current weight matrix, accumulate in f32."""
        nonlocal idx
        acc = jnp.zeros((M_PAD, n_out), jnp.float32)
        for k in range(NK):
            copy(idx).wait()                               # chunk idx now resident
            if idx + 2 < N_CHUNKS:
                copy(idx + 2).start()                      # keep 2 DMAs in flight
            w_chunk = wbuf[idx % N_BUF, :, :n_out]         # (TK, n_out) bf16, tile-aligned slice
            acc = acc + jnp.dot(act_bf16[:, k * TK:(k + 1) * TK], w_chunk,
                                preferred_element_type=jnp.float32)
            idx += 1
        return acc

    x = x_ref[...].astype(jnp.bfloat16)                              # (8, 1024)
    h1 = jnp.maximum(consume(x, HIDDEN) + b1_ref[...], 0.0)          # f32 epilogue
    h2 = jnp.maximum(consume(h1.astype(jnp.bfloat16), HIDDEN) + b2_ref[...], 0.0)
    y = consume(h2.astype(jnp.bfloat16), N_HEADS) + bh_ref[...]      # (8, 1152) f32
    o_ref[...] = y


def fused_mlp(xp, b1, b2, bh, w1, w2, wh):
    """One pallas_call for the whole network: (8,1024) f32 -> (8,1152) f32."""
    return pl.pallas_call(
        _sine_mlp_kernel,
        out_shape=jax.ShapeDtypeStruct((M_PAD, N_HEADS), jnp.float32),
        in_specs=[
            pl.BlockSpec((M_PAD, HIDDEN), lambda: (0, 0)),    # x   (VMEM, 32 KiB)
            pl.BlockSpec((1, HIDDEN), lambda: (0, 0)),        # b1  (VMEM)
            pl.BlockSpec((1, HIDDEN), lambda: (0, 0)),        # b2  (VMEM)
            pl.BlockSpec((1, N_HEADS), lambda: (0, 0)),       # bh  (VMEM)
            pl.BlockSpec(memory_space=pl.ANY),                # w1  (HBM, streamed)
            pl.BlockSpec(memory_space=pl.ANY),                # w2  (HBM, streamed)
            pl.BlockSpec(memory_space=pl.ANY),                # wh  (HBM, streamed)
        ],
        out_specs=pl.BlockSpec((M_PAD, N_HEADS), lambda: (0, 0)),
        scratch_shapes=[
            pltpu.VMEM((N_BUF, TK, N_HEADS), jnp.bfloat16),   # ~1.7 MiB chunk buffers
            pltpu.SemaphoreType.DMA((N_BUF,)),
        ],
        # Single TensorCore on purpose: the workload is HBM weight-streaming
        # bound; sharding it would duplicate the weight stream.
    )(xp, b1, b2, bh, w1, w2, wh)


# ----- parameter construction (deterministic, in-script) ---------------------
def init_params(key):
    ks = jax.random.split(key, 10)
    dt = jnp.float32

    def linear(kw, kb, fan_in, fan_out):
        # PyTorch nn.Linear default init: U(-1/sqrt(fan_in), +1/sqrt(fan_in))
        bound = 1.0 / float(jnp.sqrt(jnp.asarray(fan_in, dt)))
        w = jax.random.uniform(kw, (fan_in, fan_out), dt, -bound, bound)
        b = jax.random.uniform(kb, (1, fan_out), dt, -bound, bound)
        return w, b

    params = {}
    params["coeffs"] = jax.random.normal(ks[0], (N_DIM, 1, HIDDEN), dt)

    w1, b1 = linear(ks[1], ks[2], HIDDEN, HIDDEN)        # _dfnn[0]
    w2, b2 = linear(ks[3], ks[4], HIDDEN, HIDDEN)        # _dfnn[2]
    wr, br = linear(ks[5], ks[6], HIDDEN, GRID_SIZE)     # rhs_nn
    wc, bc = linear(ks[7], ks[8], HIDDEN, N_ORDERS)      # cf_nn

    # cf head padded to a full 128-lane tile, then fused with rhs head along N.
    wc_pad = jnp.zeros((HIDDEN, LANE), dt).at[:, :N_ORDERS].set(wc)
    bc_pad = jnp.zeros((1, LANE), dt).at[:, :N_ORDERS].set(bc)
    wh = jnp.concatenate([wc_pad, wr], axis=1)           # (1024, 1152)
    bh = jnp.concatenate([bc_pad, br], axis=1)           # (1, 1152)

    # bf16 weight streaming (halves HBM bytes); biases stay f32 for the epilogue.
    params["w1"] = w1.astype(jnp.bfloat16)
    params["w2"] = w2.astype(jnp.bfloat16)
    params["wh"] = wh.astype(jnp.bfloat16)
    params["b1"] = b1
    params["b2"] = b2
    params["bh"] = bh

    # steps0/steps1 = logit(step_size) as in the module
    logit = jnp.log(jnp.asarray(STEP_SIZE / (1.0 - STEP_SIZE), dt))
    params["steps0"] = jnp.full((1, COORD_DIMS[0] - 1), logit, dt)
    params["steps1"] = jnp.full((1, COORD_DIMS[1] - 1), logit, dt)
    return params


# ----- forward ----------------------------------------------------------------
def sine_forward(params, init_list, *, bs, time_varying_source=True):
    # coeffs (1,1,1024) -> (1,1024) -> pad rows to 8 (native f32 sublane tile);
    # cast to bf16 happens inside the kernel (layout hygiene for v5e).
    x = params["coeffs"].reshape(N_DIM, HIDDEN)
    xp = jnp.zeros((M_PAD, HIDDEN), jnp.float32).at[0].set(x[0])

    # Single fused Pallas call: _dfnn (2x Linear+ReLU) + cf_nn + rhs_nn,
    # with weights streamed HBM->VMEM overlapped with the matmuls.
    heads = fused_mlp(xp, params["b1"], params["b2"], params["bh"],
                      params["w1"], params["w2"], params["wh"])      # (8, 1152) f32

    # _coeffs = cf_nn(_res)  -> (1, 1, n_orders)
    _coeffs = heads[0:1, :N_ORDERS].reshape(N_DIM, 1, N_ORDERS)

    # rhs = rhs_nn(_res)  -> (1, 1, grid_size)   (or zeros, as in the reference)
    if time_varying_source:
        rhs = heads[0:1, LANE:LANE + GRID_SIZE].reshape(N_DIM, 1, GRID_SIZE)
    else:
        # NOTE: mirrors the reference module, whose zero branch has shape
        # (bs, grid_size) while the time-varying branch has (n_dim, 1, grid_size).
        rhs = jnp.zeros((bs, GRID_SIZE), jnp.float32)

    # coeffs = _coeffs.unsqueeze(0).repeat(bs, 1, grid_size, 1)  (kept in XLA)
    coeffs_full = jnp.tile(_coeffs[None], (bs, 1, GRID_SIZE, 1))  # (bs,1,grid,n_orders)

    # iv_rhs = torch.cat(init_list, dim=0)
    iv_rhs = jnp.concatenate(init_list, axis=0)

    # steps: sigmoid(logit) clipped to [0.005, 0.1] -- tiny, plain jnp (XLA fuses it).
    steps0 = jnp.clip(jax.nn.sigmoid(params["steps0"]), 0.005, 0.1)
    steps1 = jnp.clip(jax.nn.sigmoid(params["steps1"]), 0.005, 0.1)

    # TODO(synk): PDEDenseLayer (u0, u, eps = self.pde(coeffs, rhs, iv_rhs, steps_list))
    # is an external solver module not provided in the source file; its outputs u0/u
    # cannot be reproduced here.  We return _coeffs plus all prepared solver inputs.
    return {
        "_coeffs": _coeffs,
        "rhs": rhs,
        "coeffs": coeffs_full,
        "iv_rhs": iv_rhs,
        "steps0": steps0,
        "steps1": steps1,
    }


# ----- main -------------------------------------------------------------------
if __name__ == "__main__":
    bs = 2
    key = jax.random.PRNGKey(0)
    k_params, k_iv = jax.random.split(key)
    params = init_params(k_params)

    # init_list: bs initial-value tensors, concatenated along dim 0 in forward.
    iv_keys = jax.random.split(k_iv, bs)
    init_list = [jax.random.normal(k, (1, IV_DIM), jnp.float32) for k in iv_keys]

    out = sine_forward(params, init_list, bs=bs, time_varying_source=True)
    out = jax.block_until_ready(out)

    assert out["_coeffs"].shape == (N_DIM, 1, N_ORDERS)
    assert out["rhs"].shape == (N_DIM, 1, GRID_SIZE)
    assert out["coeffs"].shape == (bs, 1, GRID_SIZE, N_ORDERS)
    assert out["iv_rhs"].shape == (bs, IV_DIM)
    assert out["steps0"].shape == (1, COORD_DIMS[0] - 1)
    assert out["steps1"].shape == (1, COORD_DIMS[1] - 1)
    assert bool(jnp.all(jnp.isfinite(out["_coeffs"])))
    print("KERNEL_OK")
</pallas_src>

<mosaic_0001>
module attributes {stable_mosaic.version = 11 : i64} {
  func.func @_sine_mlp_kernel(%arg0: memref<8x1024xf32, #tpu.memory_space<vmem>>, %arg1: memref<1x1024xf32, #tpu.memory_space<vmem>>, %arg2: memref<1x1024xf32, #tpu.memory_space<vmem>>, %arg3: memref<1x1152xf32, #tpu.memory_space<vmem>>, %arg4: memref<1024x1024xbf16, #tpu.memory_space<any>>, %arg5: memref<1024x1024xbf16, #tpu.memory_space<any>>, %arg6: memref<1024x1152xbf16, #tpu.memory_space<any>>, %arg7: memref<8x1152xf32, #tpu.memory_space<vmem>>, %arg8: memref<3x256x1152xbf16, #tpu.memory_space<vmem>>, %arg9: memref<3x!tpu.dma_semaphore, #tpu.memory_space<semaphore_mem>>) attributes {dimension_semantics = [], scalar_prefetch = 0 : i64, scratch_operands = 2 : i64, tpu.core_type = #tpu.core_type<tc>} {
    %c0_i32 = arith.constant 0 : i32
    %c0_i32_0 = arith.constant 0 : i32
    %c0_i32_1 = arith.constant 0 : i32
    %c0_i32_2 = arith.constant 0 : i32
    %0 = tpu.memref_slice %arg4[%c0_i32_1, %c0_i32_2] : memref<1024x1024xbf16, #tpu.memory_space<any>> -> memref<256x1024xbf16, #tpu.memory_space<any>>
    %c0_i32_3 = arith.constant 0 : i32
    %c0_i32_4 = arith.constant 0 : i32
    %1 = tpu.memref_slice %arg8[%c0_i32, %c0_i32_3, %c0_i32_4] : memref<3x256x1152xbf16, #tpu.memory_space<vmem>> -> memref<1x256x1024xbf16, #tpu.memory_space<vmem>>
    %2 = tpu.memref_squeeze %1 : memref<1x256x1024xbf16, #tpu.memory_space<vmem>> -> memref<256x1024xbf16, #tpu.memory_space<vmem>>
    %3 = tpu.memref_slice %arg9[%c0_i32_0] : memref<3x!tpu.dma_semaphore, #tpu.memory_space<semaphore_mem>> -> memref<1x!tpu.dma_semaphore, #tpu.memory_space<semaphore_mem>>
    %4 = tpu.memref_squeeze %3 : memref<1x!tpu.dma_semaphore, #tpu.memory_space<semaphore_mem>> -> memref<!tpu.dma_semaphore, #tpu.memory_space<semaphore_mem>>
    tpu.enqueue_dma source(%0 : memref<256x1024xbf16, #tpu.memory_space<any>>) target(%2 : memref<256x1024xbf16, #tpu.memory_space<vmem>>) target_semaphore(%4 : memref<!tpu.dma_semaphore, #tpu.memory_space<semaphore_mem>>)
    %c1_i32 = arith.constant 1 : i32
    %c1_i32_5 = arith.constant 1 : i32
    %c256_i32 = arith.constant 256 : i32
    %c0_i32_6 = arith.constant 0 : i32
    %5 = tpu.memref_slice %arg4[%c256_i32, %c0_i32_6] : memref<1024x1024xbf16, #tpu.memory_space<any>> -> memref<256x1024xbf16, #tpu.memory_space<any>>
    %c0_i32_7 = arith.constant 0 : i32
    %c0_i32_8 = arith.constant 0 : i32
    %6 = tpu.memref_slice %arg8[%c1_i32, %c0_i32_7, %c0_i32_8] : memref<3x256x1152xbf16, #tpu.memory_space<vmem>> -> memref<1x256x1024xbf16, #tpu.memory_space<vmem>>
    %7 = tpu.memref_squeeze %6 : memref<1x256x1024xbf16, #tpu.memory_space<vmem>> -> memref<256x1024xbf16, #tpu.memory_space<vmem>>
    %8 = tpu.memref_slice %arg9[%c1_i32_5] : memref<3x!tpu.dma_semaphore, #tpu.memory_space<semaphore_mem>> -> memref<1x!tpu.dma_semaphore, #tpu.memory_space<semaphore_mem>>
    %9 = tpu.memref_squeeze %8 : memref<1x!tpu.dma_semaphore, #tpu.memory_space<semaphore_mem>> -> memref<!tpu.dma_semaphore, #tpu.memory_space<semaphore_mem>>
    tpu.enqueue_dma source(%5 : memref<256x1024xbf16, #tpu.memory_space<any>>) target(%7 : memref<256x1024xbf16, #tpu.memory_space<vmem>>) target_semaphore(%9 : memref<!tpu.dma_semaphore, #tpu.memory_space<semaphore_mem>>)
    %c0 = arith.constant 0 : index
    %c0_9 = arith.constant 0 : index
    %10 = vector.load %arg0[%c0, %c0_9] : memref<8x1024xf32, #tpu.memory_space<vmem>>, vector<8x1024xf32>
    %11 = arith.truncf %10 : vector<8x1024xf32> to vector<8x1024xbf16>
    %cst = arith.constant 0.000000e+00 : f32
    %12 = vector.broadcast %cst : f32 to vector<8x1024xf32>
    %c0_i32_10 = arith.constant 0 : i32
    %c0_i32_11 = arith.constant 0 : i32
    %c0_i32_12 = arith.constant 0 : i32
    %c0_i32_13 = arith.constant 0 : i32
    %13 = tpu.memref_slice %arg4[%c0_i32_12, %c0_i32_13] : memref<1024x1024xbf16, #tpu.memory_space<any>> -> memref<256x1024xbf16, #tpu.memory_space<any>>
    %c0_i32_14 = arith.constant 0 : i32
    %c0_i32_15 = arith.constant 0 : i32
    %14 = tpu.memref_slice %arg8[%c0_i32_10, %c0_i32_14, %c0_i32_15] : memref<3x256x1152xbf16, #tpu.memory_space<vmem>> -> memref<1x256x1024xbf16, #tpu.memory_space<vmem>>
    %15 = tpu.memref_squeeze %14 : memref<1x256x1024xbf16, #tpu.memory_space<vmem>> -> memref<256x1024xbf16, #tpu.memory_space<vmem>>
    %16 = tpu.memref_slice %arg9[%c0_i32_11] : memref<3x!tpu.dma_semaphore, #tpu.memory_space<semaphore_mem>> -> memref<1x!tpu.dma_semaphore, #tpu.memory_space<semaphore_mem>>
    %17 = tpu.memref_squeeze %16 : memref<1x!tpu.dma_semaphore, #tpu.memory_space<semaphore_mem>> -> memref<!tpu.dma_semaphore, #tpu.memory_space<semaphore_mem>>
    tpu.wait_dma2 semaphore(%17 : memref<!tpu.dma_semaphore, #tpu.memory_space<semaphore_mem>>) src(%13 : memref<256x1024xbf16, #tpu.memory_space<any>>) dst(%15 : memref<256x1024xbf16, #tpu.memory_space<vmem>>)
    %c2_i32 = arith.constant 2 : i32
    %c2_i32_16 = arith.constant 2 : i32
    %c512_i32 = arith.constant 512 : i32
    %c0_i32_17 = arith.constant 0 : i32
    %18 = tpu.memref_slice %arg4[%c512_i32, %c0_i32_17] : memref<1024x1024xbf16, #tpu.memory_space<any>> -> memref<256x1024xbf16, #tpu.memory_space<any>>
    %c0_i32_18 = arith.constant 0 : i32
    %c0_i32_19 = arith.constant 0 : i32
    %19 = tpu.memref_slice %arg8[%c2_i32, %c0_i32_18, %c0_i32_19] : memref<3x256x1152xbf16, #tpu.memory_space<vmem>> -> memref<1x256x1024xbf16, #tpu.memory_space<vmem>>
    %20 = tpu.memref_squeeze %19 : memref<1x256x1024xbf16, #tpu.memory_space<vmem>> -> memref<256x1024xbf16, #tpu.memory_space<vmem>>
    %21 = tpu.memref_slice %arg9[%c2_i32_16] : memref<3x!tpu.dma_semaphore, #tpu.memory_space<semaphore_mem>> -> memref<1x!tpu.dma_semaphore, #tpu.memory_space<semaphore_mem>>
    %22 = tpu.memref_squeeze %21 : memref<1x!tpu.dma_semaphore, #tpu.memory_space<semaphore_mem>> -> memref<!tpu.dma_semaphore, #tpu.memory_space<semaphore_mem>>
    tpu.enqueue_dma source(%18 : memref<256x1024xbf16, #tpu.memory_space<any>>) target(%20 : memref<256x1024xbf16, #tpu.memory_space<vmem>>) target_semaphore(%22 : memref<!tpu.dma_semaphore, #tpu.memory_space<semaphore_mem>>)
    %c0_20 = arith.constant 0 : index
    %c0_21 = arith.constant 0 : index
    %c0_22 = arith.constant 0 : index
    %23 = vector.load %arg8[%c0_20, %c0_21, %c0_22] : memref<3x256x1152xbf16, #tpu.memory_space<vmem>>, vector<1x256x1024xbf16>
    %24 = vector.shape_cast %23 : vector<1x256x1024xbf16> to vector<256x1024xbf16>
    %25 = vector.extract_strided_slice %11 {offsets = [0, 0], sizes = [8, 256], strides = [1, 1]} : vector<8x1024xbf16> to vector<8x256xbf16>
    %cst_23 = arith.constant dense<0.000000e+00> : vector<8x1024xf32>
    %26 = tpu.matmul %25, %24, %cst_23 {dimension_numbers = #tpu.dot_dimension_numbers<[1], [0], [0], [1], [0, 0, 1, 1], [], []>} : vector<8x256xbf16>, vector<256x1024xbf16>, vector<8x1024xf32> -> vector<8x1024xf32>
    %27 = arith.addf %12, %26 : vector<8x1024xf32>
    %c1_i32_24 = arith.constant 1 : i32
    %c1_i32_25 = arith.constant 1 : i32
    %c256_i32_26 = arith.constant 256 : i32
    %c0_i32_27 = arith.constant 0 : i32
    %28 = tpu.memref_slice %arg4[%c256_i32_26, %c0_i32_27] : memref<1024x1024xbf16, #tpu.memory_space<any>> -> memref<256x1024xbf16, #tpu.memory_space<any>>
    %c0_i32_28 = arith.constant 0 : i32
    %c0_i32_29 = arith.constant 0 : i32
    %29 = tpu.memref_slice %arg8[%c1_i32_24, %c0_i32_28, %c0_i32_29] : memref<3x256x1152xbf16, #tpu.memory_space<vmem>> -> memref<1x256x1024xbf16, #tpu.memory_space<vmem>>
    %30 = tpu.memref_squeeze %29 : memref<1x256x1024xbf16, #tpu.memory_space<vmem>> -> memref<256x1024xbf16, #tpu.memory_space<vmem>>
    %31 = tpu.memref_slice %arg9[%c1_i32_25] : memref<3x!tpu.dma_semaphore, #tpu.memory_space<semaphore_mem>> -> memref<1x!tpu.dma_semaphore, #tpu.memory_space<semaphore_mem>>
    %32 = tpu.memref_squeeze %31 : memref<1x!tpu.dma_semaphore, #tpu.memory_space<semaphore_mem>> -> memref<!tpu.dma_semaphore, #tpu.memory_space<semaphore_mem>>
    tpu.wait_dma2 semaphore(%32 : memref<!tpu.dma_semaphore, #tpu.memory_space<semaphore_mem>>) src(%28 : memref<256x1024xbf16, #tpu.memory_space<any>>) dst(%30 : memref<256x1024xbf16, #tpu.memory_space<vmem>>)
    %c0_i32_30 = arith.constant 0 : i32
    %c0_i32_31 = arith.constant 0 : i32
    %c768_i32 = arith.constant 768 : i32
    %c0_i32_32 = arith.constant 0 : i32
    %33 = tpu.memref_slice %arg4[%c768_i32, %c0_i32_32] : memref<1024x1024xbf16, #tpu.memory_space<any>> -> memref<256x1024xbf16, #tpu.memory_space<any>>
    %c0_i32_33 = arith.constant 0 : i32
    %c0_i32_34 = arith.constant 0 : i32
    %34 = tpu.memref_slice %arg8[%c0_i32_30, %c0_i32_33, %c0_i32_34] : memref<3x256x1152xbf16, #tpu.memory_space<vmem>> -> memref<1x256x1024xbf16, #tpu.memory_space<vmem>>
    %35 = tpu.memref_squeeze %34 : memref<1x256x1024xbf16, #tpu.memory_space<vmem>> -> memref<256x1024xbf16, #tpu.memory_space<vmem>>
    %36 = tpu.memref_slice %arg9[%c0_i32_31] : memref<3x!tpu.dma_semaphore, #tpu.memory_space<semaphore_mem>> -> memref<1x!tpu.dma_semaphore, #tpu.memory_space<semaphore_mem>>
    %37 = tpu.memref_squeeze %36 : memref<1x!tpu.dma_semaphore, #tpu.memory_space<semaphore_mem>> -> memref<!tpu.dma_semaphore, #tpu.memory_space<semaphore_mem>>
    tpu.enqueue_dma source(%33 : memref<256x1024xbf16, #tpu.memory_space<any>>) target(%35 : memref<256x1024xbf16, #tpu.memory_space<vmem>>) target_semaphore(%37 : memref<!tpu.dma_semaphore, #tpu.memory_space<semaphore_mem>>)
    %c1 = arith.constant 1 : index
    %c0_35 = arith.constant 0 : index
    %c0_36 = arith.constant 0 : index
    %38 = vector.load %arg8[%c1, %c0_35, %c0_36] : memref<3x256x1152xbf16, #tpu.memory_space<vmem>>, vector<1x256x1024xbf16>
    %39 = vector.shape_cast %38 : vector<1x256x1024xbf16> to vector<256x1024xbf16>
    %40 = vector.extract_strided_slice %11 {offsets = [0, 256], sizes = [8, 256], strides = [1, 1]} : vector<8x1024xbf16> to vector<8x256xbf16>
    %cst_37 = arith.constant dense<0.000000e+00> : vector<8x1024xf32>
    %41 = tpu.matmul %40, %39, %cst_37 {dimension_numbers = #tpu.dot_dimension_numbers<[1], [0], [0], [1], [0, 0, 1, 1], [], []>} : vector<8x256xbf16>, vector<256x1024xbf16>, vector<8x1024xf32> -> vector<8x1024xf32>
    %42 = arith.addf %27, %41 : vector<8x1024xf32>
    %c2_i32_38 = arith.constant 2 : i32
    %c2_i32_39 = arith.constant 2 : i32
    %c512_i32_40 = arith.constant 512 : i32
    %c0_i32_41 = arith.constant 0 : i32
    %43 = tpu.memref_slice %arg4[%c512_i32_40, %c0_i32_41] : memref<1024x1024xbf16, #tpu.memory_space<any>> -> memref<256x1024xbf16, #tpu.memory_space<any>>
    %c0_i32_42 = arith.constant 0 : i32
    %c0_i32_43 = arith.constant 0 : i32
    %44 = tpu.memref_slice %arg8[%c2_i32_38, %c0_i32_42, %c0_i32_43] : memref<3x256x1152xbf16, #tpu.memory_space<vmem>> -> memref<1x256x1024xbf16, #tpu.memory_space<vmem>>
    %45 = tpu.memref_squeeze %44 : memref<1x256x1024xbf16, #tpu.memory_space<vmem>> -> memref<256x1024xbf16, #tpu.memory_space<vmem>>
    %46 = tpu.memref_slice %arg9[%c2_i32_39] : memref<3x!tpu.dma_semaphore, #tpu.memory_space<semaphore_mem>> -> memref<1x!tpu.dma_semaphore, #tpu.memory_space<semaphore_mem>>
    %47 = tpu.memref_squeeze %46 : memref<1x!tpu.dma_semaphore, #tpu.memory_space<semaphore_mem>> -> memref<!tpu.dma_semaphore, #tpu.memory_space<semaphore_mem>>
    tpu.wait_dma2 semaphore(%47 : memref<!tpu.dma_semaphore, #tpu.memory_space<semaphore_mem>>) src(%43 : memref<256x1024xbf16, #tpu.memory_space<any>>) dst(%45 : memref<256x1024xbf16, #tpu.memory_space<vmem>>)
    %c1_i32_44 = arith.constant 1 : i32
    %c1_i32_45 = arith.constant 1 : i32
    %c0_i32_46 = arith.constant 0 : i32
    %c0_i32_47 = arith.constant 0 : i32
    %48 = tpu.memref_slice %arg5[%c0_i32_46, %c0_i32_47] : memref<1024x1024xbf16, #tpu.memory_space<any>> -> memref<256x1024xbf16, #tpu.memory_space<any>>
    %c0_i32_48 = arith.constant 0 : i32
    %c0_i32_49 = arith.constant 0 : i32
    %49 = tpu.memref_slice %arg8[%c1_i32_44, %c0_i32_48, %c0_i32_49] : memref<3x256x1152xbf16, #tpu.memory_space<vmem>> -> memref<1x256x1024xbf16, #tpu.memory_space<vmem>>
    %50 = tpu.memref_squeeze %49 : memref<1x256x1024xbf16, #tpu.memory_space<vmem>> -> memref<256x1024xbf16, #tpu.memory_space<vmem>>
    %51 = tpu.memref_slice %arg9[%c1_i32_45] : memref<3x!tpu.dma_semaphore, #tpu.memory_space<semaphore_mem>> -> memref<1x!tpu.dma_semaphore, #tpu.memory_space<semaphore_mem>>
    %52 = tpu.memref_squeeze %51 : memref<1x!tpu.dma_semaphore, #tpu.memory_space<semaphore_mem>> -> memref<!tpu.dma_semaphore, #tpu.memory_space<semaphore_mem>>
    tpu.enqueue_dma source(%48 : memref<256x1024xbf16, #tpu.memory_space<any>>) target(%50 : memref<256x1024xbf16, #tpu.memory_space<vmem>>) target_semaphore(%52 : memref<!tpu.dma_semaphore, #tpu.memory_space<semaphore_mem>>)
    %c2 = arith.constant 2 : index
    %c0_50 = arith.constant 0 : index
    %c0_51 = arith.constant 0 : index
    %53 = vector.load %arg8[%c2, %c0_50, %c0_51] : memref<3x256x1152xbf16, #tpu.memory_space<vmem>>, vector<1x256x1024xbf16>
    %54 = vector.shape_cast %53 : vector<1x256x1024xbf16> to vector<256x1024xbf16>
    %55 = vector.extract_strided_slice %11 {offsets = [0, 512], sizes = [8, 256], strides = [1, 1]} : vector<8x1024xbf16> to vector<8x256xbf16>
    %cst_52 = arith.constant dense<0.000000e+00> : vector<8x1024xf32>
    %56 = tpu.matmul %55, %54, %cst_52 {dimension_numbers = #tpu.dot_dimension_numbers<[1], [0], [0], [1], [0, 0, 1, 1], [], []>} : vector<8x256xbf16>, vector<256x1024xbf16>, vector<8x1024xf32> -> vector<8x1024xf32>
    %57 = arith.addf %42, %56 : vector<8x1024xf32>
    %c0_i32_53 = arith.constant 0 : i32
    %c0_i32_54 = arith.constant 0 : i32
    %c768_i32_55 = arith.constant 768 : i32
    %c0_i32_56 = arith.constant 0 : i32
    %58 = tpu.memref_slice %arg4[%c768_i32_55, %c0_i32_56] : memref<1024x1024xbf16, #tpu.memory_space<any>> -> memref<256x1024xbf16, #tpu.memory_space<any>>
    %c0_i32_57 = arith.constant 0 : i32
    %c0_i32_58 = arith.constant 0 : i32
    %59 = tpu.memref_slice %arg8[%c0_i32_53, %c0_i32_57, %c0_i32_58] : memref<3x256x1152xbf16, #tpu.memory_space<vmem>> -> memref<1x256x1024xbf16, #tpu.memory_space<vmem>>
    %60 = tpu.memref_squeeze %59 : memref<1x256x1024xbf16, #tpu.memory_space<vmem>> -> memref<256x1024xbf16, #tpu.memory_space<vmem>>
    %61 = tpu.memref_slice %arg9[%c0_i32_54] : memref<3x!tpu.dma_semaphore, #tpu.memory_space<semaphore_mem>> -> memref<1x!tpu.dma_semaphore, #tpu.memory_space<semaphore_mem>>
    %62 = tpu.memref_squeeze %61 : memref<1x!tpu.dma_semaphore, #tpu.memory_space<semaphore_mem>> -> memref<!tpu.dma_semaphore, #tpu.memory_space<semaphore_mem>>
    tpu.wait_dma2 semaphore(%62 : memref<!tpu.dma_semaphore, #tpu.memory_space<semaphore_mem>>) src(%58 : memref<256x1024xbf16, #tpu.memory_space<any>>) dst(%60 : memref<256x1024xbf16, #tpu.memory_space<vmem>>)
    %c2_i32_59 = arith.constant 2 : i32
    %c2_i32_60 = arith.constant 2 : i32
    %c256_i32_61 = arith.constant 256 : i32
    %c0_i32_62 = arith.constant 0 : i32
    %63 = tpu.memref_slice %arg5[%c256_i32_61, %c0_i32_62] : memref<1024x1024xbf16, #tpu.memory_space<any>> -> memref<256x1024xbf16, #tpu.memory_space<any>>
    %c0_i32_63 = arith.constant 0 : i32
    %c0_i32_64 = arith.constant 0 : i32
    %64 = tpu.memref_slice %arg8[%c2_i32_59, %c0_i32_63, %c0_i32_64] : memref<3x256x1152xbf16, #tpu.memory_space<vmem>> -> memref<1x256x1024xbf16, #tpu.memory_space<vmem>>
    %65 = tpu.memref_squeeze %64 : memref<1x256x1024xbf16, #tpu.memory_space<vmem>> -> memref<256x1024xbf16, #tpu.memory_space<vmem>>
    %66 = tpu.memref_slice %arg9[%c2_i32_60] : memref<3x!tpu.dma_semaphore, #tpu.memory_space<semaphore_mem>> -> memref<1x!tpu.dma_semaphore, #tpu.memory_space<semaphore_mem>>
    %67 = tpu.memref_squeeze %66 : memref<1x!tpu.dma_semaphore, #tpu.memory_space<semaphore_mem>> -> memref<!tpu.dma_semaphore, #tpu.memory_space<semaphore_mem>>
    tpu.enqueue_dma source(%63 : memref<256x1024xbf16, #tpu.memory_space<any>>) target(%65 : memref<256x1024xbf16, #tpu.memory_space<vmem>>) target_semaphore(%67 : memref<!tpu.dma_semaphore, #tpu.memory_space<semaphore_mem>>)
    %c0_65 = arith.constant 0 : index
    %c0_66 = arith.constant 0 : index
    %c0_67 = arith.constant 0 : index
    %68 = vector.load %arg8[%c0_65, %c0_66, %c0_67] : memref<3x256x1152xbf16, #tpu.memory_space<vmem>>, vector<1x256x1024xbf16>
    %69 = vector.shape_cast %68 : vector<1x256x1024xbf16> to vector<256x1024xbf16>
    %70 = vector.extract_strided_slice %11 {offsets = [0, 768], sizes = [8, 256], strides = [1, 1]} : vector<8x1024xbf16> to vector<8x256xbf16>
    %cst_68 = arith.constant dense<0.000000e+00> : vector<8x1024xf32>
    %71 = tpu.matmul %70, %69, %cst_68 {dimension_numbers = #tpu.dot_dimension_numbers<[1], [0], [0], [1], [0, 0, 1, 1], [], []>} : vector<8x256xbf16>, vector<256x1024xbf16>, vector<8x1024xf32> -> vector<8x1024xf32>
    %72 = arith.addf %57, %71 : vector<8x1024xf32>
    %c0_69 = arith.constant 0 : index
    %c0_70 = arith.constant 0 : index
    %73 = vector.load %arg1[%c0_69, %c0_70] : memref<1x1024xf32, #tpu.memory_space<vmem>>, vector<1x1024xf32>
    %74 = vector.broadcast %73 : vector<1x1024xf32> to vector<8x1024xf32>
    %75 = arith.addf %72, %74 : vector<8x1024xf32>
    %cst_71 = arith.constant 0.000000e+00 : f32
    %76 = vector.broadcast %cst_71 : f32 to vector<8x1024xf32>
    %77 = arith.maximumf %75, %76 : vector<8x1024xf32>
    %78 = arith.truncf %77 : vector<8x1024xf32> to vector<8x1024xbf16>
    %cst_72 = arith.constant 0.000000e+00 : f32
    %79 = vector.broadcast %cst_72 : f32 to vector<8x1024xf32>
    %c1_i32_73 = arith.constant 1 : i32
    %c1_i32_74 = arith.constant 1 : i32
    %c0_i32_75 = arith.constant 0 : i32
    %c0_i32_76 = arith.constant 0 : i32
    %80 = tpu.memref_slice %arg5[%c0_i32_75, %c0_i32_76] : memref<1024x1024xbf16, #tpu.memory_space<any>> -> memref<256x1024xbf16, #tpu.memory_space<any>>
    %c0_i32_77 = arith.constant 0 : i32
    %c0_i32_78 = arith.constant 0 : i32
    %81 = tpu.memref_slice %arg8[%c1_i32_73, %c0_i32_77, %c0_i32_78] : memref<3x256x1152xbf16, #tpu.memory_space<vmem>> -> memref<1x256x1024xbf16, #tpu.memory_space<vmem>>
    %82 = tpu.memref_squeeze %81 : memref<1x256x1024xbf16, #tpu.memory_space<vmem>> -> memref<256x1024xbf16, #tpu.memory_space<vmem>>
    %83 = tpu.memref_slice %arg9[%c1_i32_74] : memref<3x!tpu.dma_semaphore, #tpu.memory_space<semaphore_mem>> -> memref<1x!tpu.dma_semaphore, #tpu.memory_space<semaphore_mem>>
    %84 = tpu.memref_squeeze %83 : memref<1x!tpu.dma_semaphore, #tpu.memory_space<semaphore_mem>> -> memref<!tpu.dma_semaphore, #tpu.memory_space<semaphore_mem>>
    tpu.wait_dma2 semaphore(%84 : memref<!tpu.dma_semaphore, #tpu.memory_space<semaphore_mem>>) src(%80 : memref<256x1024xbf16, #tpu.memory_space<any>>) dst(%82 : memref<256x1024xbf16, #tpu.memory_space<vmem>>)
    %c0_i32_79 = arith.constant 0 : i32
    %c0_i32_80 = arith.constant 0 : i32
    %c512_i32_81 = arith.constant 512 : i32
    %c0_i32_82 = arith.constant 0 : i32
    %85 = tpu.memref_slice %arg5[%c512_i32_81, %c0_i32_82] : memref<1024x1024xbf16, #tpu.memory_space<any>> -> memref<256x1024xbf16, #tpu.memory_space<any>>
    %c0_i32_83 = arith.constant 0 : i32
    %c0_i32_84 = arith.constant 0 : i32
    %86 = tpu.memref_slice %arg8[%c0_i32_79, %c0_i32_83, %c0_i32_84] : memref<3x256x1152xbf16, #tpu.memory_space<vmem>> -> memref<1x256x1024xbf16, #tpu.memory_space<vmem>>
    %87 = tpu.memref_squeeze %86 : memref<1x256x1024xbf16, #tpu.memory_space<vmem>> -> memref<256x1024xbf16, #tpu.memory_space<vmem>>
    %88 = tpu.memref_slice %arg9[%c0_i32_80] : memref<3x!tpu.dma_semaphore, #tpu.memory_space<semaphore_mem>> -> memref<1x!tpu.dma_semaphore, #tpu.memory_space<semaphore_mem>>
    %89 = tpu.memref_squeeze %88 : memref<1x!tpu.dma_semaphore, #tpu.memory_space<semaphore_mem>> -> memref<!tpu.dma_semaphore, #tpu.memory_space<semaphore_mem>>
    tpu.enqueue_dma source(%85 : memref<256x1024xbf16, #tpu.memory_space<any>>) target(%87 : memref<256x1024xbf16, #tpu.memory_space<vmem>>) target_semaphore(%89 : memref<!tpu.dma_semaphore, #tpu.memory_space<semaphore_mem>>)
    %c1_85 = arith.constant 1 : index
    %c0_86 = arith.constant 0 : index
    %c0_87 = arith.constant 0 : index
    %90 = vector.load %arg8[%c1_85, %c0_86, %c0_87] : memref<3x256x1152xbf16, #tpu.memory_space<vmem>>, vector<1x256x1024xbf16>
    %91 = vector.shape_cast %90 : vector<1x256x1024xbf16> to vector<256x1024xbf16>
    %92 = vector.extract_strided_slice %78 {offsets = [0, 0], sizes = [8, 256], strides = [1, 1]} : vector<8x1024xbf16> to vector<8x256xbf16>
    %cst_88 = arith.constant dense<0.000000e+00> : vector<8x1024xf32>
    %93 = tpu.matmul %92, %91, %cst_88 {dimension_numbers = #tpu.dot_dimension_numbers<[1], [0], [0], [1], [0, 0, 1, 1], [], []>} : vector<8x256xbf16>, vector<256x1024xbf16>, vector<8x1024xf32> -> vector<8x1024xf32>
    %94 = arith.addf %79, %93 : vector<8x1024xf32>
    %c2_i32_89 = arith.constant 2 : i32
    %c2_i32_90 = arith.constant 2 : i32
    %c256_i32_91 = arith.constant 256 : i32
    %c0_i32_92 = arith.constant 0 : i32
    %95 = tpu.memref_slice %arg5[%c256_i32_91, %c0_i32_92] : memref<1024x1024xbf16, #tpu.memory_space<any>> -> memref<256x1024xbf16, #tpu.memory_space<any>>
    %c0_i32_93 = arith.constant 0 : i32
    %c0_i32_94 = arith.constant 0 : i32
    %96 = tpu.memref_slice %arg8[%c2_i32_89, %c0_i32_93, %c0_i32_94] : memref<3x256x1152xbf16, #tpu.memory_space<vmem>> -> memref<1x256x1024xbf16, #tpu.memory_space<vmem>>
    %97 = tpu.memref_squeeze %96 : memref<1x256x1024xbf16, #tpu.memory_space<vmem>> -> memref<256x1024xbf16, #tpu.memory_space<vmem>>
    %98 = tpu.memref_slice %arg9[%c2_i32_90] : memref<3x!tpu.dma_semaphore, #tpu.memory_space<semaphore_mem>> -> memref<1x!tpu.dma_semaphore, #tpu.memory_space<semaphore_mem>>
    %99 = tpu.memref_squeeze %98 : memref<1x!tpu.dma_semaphore, #tpu.memory_space<semaphore_mem>> -> memref<!tpu.dma_semaphore, #tpu.memory_space<semaphore_mem>>
    tpu.wait_dma2 semaphore(%99 : memref<!tpu.dma_semaphore, #tpu.memory_space<semaphore_mem>>) src(%95 : memref<256x1024xbf16, #tpu.memory_space<any>>) dst(%97 : memref<256x1024xbf16, #tpu.memory_space<vmem>>)
    %c1_i32_95 = arith.constant 1 : i32
    %c1_i32_96 = arith.constant 1 : i32
    %c768_i32_97 = arith.constant 768 : i32
    %c0_i32_98 = arith.constant 0 : i32
    %100 = tpu.memref_slice %arg5[%c768_i32_97, %c0_i32_98] : memref<1024x1024xbf16, #tpu.memory_space<any>> -> memref<256x1024xbf16, #tpu.memory_space<any>>
    %c0_i32_99 = arith.constant 0 : i32
    %c0_i32_100 = arith.constant 0 : i32
    %101 = tpu.memref_slice %arg8[%c1_i32_95, %c0_i32_99, %c0_i32_100] : memref<3x256x1152xbf16, #tpu.memory_space<vmem>> -> memref<1x256x1024xbf16, #tpu.memory_space<vmem>>
    %102 = tpu.memref_squeeze %101 : memref<1x256x1024xbf16, #tpu.memory_space<vmem>> -> memref<256x1024xbf16, #tpu.memory_space<vmem>>
    %103 = tpu.memref_slice %arg9[%c1_i32_96] : memref<3x!tpu.dma_semaphore, #tpu.memory_space<semaphore_mem>> -> memref<1x!tpu.dma_semaphore, #tpu.memory_space<semaphore_mem>>
    %104 = tpu.memref_squeeze %103 : memref<1x!tpu.dma_semaphore, #tpu.memory_space<semaphore_mem>> -> memref<!tpu.dma_semaphore, #tpu.memory_space<semaphore_mem>>
    tpu.enqueue_dma source(%100 : memref<256x1024xbf16, #tpu.memory_space<any>>) target(%102 : memref<256x1024xbf16, #tpu.memory_space<vmem>>) target_semaphore(%104 : memref<!tpu.dma_semaphore, #tpu.memory_space<semaphore_mem>>)
    %c2_101 = arith.constant 2 : index
    %c0_102 = arith.constant 0 : index
    %c0_103 = arith.constant 0 : index
    %105 = vector.load %arg8[%c2_101, %c0_102, %c0_103] : memref<3x256x1152xbf16, #tpu.memory_space<vmem>>, vector<1x256x1024xbf16>
    %106 = vector.shape_cast %105 : vector<1x256x1024xbf16> to vector<256x1024xbf16>
    %107 = vector.extract_strided_slice %78 {offsets = [0, 256], sizes = [8, 256], strides = [1, 1]} : vector<8x1024xbf16> to vector<8x256xbf16>
    %cst_104 = arith.constant dense<0.000000e+00> : vector<8x1024xf32>
    %108 = tpu.matmul %107, %106, %cst_104 {dimension_numbers = #tpu.dot_dimension_numbers<[1], [0], [0], [1], [0, 0, 1, 1], [], []>} : vector<8x256xbf16>, vector<256x1024xbf16>, vector<8x1024xf32> -> vector<8x1024xf32>
    %109 = arith.addf %94, %108 : vector<8x1024xf32>
    %c0_i32_105 = arith.constant 0 : i32
    %c0_i32_106 = arith.constant 0 : i32
    %c512_i32_107 = arith.constant 512 : i32
    %c0_i32_108 = arith.constant 0 : i32
    %110 = tpu.memref_slice %arg5[%c512_i32_107, %c0_i32_108] : memref<1024x1024xbf16, #tpu.memory_space<any>> -> memref<256x1024xbf16, #tpu.memory_space<any>>
    %c0_i32_109 = arith.constant 0 : i32
    %c0_i32_110 = arith.constant 0 : i32
    %111 = tpu.memref_slice %arg8[%c0_i32_105, %c0_i32_109, %c0_i32_110] : memref<3x256x1152xbf16, #tpu.memory_space<vmem>> -> memref<1x256x1024xbf16, #tpu.memory_space<vmem>>
    %112 = tpu.memref_squeeze %111 : memref<1x256x1024xbf16, #tpu.memory_space<vmem>> -> memref<256x1024xbf16, #tpu.memory_space<vmem>>
    %113 = tpu.memref_slice %arg9[%c0_i32_106] : memref<3x!tpu.dma_semaphore, #tpu.memory_space<semaphore_mem>> -> memref<1x!tpu.dma_semaphore, #tpu.memory_space<semaphore_mem>>
    %114 = tpu.memref_squeeze %113 : memref<1x!tpu.dma_semaphore, #tpu.memory_space<semaphore_mem>> -> memref<!tpu.dma_semaphore, #tpu.memory_space<semaphore_mem>>
    tpu.wait_dma2 semaphore(%114 : memref<!tpu.dma_semaphore, #tpu.memory_space<semaphore_mem>>) src(%110 : memref<256x1024xbf16, #tpu.memory_space<any>>) dst(%112 : memref<256x1024xbf16, #tpu.memory_space<vmem>>)
    %c2_i32_111 = arith.constant 2 : i32
    %c2_i32_112 = arith.constant 2 : i32
    %c0_i32_113 = arith.constant 0 : i32
    %c0_i32_114 = arith.constant 0 : i32
    %115 = tpu.memref_slice %arg6[%c0_i32_113, %c0_i32_114] : memref<1024x1152xbf16, #tpu.memory_space<any>> -> memref<256x1152xbf16, #tpu.memory_space<any>>
    %c0_i32_115 = arith.constant 0 : i32
    %c0_i32_116 = arith.constant 0 : i32
    %116 = tpu.memref_slice %arg8[%c2_i32_111, %c0_i32_115, %c0_i32_116] : memref<3x256x1152xbf16, #tpu.memory_space<vmem>> -> memref<1x256x1152xbf16, #tpu.memory_space<vmem>>
    %117 = tpu.memref_squeeze %116 : memref<1x256x1152xbf16, #tpu.memory_space<vmem>> -> memref<256x1152xbf16, #tpu.memory_space<vmem>>
    %118 = tpu.memref_slice %arg9[%c2_i32_112] : memref<3x!tpu.dma_semaphore, #tpu.memory_space<semaphore_mem>> -> memref<1x!tpu.dma_semaphore, #tpu.memory_space<semaphore_mem>>
    %119 = tpu.memref_squeeze %118 : memref<1x!tpu.dma_semaphore, #tpu.memory_space<semaphore_mem>> -> memref<!tpu.dma_semaphore, #tpu.memory_space<semaphore_mem>>
    tpu.enqueue_dma source(%115 : memref<256x1152xbf16, #tpu.memory_space<any>>) target(%117 : memref<256x1152xbf16, #tpu.memory_space<vmem>>) target_semaphore(%119 : memref<!tpu.dma_semaphore, #tpu.memory_space<semaphore_mem>>)
    %c0_117 = arith.constant 0 : index
    %c0_118 = arith.constant 0 : index
    %c0_119 = arith.constant 0 : index
    %120 = vector.load %arg8[%c0_117, %c0_118, %c0_119] : memref<3x256x1152xbf16, #tpu.memory_space<vmem>>, vector<1x256x1024xbf16>
    %121 = vector.shape_cast %120 : vector<1x256x1024xbf16> to vector<256x1024xbf16>
    %122 = vector.extract_strided_slice %78 {offsets = [0, 512], sizes = [8, 256], strides = [1, 1]} : vector<8x1024xbf16> to vector<8x256xbf16>
    %cst_120 = arith.constant dense<0.000000e+00> : vector<8x1024xf32>
    %123 = tpu.matmul %122, %121, %cst_120 {dimension_numbers = #tpu.dot_dimension_numbers<[1], [0], [0], [1], [0, 0, 1, 1], [], []>} : vector<8x256xbf16>, vector<256x1024xbf16>, vector<8x1024xf32> -> vector<8x1024xf32>
    %124 = arith.addf %109, %123 : vector<8x1024xf32>
    %c1_i32_121 = arith.constant 1 : i32
    %c1_i32_122 = arith.constant 1 : i32
    %c768_i32_123 = arith.constant 768 : i32
    %c0_i32_124 = arith.constant 0 : i32
    %125 = tpu.memref_slice %arg5[%c768_i32_123, %c0_i32_124] : memref<1024x1024xbf16, #tpu.memory_space<any>> -> memref<256x1024xbf16, #tpu.memory_space<any>>
    %c0_i32_125 = arith.constant 0 : i32
    %c0_i32_126 = arith.constant 0 : i32
    %126 = tpu.memref_slice %arg8[%c1_i32_121, %c0_i32_125, %c0_i32_126] : memref<3x256x1152xbf16, #tpu.memory_space<vmem>> -> memref<1x256x1024xbf16, #tpu.memory_space<vmem>>
    %127 = tpu.memref_squeeze %126 : memref<1x256x1024xbf16, #tpu.memory_space<vmem>> -> memref<256x1024xbf16, #tpu.memory_space<vmem>>
    %128 = tpu.memref_slice %arg9[%c1_i32_122] : memref<3x!tpu.dma_semaphore, #tpu.memory_space<semaphore_mem>> -> memref<1x!tpu.dma_semaphore, #tpu.memory_space<semaphore_mem>>
    %129 = tpu.memref_squeeze %128 : memref<1x!tpu.dma_semaphore, #tpu.memory_space<semaphore_mem>> -> memref<!tpu.dma_semaphore, #tpu.memory_space<semaphore_mem>>
    tpu.wait_dma2 semaphore(%129 : memref<!tpu.dma_semaphore, #tpu.memory_space<semaphore_mem>>) src(%125 : memref<256x1024xbf16, #tpu.memory_space<any>>) dst(%127 : memref<256x1024xbf16, #tpu.memory_space<vmem>>)
    %c0_i32_127 = arith.constant 0 : i32
    %c0_i32_128 = arith.constant 0 : i32
    %c256_i32_129 = arith.constant 256 : i32
    %c0_i32_130 = arith.constant 0 : i32
    %130 = tpu.memref_slice %arg6[%c256_i32_129, %c0_i32_130] : memref<1024x1152xbf16, #tpu.memory_space<any>> -> memref<256x1152xbf16, #tpu.memory_space<any>>
    %c0_i32_131 = arith.constant 0 : i32
    %c0_i32_132 = arith.constant 0 : i32
    %131 = tpu.memref_slice %arg8[%c0_i32_127, %c0_i32_131, %c0_i32_132] : memref<3x256x1152xbf16, #tpu.memory_space<vmem>> -> memref<1x256x1152xbf16, #tpu.memory_space<vmem>>
    %132 = tpu.memref_squeeze %131 : memref<1x256x1152xbf16, #tpu.memory_space<vmem>> -> memref<256x1152xbf16, #tpu.memory_space<vmem>>
    %133 = tpu.memref_slice %arg9[%c0_i32_128] : memref<3x!tpu.dma_semaphore, #tpu.memory_space<semaphore_mem>> -> memref<1x!tpu.dma_semaphore, #tpu.memory_space<semaphore_mem>>
    %134 = tpu.memref_squeeze %133 : memref<1x!tpu.dma_semaphore, #tpu.memory_space<semaphore_mem>> -> memref<!tpu.dma_semaphore, #tpu.memory_space<semaphore_mem>>
    tpu.enqueue_dma source(%130 : memref<256x1152xbf16, #tpu.memory_space<any>>) target(%132 : memref<256x1152xbf16, #tpu.memory_space<vmem>>) target_semaphore(%134 : memref<!tpu.dma_semaphore, #tpu.memory_space<semaphore_mem>>)
    %c1_133 = arith.constant 1 : index
    %c0_134 = arith.constant 0 : index
    %c0_135 = arith.constant 0 : index
    %135 = vector.load %arg8[%c1_133, %c0_134, %c0_135] : memref<3x256x1152xbf16, #tpu.memory_space<vmem>>, vector<1x256x1024xbf16>
    %136 = vector.shape_cast %135 : vector<1x256x1024xbf16> to vector<256x1024xbf16>
    %137 = vector.extract_strided_slice %78 {offsets = [0, 768], sizes = [8, 256], strides = [1, 1]} : vector<8x1024xbf16> to vector<8x256xbf16>
    %cst_136 = arith.constant dense<0.000000e+00> : vector<8x1024xf32>
    %138 = tpu.matmul %137, %136, %cst_136 {dimension_numbers = #tpu.dot_dimension_numbers<[1], [0], [0], [1], [0, 0, 1, 1], [], []>} : vector<8x256xbf16>, vector<256x1024xbf16>, vector<8x1024xf32> -> vector<8x1024xf32>
    %139 = arith.addf %124, %138 : vector<8x1024xf32>
    %c0_137 = arith.constant 0 : index
    %c0_138 = arith.constant 0 : index
    %140 = vector.load %arg2[%c0_137, %c0_138] : memref<1x1024xf32, #tpu.memory_space<vmem>>, vector<1x1024xf32>
    %141 = vector.broadcast %140 : vector<1x1024xf32> to vector<8x1024xf32>
    %142 = arith.addf %139, %141 : vector<8x1024xf32>
    %cst_139 = arith.constant 0.000000e+00 : f32
    %143 = vector.broadcast %cst_139 : f32 to vector<8x1024xf32>
    %144 = arith.maximumf %142, %143 : vector<8x1024xf32>
    %145 = arith.truncf %144 : vector<8x1024xf32> to vector<8x1024xbf16>
    %cst_140 = arith.constant 0.000000e+00 : f32
    %146 = vector.broadcast %cst_140 : f32 to vector<8x1152xf32>
    %c2_i32_141 = arith.constant 2 : i32
    %c2_i32_142 = arith.constant 2 : i32
    %c0_i32_143 = arith.constant 0 : i32
    %c0_i32_144 = arith.constant 0 : i32
    %147 = tpu.memref_slice %arg6[%c0_i32_143, %c0_i32_144] : memref<1024x1152xbf16, #tpu.memory_space<any>> -> memref<256x1152xbf16, #tpu.memory_space<any>>
    %c0_i32_145 = arith.constant 0 : i32
    %c0_i32_146 = arith.constant 0 : i32
    %148 = tpu.memref_slice %arg8[%c2_i32_141, %c0_i32_145, %c0_i32_146] : memref<3x256x1152xbf16, #tpu.memory_space<vmem>> -> memref<1x256x1152xbf16, #tpu.memory_space<vmem>>
    %149 = tpu.memref_squeeze %148 : memref<1x256x1152xbf16, #tpu.memory_space<vmem>> -> memref<256x1152xbf16, #tpu.memory_space<vmem>>
    %150 = tpu.memref_slice %arg9[%c2_i32_142] : memref<3x!tpu.dma_semaphore, #tpu.memory_space<semaphore_mem>> -> memref<1x!tpu.dma_semaphore, #tpu.memory_space<semaphore_mem>>
    %151 = tpu.memref_squeeze %150 : memref<1x!tpu.dma_semaphore, #tpu.memory_space<semaphore_mem>> -> memref<!tpu.dma_semaphore, #tpu.memory_space<semaphore_mem>>
    tpu.wait_dma2 semaphore(%151 : memref<!tpu.dma_semaphore, #tpu.memory_space<semaphore_mem>>) src(%147 : memref<256x1152xbf16, #tpu.memory_space<any>>) dst(%149 : memref<256x1152xbf16, #tpu.memory_space<vmem>>)
    %c1_i32_147 = arith.constant 1 : i32
    %c1_i32_148 = arith.constant 1 : i32
    %c512_i32_149 = arith.constant 512 : i32
    %c0_i32_150 = arith.constant 0 : i32
    %152 = tpu.memref_slice %arg6[%c512_i32_149, %c0_i32_150] : memref<1024x1152xbf16, #tpu.memory_space<any>> -> memref<256x1152xbf16, #tpu.memory_space<any>>
    %c0_i32_151 = arith.constant 0 : i32
    %c0_i32_152 = arith.constant 0 : i32
    %153 = tpu.memref_slice %arg8[%c1_i32_147, %c0_i32_151, %c0_i32_152] : memref<3x256x1152xbf16, #tpu.memory_space<vmem>> -> memref<1x256x1152xbf16, #tpu.memory_space<vmem>>
    %154 = tpu.memref_squeeze %153 : memref<1x256x1152xbf16, #tpu.memory_space<vmem>> -> memref<256x1152xbf16, #tpu.memory_space<vmem>>
    %155 = tpu.memref_slice %arg9[%c1_i32_148] : memref<3x!tpu.dma_semaphore, #tpu.memory_space<semaphore_mem>> -> memref<1x!tpu.dma_semaphore, #tpu.memory_space<semaphore_mem>>
    %156 = tpu.memref_squeeze %155 : memref<1x!tpu.dma_semaphore, #tpu.memory_space<semaphore_mem>> -> memref<!tpu.dma_semaphore, #tpu.memory_space<semaphore_mem>>
    tpu.enqueue_dma source(%152 : memref<256x1152xbf16, #tpu.memory_space<any>>) target(%154 : memref<256x1152xbf16, #tpu.memory_space<vmem>>) target_semaphore(%156 : memref<!tpu.dma_semaphore, #tpu.memory_space<semaphore_mem>>)
    %c2_153 = arith.constant 2 : index
    %c0_154 = arith.constant 0 : index
    %c0_155 = arith.constant 0 : index
    %157 = vector.load %arg8[%c2_153, %c0_154, %c0_155] : memref<3x256x1152xbf16, #tpu.memory_space<vmem>>, vector<1x256x1152xbf16>
    %158 = vector.shape_cast %157 : vector<1x256x1152xbf16> to vector<256x1152xbf16>
    %159 = vector.extract_strided_slice %145 {offsets = [0, 0], sizes = [8, 256], strides = [1, 1]} : vector<8x1024xbf16> to vector<8x256xbf16>
    %cst_156 = arith.constant dense<0.000000e+00> : vector<8x1152xf32>
    %160 = tpu.matmul %159, %158, %cst_156 {dimension_numbers = #tpu.dot_dimension_numbers<[1], [0], [0], [1], [0, 0, 1, 1], [], []>} : vector<8x256xbf16>, vector<256x1152xbf16>, vector<8x1152xf32> -> vector<8x1152xf32>
    %161 = arith.addf %146, %160 : vector<8x1152xf32>
    %c0_i32_157 = arith.constant 0 : i32
    %c0_i32_158 = arith.constant 0 : i32
    %c256_i32_159 = arith.constant 256 : i32
    %c0_i32_160 = arith.constant 0 : i32
    %162 = tpu.memref_slice %arg6[%c256_i32_159, %c0_i32_160] : memref<1024x1152xbf16, #tpu.memory_space<any>> -> memref<256x1152xbf16, #tpu.memory_space<any>>
    %c0_i32_161 = arith.constant 0 : i32
    %c0_i32_162 = arith.constant 0 : i32
    %163 = tpu.memref_slice %arg8[%c0_i32_157, %c0_i32_161, %c0_i32_162] : memref<3x256x1152xbf16, #tpu.memory_space<vmem>> -> memref<1x256x1152xbf16, #tpu.memory_space<vmem>>
    %164 = tpu.memref_squeeze %163 : memref<1x256x1152xbf16, #tpu.memory_space<vmem>> -> memref<256x1152xbf16, #tpu.memory_space<vmem>>
    %165 = tpu.memref_slice %arg9[%c0_i32_158] : memref<3x!tpu.dma_semaphore, #tpu.memory_space<semaphore_mem>> -> memref<1x!tpu.dma_semaphore, #tpu.memory_space<semaphore_mem>>
    %166 = tpu.memref_squeeze %165 : memref<1x!tpu.dma_semaphore, #tpu.memory_space<semaphore_mem>> -> memref<!tpu.dma_semaphore, #tpu.memory_space<semaphore_mem>>
    tpu.wait_dma2 semaphore(%166 : memref<!tpu.dma_semaphore, #tpu.memory_space<semaphore_mem>>) src(%162 : memref<256x1152xbf16, #tpu.memory_space<any>>) dst(%164 : memref<256x1152xbf16, #tpu.memory_space<vmem>>)
    %c2_i32_163 = arith.constant 2 : i32
    %c2_i32_164 = arith.constant 2 : i32
    %c768_i32_165 = arith.constant 768 : i32
    %c0_i32_166 = arith.constant 0 : i32
    %167 = tpu.memref_slice %arg6[%c768_i32_165, %c0_i32_166] : memref<1024x1152xbf16, #tpu.memory_space<any>> -> memref<256x1152xbf16, #tpu.memory_space<any>>
    %c0_i32_167 = arith.constant 0 : i32
    %c0_i32_168 = arith.constant 0 : i32
    %168 = tpu.memref_slice %arg8[%c2_i32_163, %c0_i32_167, %c0_i32_168] : memref<3x256x1152xbf16, #tpu.memory_space<vmem>> -> memref<1x256x1152xbf16, #tpu.memory_space<vmem>>
    %169 = tpu.memref_squeeze %168 : memref<1x256x1152xbf16, #tpu.memory_space<vmem>> -> memref<256x1152xbf16, #tpu.memory_space<vmem>>
    %170 = tpu.memref_slice %arg9[%c2_i32_164] : memref<3x!tpu.dma_semaphore, #tpu.memory_space<semaphore_mem>> -> memref<1x!tpu.dma_semaphore, #tpu.memory_space<semaphore_mem>>
    %171 = tpu.memref_squeeze %170 : memref<1x!tpu.dma_semaphore, #tpu.memory_space<semaphore_mem>> -> memref<!tpu.dma_semaphore, #tpu.memory_space<semaphore_mem>>
    tpu.enqueue_dma source(%167 : memref<256x1152xbf16, #tpu.memory_space<any>>) target(%169 : memref<256x1152xbf16, #tpu.memory_space<vmem>>) target_semaphore(%171 : memref<!tpu.dma_semaphore, #tpu.memory_space<semaphore_mem>>)
    %c0_169 = arith.constant 0 : index
    %c0_170 = arith.constant 0 : index
    %c0_171 = arith.constant 0 : index
    %172 = vector.load %arg8[%c0_169, %c0_170, %c0_171] : memref<3x256x1152xbf16, #tpu.memory_space<vmem>>, vector<1x256x1152xbf16>
    %173 = vector.shape_cast %172 : vector<1x256x1152xbf16> to vector<256x1152xbf16>
    %174 = vector.extract_strided_slice %145 {offsets = [0, 256], sizes = [8, 256], strides = [1, 1]} : vector<8x1024xbf16> to vector<8x256xbf16>
    %cst_172 = arith.constant dense<0.000000e+00> : vector<8x1152xf32>
    %175 = tpu.matmul %174, %173, %cst_172 {dimension_numbers = #tpu.dot_dimension_numbers<[1], [0], [0], [1], [0, 0, 1, 1], [], []>} : vector<8x256xbf16>, vector<256x1152xbf16>, vector<8x1152xf32> -> vector<8x1152xf32>
    %176 = arith.addf %161, %175 : vector<8x1152xf32>
    %c1_i32_173 = arith.constant 1 : i32
    %c1_i32_174 = arith.constant 1 : i32
    %c512_i32_175 = arith.constant 512 : i32
    %c0_i32_176 = arith.constant 0 : i32
    %177 = tpu.memref_slice %arg6[%c512_i32_175, %c0_i32_176] : memref<1024x1152xbf16, #tpu.memory_space<any>> -> memref<256x1152xbf16, #tpu.memory_space<any>>
    %c0_i32_177 = arith.constant 0 : i32
    %c0_i32_178 = arith.constant 0 : i32
    %178 = tpu.memref_slice %arg8[%c1_i32_173, %c0_i32_177, %c0_i32_178] : memref<3x256x1152xbf16, #tpu.memory_space<vmem>> -> memref<1x256x1152xbf16, #tpu.memory_space<vmem>>
    %179 = tpu.memref_squeeze %178 : memref<1x256x1152xbf16, #tpu.memory_space<vmem>> -> memref<256x1152xbf16, #tpu.memory_space<vmem>>
    %180 = tpu.memref_slice %arg9[%c1_i32_174] : memref<3x!tpu.dma_semaphore, #tpu.memory_space<semaphore_mem>> -> memref<1x!tpu.dma_semaphore, #tpu.memory_space<semaphore_mem>>
    %181 = tpu.memref_squeeze %180 : memref<1x!tpu.dma_semaphore, #tpu.memory_space<semaphore_mem>> -> memref<!tpu.dma_semaphore, #tpu.memory_space<semaphore_mem>>
    tpu.wait_dma2 semaphore(%181 : memref<!tpu.dma_semaphore, #tpu.memory_space<semaphore_mem>>) src(%177 : memref<256x1152xbf16, #tpu.memory_space<any>>) dst(%179 : memref<256x1152xbf16, #tpu.memory_space<vmem>>)
    %c1_179 = arith.constant 1 : index
    %c0_180 = arith.constant 0 : index
    %c0_181 = arith.constant 0 : index
    %182 = vector.load %arg8[%c1_179, %c0_180, %c0_181] : memref<3x256x1152xbf16, #tpu.memory_space<vmem>>, vector<1x256x1152xbf16>
    %183 = vector.shape_cast %182 : vector<1x256x1152xbf16> to vector<256x1152xbf16>
    %184 = vector.extract_strided_slice %145 {offsets = [0, 512], sizes = [8, 256], strides = [1, 1]} : vector<8x1024xbf16> to vector<8x256xbf16>
    %cst_182 = arith.constant dense<0.000000e+00> : vector<8x1152xf32>
    %185 = tpu.matmul %184, %183, %cst_182 {dimension_numbers = #tpu.dot_dimension_numbers<[1], [0], [0], [1], [0, 0, 1, 1], [], []>} : vector<8x256xbf16>, vector<256x1152xbf16>, vector<8x1152xf32> -> vector<8x1152xf32>
    %186 = arith.addf %176, %185 : vector<8x1152xf32>
    %c2_i32_183 = arith.constant 2 : i32
    %c2_i32_184 = arith.constant 2 : i32
    %c768_i32_185 = arith.constant 768 : i32
    %c0_i32_186 = arith.constant 0 : i32
    %187 = tpu.memref_slice %arg6[%c768_i32_185, %c0_i32_186] : memref<1024x1152xbf16, #tpu.memory_space<any>> -> memref<256x1152xbf16, #tpu.memory_space<any>>
    %c0_i32_187 = arith.constant 0 : i32
    %c0_i32_188 = arith.constant 0 : i32
    %188 = tpu.memref_slice %arg8[%c2_i32_183, %c0_i32_187, %c0_i32_188] : memref<3x256x1152xbf16, #tpu.memory_space<vmem>> -> memref<1x256x1152xbf16, #tpu.memory_space<vmem>>
    %189 = tpu.memref_squeeze %188 : memref<1x256x1152xbf16, #tpu.memory_space<vmem>> -> memref<256x1152xbf16, #tpu.memory_space<vmem>>
    %190 = tpu.memref_slice %arg9[%c2_i32_184] : memref<3x!tpu.dma_semaphore, #tpu.memory_space<semaphore_mem>> -> memref<1x!tpu.dma_semaphore, #tpu.memory_space<semaphore_mem>>
    %191 = tpu.memref_squeeze %190 : memref<1x!tpu.dma_semaphore, #tpu.memory_space<semaphore_mem>> -> memref<!tpu.dma_semaphore, #tpu.memory_space<semaphore_mem>>
    tpu.wait_dma2 semaphore(%191 : memref<!tpu.dma_semaphore, #tpu.memory_space<semaphore_mem>>) src(%187 : memref<256x1152xbf16, #tpu.memory_space<any>>) dst(%189 : memref<256x1152xbf16, #tpu.memory_space<vmem>>)
    %c2_189 = arith.constant 2 : index
    %c0_190 = arith.constant 0 : index
    %c0_191 = arith.constant 0 : index
    %192 = vector.load %arg8[%c2_189, %c0_190, %c0_191] : memref<3x256x1152xbf16, #tpu.memory_space<vmem>>, vector<1x256x1152xbf16>
    %193 = vector.shape_cast %192 : vector<1x256x1152xbf16> to vector<256x1152xbf16>
    %194 = vector.extract_strided_slice %145 {offsets = [0, 768], sizes = [8, 256], strides = [1, 1]} : vector<8x1024xbf16> to vector<8x256xbf16>
    %cst_192 = arith.constant dense<0.000000e+00> : vector<8x1152xf32>
    %195 = tpu.matmul %194, %193, %cst_192 {dimension_numbers = #tpu.dot_dimension_numbers<[1], [0], [0], [1], [0, 0, 1, 1], [], []>} : vector<8x256xbf16>, vector<256x1152xbf16>, vector<8x1152xf32> -> vector<8x1152xf32>
    %196 = arith.addf %186, %195 : vector<8x1152xf32>
    %c0_193 = arith.constant 0 : index
    %c0_194 = arith.constant 0 : index
    %197 = vector.load %arg3[%c0_193, %c0_194] : memref<1x1152xf32, #tpu.memory_space<vmem>>, vector<1x1152xf32>
    %198 = vector.broadcast %197 : vector<1x1152xf32> to vector<8x1152xf32>
    %199 = arith.addf %196, %198 : vector<8x1152xf32>
    %c0_195 = arith.constant 0 : index
    %c0_196 = arith.constant 0 : index
    %200 = vector.load %arg7[%c0_195, %c0_196] : memref<8x1152xf32, #tpu.memory_space<vmem>>, vector<8x1152xf32>
    tpu.vector_store %arg7[%c0_195, %c0_196], %199 {strides = array<i32>} : memref<8x1152xf32, #tpu.memory_space<vmem>>, vector<8x1152xf32>,
    return
  }
}

</mosaic_0001>

<llo_original>
// kernel: tpu_custom_call.1
$region0: #{tpu_custom_call.1}
  #allocation0 [shape = 'u32[]', space=smem, size = 0x4, offset = 0x4, fixed_abs, tag = 'smem constant byte address 0x4 - core index']
  #allocation1 [shape = 'u32[144,128]{1,0:T(1,128)}', space=vmem, size = 0x12000, scoped, tag = 'internal scratch']
  #allocation2 [shape = 'bf16[3,256,1152]{2,1,0:T(16,128)(2,1)}', space=vmem, size = 0x1b0000, scoped, tag = 'scratch operand']
  #allocation3 [shape = 's32[3]{0}', space=sflag, size = 0xc, scoped, tag = 'scratch operand']
  #allocation13 [shape = 's32[]', space=sflag, size = 0x4, offset = 0, fixed_abs, tag = 'sflag constant byte address 0x0 - dummy sync flag']
  #allocation15 [shape = 's32[]', space=sflag, size = 0x4, offset = 0, fixed_abs, tag = 'sflag constant byte address 0x0 - dummy sync flag']
  #allocation17 [shape = 's32[]', space=sflag, size = 0x4, offset = 0, fixed_abs, tag = 'sflag constant byte address 0x0 - dummy sync flag']
  #allocation19 [shape = 's32[]', space=sflag, size = 0x4, offset = 0, fixed_abs, tag = 'sflag constant byte address 0x0 - dummy sync flag']
  #allocation21 [shape = 's32[]', space=sflag, size = 0x4, offset = 0, fixed_abs, tag = 'sflag constant byte address 0x0 - dummy sync flag']
  #allocation23 [shape = 's32[]', space=sflag, size = 0x4, offset = 0, fixed_abs, tag = 'sflag constant byte address 0x0 - dummy sync flag']
  #allocation25 [shape = 's32[]', space=sflag, size = 0x4, offset = 0, fixed_abs, tag = 'sflag constant byte address 0x0 - dummy sync flag']
  #allocation27 [shape = 's32[]', space=sflag, size = 0x4, offset = 0, fixed_abs, tag = 'sflag constant byte address 0x0 - dummy sync flag']
  #allocation29 [shape = 's32[]', space=sflag, size = 0x4, offset = 0, fixed_abs, tag = 'sflag constant byte address 0x0 - dummy sync flag']
  #allocation31 [shape = 's32[]', space=sflag, size = 0x4, offset = 0, fixed_abs, tag = 'sflag constant byte address 0x0 - dummy sync flag']
  #allocation33 [shape = 's32[]', space=sflag, size = 0x4, offset = 0, fixed_abs, tag = 'sflag constant byte address 0x0 - dummy sync flag']
  #allocation35 [shape = 's32[]', space=sflag, size = 0x4, offset = 0, fixed_abs, tag = 'sflag constant byte address 0x0 - dummy sync flag']
  %s0 = inlined_call_operand.hbm [shape: f32[8,1024], index: 0, kind: input, shape index: {}]
  %s1 = inlined_call_operand.hbm [shape: f32[1,1024], index: 1, kind: input, shape index: {}]
  %s2 = inlined_call_operand.hbm [shape: f32[1,1024], index: 2, kind: input, shape index: {}]
  %s3 = inlined_call_operand.hbm [shape: f32[1,1152], index: 3, kind: input, shape index: {}]
  %s4 = inlined_call_operand.hbm [shape: bf16[1024,1024], index: 4, kind: input, shape index: {}]
  %s5 = inlined_call_operand.hbm [shape: bf16[1024,1024], index: 5, kind: input, shape index: {}]
  %s6 = inlined_call_operand.hbm [shape: bf16[1024,1152], index: 6, kind: input, shape index: {}]
  %s7 = inlined_call_operand.hbm [shape: f32[8,1152], index: 7, kind: output, shape index: {}]
  %s8 = sld [smem:[#allocation0]]
  $region42: #{tpu_custom_call.1} parent=0
    _
  %s10 = ssub.s32 1, %s8
  %s11 = scalar_select 0, %s10, %s8
  $region1: #{tpu_custom_call.1} parent=0
    #allocation4 [shape = 'u8[32768]{0}', space=vmem, size = 0x8000, scoped, tag = 'input window, operand 0, single buffered']
    #allocation5 [shape = 's32[1]{0}', space=sflag, size = 0x4, scoped, tag = 'scoped memory for tpu_custom_call.1']
    #allocation6 [shape = 's32[1]{0}', space=sflag, size = 0x4, scoped, tag = 'scoped memory for tpu_custom_call.1']
    #allocation7 [shape = 'u8[4096]{0}', space=vmem, size = 0x1000, scoped, tag = 'input window, operand 1, single buffered']
    #allocation8 [shape = 's32[1]{0}', space=sflag, size = 0x4, scoped, tag = 'scoped memory for tpu_custom_call.1']
    #allocation9 [shape = 'u8[4096]{0}', space=vmem, size = 0x1000, scoped, tag = 'input window, operand 2, single buffered']
    #allocation10 [shape = 'u8[4608]{0}', space=vmem, size = 0x1400, scoped, tag = 'input window, operand 3, single buffered']
    #allocation11 [shape = 's32[1]{0}', space=sflag, size = 0x4, scoped, tag = 'scoped memory for tpu_custom_call.1']
    #allocation12 [shape = 'u8[36864]{0}', space=vmem, size = 0x9000, scoped, tag = 'output window, operand 0, single buffered']
    #allocation14 [shape = 'u32[9]{0}', space=smem, size = 0x24, scoped, tag = 'DMA stride descriptor']
    #allocation16 [shape = 'u32[9]{0}', space=smem, size = 0x24, scoped, tag = 'DMA stride descriptor']
    #allocation18 [shape = 'u32[9]{0}', space=smem, size = 0x24, scoped, tag = 'DMA stride descriptor']
    #allocation20 [shape = 'u32[9]{0}', space=smem, size = 0x24, scoped, tag = 'DMA stride descriptor']
    #allocation22 [shape = 'u32[9]{0}', space=smem, size = 0x24, scoped, tag = 'DMA stride descriptor']
    #allocation24 [shape = 'u32[9]{0}', space=smem, size = 0x24, scoped, tag = 'DMA stride descriptor']
    #allocation26 [shape = 'u32[9]{0}', space=smem, size = 0x24, scoped, tag = 'DMA stride descriptor']
    #allocation28 [shape = 'u32[9]{0}', space=smem, size = 0x24, scoped, tag = 'DMA stride descriptor']
    #allocation30 [shape = 'u32[9]{0}', space=smem, size = 0x24, scoped, tag = 'DMA stride descriptor']
    #allocation32 [shape = 'u32[9]{0}', space=smem, size = 0x24, scoped, tag = 'DMA stride descriptor']
    #allocation34 [shape = 'u32[9]{0}', space=smem, size = 0x24, scoped, tag = 'DMA stride descriptor']
    #allocation36 [shape = 'u32[9]{0}', space=smem, size = 0x24, scoped, tag = 'DMA stride descriptor']
    %12 = vsyncpa [#allocation5], 0
    %13 = vsyncpa [#allocation8], 0
    %14 = vsyncpa [#allocation11], 0
    %15 = vsyncpa [#allocation6], 0
    // Predicated region
    $region2: #{tpu_custom_call.1} parent=1 // pred_check
      _
    $region3: #{tpu_custom_call.1} parent=1 // pred_check_branch
      %17 = sbr.rel (0) target = $region5
    $region4: #{tpu_custom_call.1} parent=1 // pred_region
      %s19 = ssub.s32 1024, 1024
      %20 = vsyncadd [#allocation5], %s19
      %s22 = sshll.u32 [#allocation4], 4
      %s23 = int_to_ptr.vmem [resolvable:$true] %s22
      %25 = dma.hbm_to_vmem [thread:$0]  %s0, 1024, %s23, [#allocation5]
    $region5: #{tpu_custom_call.1} parent=1 // pred_fallthru
      _
    // Predicated region
    $region6: #{tpu_custom_call.1} parent=1 // pred_check
      _
    $region7: #{tpu_custom_call.1} parent=1 // pred_check_branch
      %27 = sbr.rel (0) target = $region9
    $region8: #{tpu_custom_call.1} parent=1 // pred_region
      %s29 = ssub.s32 128, 128
      %30 = vsyncadd [#allocation8], %s29
      %s32 = sshll.u32 [#allocation7], 4
      %s33 = int_to_ptr.vmem [resolvable:$true] %s32
      %35 = dma.hbm_to_vmem [thread:$0]  %s1, 128, %s33, [#allocation8]
    $region9: #{tpu_custom_call.1} parent=1 // pred_fallthru
      _
    // Predicated region
    $region10: #{tpu_custom_call.1} parent=1 // pred_check
      _
    $region11: #{tpu_custom_call.1} parent=1 // pred_check_branch
      %37 = sbr.rel (0) target = $region13
    $region12: #{tpu_custom_call.1} parent=1 // pred_region
      %s39 = ssub.s32 128, 128
      %40 = vsyncadd [#allocation8], %s39
      %s42 = sshll.u32 [#allocation9], 4
      %s43 = int_to_ptr.vmem [resolvable:$true] %s42
      %45 = dma.hbm_to_vmem [thread:$0]  %s2, 128, %s43, [#allocation8]
    $region13: #{tpu_custom_call.1} parent=1 // pred_fallthru
      _
    // Predicated region
    $region14: #{tpu_custom_call.1} parent=1 // pred_check
      _
    $region15: #{tpu_custom_call.1} parent=1 // pred_check_branch
      %47 = sbr.rel (0) target = $region17
    $region16: #{tpu_custom_call.1} parent=1 // pred_region
      %s49 = ssub.s32 144, 144
      %50 = vsyncadd [#allocation11], %s49
      %s52 = sshll.u32 [#allocation10], 4
      %s53 = int_to_ptr.vmem [resolvable:$true] %s52
      %55 = dma.hbm_to_vmem [thread:$0]  %s3, 144, %s53, [#allocation11]
    $region17: #{tpu_custom_call.1} parent=1 // pred_fallthru
      _
    // Predicated region
    $region18: #{tpu_custom_call.1} parent=1 // pred_check
      _
    $region19: #{tpu_custom_call.1} parent=1 // pred_check_branch
      %57 = sbr.rel (0) target = $region21
    $region20: #{tpu_custom_call.1} parent=1 // pred_region
      %58 = dma.done [#allocation5], 1024
    $region21: #{tpu_custom_call.1} parent=1 // pred_fallthru
      _
    // Predicated region
    $region22: #{tpu_custom_call.1} parent=1 // pred_check
      _
    $region23: #{tpu_custom_call.1} parent=1 // pred_check_branch
      %60 = sbr.rel (0) target = $region25
    $region24: #{tpu_custom_call.1} parent=1 // pred_region
      %61 = dma.done [#allocation8], 128
    $region25: #{tpu_custom_call.1} parent=1 // pred_fallthru
      _
    // Predicated region
    $region26: #{tpu_custom_call.1} parent=1 // pred_check
      _
    $region27: #{tpu_custom_call.1} parent=1 // pred_check_branch
      %63 = sbr.rel (0) target = $region29
    $region28: #{tpu_custom_call.1} parent=1 // pred_region
      %64 = dma.done [#allocation8], 128
    $region29: #{tpu_custom_call.1} parent=1 // pred_fallthru
      _
    // Predicated region
    $region30: #{tpu_custom_call.1} parent=1 // pred_check
      _
    $region31: #{tpu_custom_call.1} parent=1 // pred_check_branch
      %66 = sbr.rel (0) target = $region33
    $region32: #{tpu_custom_call.1} parent=1 // pred_region
      %67 = dma.done [#allocation11], 144
    $region33: #{tpu_custom_call.1} parent=1 // pred_fallthru
      _
    %s70 = sshll.u32 1, 14
    %s71 = sxor.u32 4294967295, %s70
    %s73 = sld [smem:[#allocation0]]
    %s74 = sadd.s32 2, %s73
    %s76 = sshll.u32 7, 26
    %s77 = sxor.u32 4294967295, %s76
    %s78 = sand.u32 0, %s77
    %s79 = sshll.u32 %s74, 26
    %s80 = sor.u32 %s78, %s79
    %s81 = sshll.u32 [#allocation2], 4
    %s82 = int_to_ptr.vmem [resolvable:$true] %s81
    %85 = sst [smem:[#allocation14]] 1024
    %s86 = scalar_lea.smem [#allocation14], 1
    %87 = sst [smem:[%s86]] 1152
    %s88 = scalar_lea.smem [#allocation14], 2
    %89 = sst [smem:[%s88]] 8
    %s90 = scalar_lea.smem [#allocation14], 3
    %91 = sst [smem:[%s90]] 64
    %s92 = scalar_lea.smem [#allocation14], 4
    %93 = sst [smem:[%s92]] 128
    %s94 = scalar_lea.smem [#allocation14], 5
    %95 = sst [smem:[%s94]] 2
    %s96 = scalar_lea.smem [#allocation14], 6
    %97 = sst [smem:[%s96]] 512
    %s98 = scalar_lea.smem [#allocation14], 7
    %99 = sst [smem:[%s98]] 64
    %s100 = scalar_lea.smem [#allocation14], 8
    %101 = sst [smem:[%s100]] 4
    %103 = dma.general %s4, 16384, %s82, [#allocation3], [#allocation13], [#allocation14], %s80, 0
    %s104 = scalar_lea.hbm %s4, 16384
    %s105 = scalar_lea.vmem [#allocation2], 1152
    %s106 = scalar_lea.sflag [#allocation3], 1
    %s108 = sshll.u32 1, 14
    %s109 = sxor.u32 4294967295, %s108
    %s111 = sadd.s32 2, %s73
    %s113 = sshll.u32 7, 26
    %s114 = sxor.u32 4294967295, %s113
    %s115 = sand.u32 0, %s114
    %s116 = sshll.u32 %s111, 26
    %s117 = sor.u32 %s115, %s116
    %s118 = sshll.u32 %s105, 4
    %s119 = int_to_ptr.vmem [resolvable:$true] %s118
    %122 = sst [smem:[#allocation16]] 1024
    %s123 = scalar_lea.smem [#allocation16], 1
    %124 = sst [smem:[%s123]] 1152
    %s125 = scalar_lea.smem [#allocation16], 2
    %126 = sst [smem:[%s125]] 8
    %s127 = scalar_lea.smem [#allocation16], 3
    %128 = sst [smem:[%s127]] 64
    %s129 = scalar_lea.smem [#allocation16], 4
    %130 = sst [smem:[%s129]] 128
    %s131 = scalar_lea.smem [#allocation16], 5
    %132 = sst [smem:[%s131]] 2
    %s133 = scalar_lea.smem [#allocation16], 6
    %134 = sst [smem:[%s133]] 512
    %s135 = scalar_lea.smem [#allocation16], 7
    %136 = sst [smem:[%s135]] 64
    %s137 = scalar_lea.smem [#allocation16], 8
    %138 = sst [smem:[%s137]] 4
    %140 = dma.general %s104, 16384, %s119, %s106, [#allocation15], [#allocation16], %s117, 0
    %v141 = vld [vmem:[#allocation4] sm:$0xff]
    %v142 = vld [vmem:[#allocation4 + $0x8] sm:$0xff]
    %v143 = vld [vmem:[#allocation4 + $0x10] sm:$0xff]
    %v144 = vld [vmem:[#allocation4 + $0x18] sm:$0xff]
    %v145 = vld [vmem:[#allocation4 + $0x20] sm:$0xff]
    %v146 = vld [vmem:[#allocation4 + $0x28] sm:$0xff]
    %v147 = vld [vmem:[#allocation4 + $0x30] sm:$0xff]
    %v148 = vld [vmem:[#allocation4 + $0x38] sm:$0xff]
    %v149 = vpack.c.bf16 %v141, %v141
    %v150 = vpack.c.bf16 %v142, %v142
    %v151 = vpack.c.bf16 %v143, %v143
    %v152 = vpack.c.bf16 %v144, %v144
    %v153 = vpack.c.bf16 %v145, %v145
    %v154 = vpack.c.bf16 %v146, %v146
    %v155 = vpack.c.bf16 %v147, %v147
    %v156 = vpack.c.bf16 %v148, %v148
    %s157 = smul.u32 4, 32
    %s158 = smul.u32 %s157, 8
    %s159 = sshll.u32 %s158, 4
    %160 = dma.done [#allocation3], %s159
    %s161 = scalar_lea.hbm %s4, 32768
    %s162 = scalar_lea.vmem [#allocation2], 2304
    %s163 = scalar_lea.sflag [#allocation3], 2
    %s165 = sshll.u32 1, 14
    %s166 = sxor.u32 4294967295, %s165
    %s168 = sadd.s32 2, %s73
    %s170 = sshll.u32 7, 26
    %s171 = sxor.u32 4294967295, %s170
    %s172 = sand.u32 0, %s171
    %s173 = sshll.u32 %s168, 26
    %s174 = sor.u32 %s172, %s173
    %s175 = sshll.u32 %s162, 4
    %s176 = int_to_ptr.vmem [resolvable:$true] %s175
    %179 = sst [smem:[#allocation18]] 1024
    %s180 = scalar_lea.smem [#allocation18], 1
    %181 = sst [smem:[%s180]] 1152
    %s182 = scalar_lea.smem [#allocation18], 2
    %183 = sst [smem:[%s182]] 8
    %s184 = scalar_lea.smem [#allocation18], 3
    %185 = sst [smem:[%s184]] 64
    %s186 = scalar_lea.smem [#allocation18], 4
    %187 = sst [smem:[%s186]] 128
    %s188 = scalar_lea.smem [#allocation18], 5
    %189 = sst [smem:[%s188]] 2
    %s190 = scalar_lea.smem [#allocation18], 6
    %191 = sst [smem:[%s190]] 512
    %s192 = scalar_lea.smem [#allocation18], 7
    %193 = sst [smem:[%s192]] 64
    %s194 = scalar_lea.smem [#allocation18], 8
    %195 = sst [smem:[%s194]] 4
    %197 = dma.general %s161, 16384, %s176, %s163, [#allocation17], [#allocation18], %s174, 0
    %v198 = vld [vmem:[#allocation2] sm:$0xff]
    %v199 = vld [vmem:[#allocation2 + $0x8] sm:$0xff]
    %v200 = vld [vmem:[#allocation2 + $0x10] sm:$0xff]
    %v201 = vld [vmem:[#allocation2 + $0x18] sm:$0xff]
    %v202 = vld [vmem:[#allocation2 + $0x20] sm:$0xff]
    %v203 = vld [vmem:[#allocation2 + $0x28] sm:$0xff]
    %v204 = vld [vmem:[#allocation2 + $0x30] sm:$0xff]
    %v205 = vld [vmem:[#allocation2 + $0x38] sm:$0xff]
    %v206 = vld [vmem:[#allocation2 + $0x48] sm:$0xff]
    %v207 = vld [vmem:[#allocation2 + $0x50] sm:$0xff]
    %v208 = vld [vmem:[#allocation2 + $0x58] sm:$0xff]
    %v209 = vld [vmem:[#allocation2 + $0x60] sm:$0xff]
    %v210 = vld [vmem:[#allocation2 + $0x68] sm:$0xff]
    %v211 = vld [vmem:[#allocation2 + $0x70] sm:$0xff]
    %v212 = vld [vmem:[#allocation2 + $0x78] sm:$0xff]
    %v213 = vld [vmem:[#allocation2 + $0x80] sm:$0xff]
    %v214 = vld [vmem:[#allocation2 + $0x90] sm:$0xff]
    %v215 = vld [vmem:[#allocation2 + $0x98] sm:$0xff]
    %v216 = vld [vmem:[#allocation2 + $0xa0] sm:$0xff]
    %v217 = vld [vmem:[#allocation2 + $0xa8] sm:$0xff]
    %v218 = vld [vmem:[#allocation2 + $0xb0] sm:$0xff]
    %v219 = vld [vmem:[#allocation2 + $0xb8] sm:$0xff]
    %v220 = vld [vmem:[#allocation2 + $0xc0] sm:$0xff]
    %v221 = vld [vmem:[#allocation2 + $0xc8] sm:$0xff]
    %v222 = vld [vmem:[#allocation2 + $0xd8] sm:$0xff]
    %v223 = vld [vmem:[#allocation2 + $0xe0] sm:$0xff]
    %v224 = vld [vmem:[#allocation2 + $0xe8] sm:$0xff]
    %v225 = vld [vmem:[#allocation2 + $0xf0] sm:$0xff]
    %v226 = vld [vmem:[#allocation2 + $0xf8] sm:$0xff]
    %v227 = vld [vmem:[#allocation2 + $0x100] sm:$0xff]
    %v228 = vld [vmem:[#allocation2 + $0x108] sm:$0xff]
    %v229 = vld [vmem:[#allocation2 + $0x110] sm:$0xff]
    %v230 = vld [vmem:[#allocation2 + $0x120] sm:$0xff]
    %v231 = vld [vmem:[#allocation2 + $0x128] sm:$0xff]
    %v232 = vld [vmem:[#allocation2 + $0x130] sm:$0xff]
    %v233 = vld [vmem:[#allocation2 + $0x138] sm:$0xff]
    %v234 = vld [vmem:[#allocation2 + $0x140] sm:$0xff]
    %v235 = vld [vmem:[#allocation2 + $0x148] sm:$0xff]
    %v236 = vld [vmem:[#allocation2 + $0x150] sm:$0xff]
    %v237 = vld [vmem:[#allocation2 + $0x158] sm:$0xff]
    %v238 = vld [vmem:[#allocation2 + $0x168] sm:$0xff]
    %v239 = vld [vmem:[#allocation2 + $0x170] sm:$0xff]
    %v240 = vld [vmem:[#allocation2 + $0x178] sm:$0xff]
    %v241 = vld [vmem:[#allocation2 + $0x180] sm:$0xff]
    %v242 = vld [vmem:[#allocation2 + $0x188] sm:$0xff]
    %v243 = vld [vmem:[#allocation2 + $0x190] sm:$0xff]
    %v244 = vld [vmem:[#allocation2 + $0x198] sm:$0xff]
    %v245 = vld [vmem:[#allocation2 + $0x1a0] sm:$0xff]
    %v246 = vld [vmem:[#allocation2 + $0x1b0] sm:$0xff]
    %v247 = vld [vmem:[#allocation2 + $0x1b8] sm:$0xff]
    %v248 = vld [vmem:[#allocation2 + $0x1c0] sm:$0xff]
    %v249 = vld [vmem:[#allocation2 + $0x1c8] sm:$0xff]
    %v250 = vld [vmem:[#allocation2 + $0x1d0] sm:$0xff]
    %v251 = vld [vmem:[#allocation2 + $0x1d8] sm:$0xff]
    %v252 = vld [vmem:[#allocation2 + $0x1e0] sm:$0xff]
    %v253 = vld [vmem:[#allocation2 + $0x1e8] sm:$0xff]
    %v254 = vld [vmem:[#allocation2 + $0x1f8] sm:$0xff]
    %v255 = vld [vmem:[#allocation2 + $0x200] sm:$0xff]
    %v256 = vld [vmem:[#allocation2 + $0x208] sm:$0xff]
    %v257 = vld [vmem:[#allocation2 + $0x210] sm:$0xff]
    %v258 = vld [vmem:[#allocation2 + $0x218] sm:$0xff]
    %v259 = vld [vmem:[#allocation2 + $0x220] sm:$0xff]
    %v260 = vld [vmem:[#allocation2 + $0x228] sm:$0xff]
    %v261 = vld [vmem:[#allocation2 + $0x230] sm:$0xff]
    %v262 = vld [vmem:[#allocation2 + $0x240] sm:$0xff]
    %v263 = vld [vmem:[#allocation2 + $0x248] sm:$0xff]
    %v264 = vld [vmem:[#allocation2 + $0x250] sm:$0xff]
    %v265 = vld [vmem:[#allocation2 + $0x258] sm:$0xff]
    %v266 = vld [vmem:[#allocation2 + $0x260] sm:$0xff]
    %v267 = vld [vmem:[#allocation2 + $0x268] sm:$0xff]
    %v268 = vld [vmem:[#allocation2 + $0x270] sm:$0xff]
    %v269 = vld [vmem:[#allocation2 + $0x278] sm:$0xff]
    %v270 = vld [vmem:[#allocation2 + $0x288] sm:$0xff]
    %v271 = vld [vmem:[#allocation2 + $0x290] sm:$0xff]
    %v272 = vld [vmem:[#allocation2 + $0x298] sm:$0xff]
    %v273 = vld [vmem:[#allocation2 + $0x2a0] sm:$0xff]
    %v274 = vld [vmem:[#allocation2 + $0x2a8] sm:$0xff]
    %v275 = vld [vmem:[#allocation2 + $0x2b0] sm:$0xff]
    %v276 = vld [vmem:[#allocation2 + $0x2b8] sm:$0xff]
    %v277 = vld [vmem:[#allocation2 + $0x2c0] sm:$0xff]
    %v278 = vld [vmem:[#allocation2 + $0x2d0] sm:$0xff]
    %v279 = vld [vmem:[#allocation2 + $0x2d8] sm:$0xff]
    %v280 = vld [vmem:[#allocation2 + $0x2e0] sm:$0xff]
    %v281 = vld [vmem:[#allocation2 + $0x2e8] sm:$0xff]
    %v282 = vld [vmem:[#allocation2 + $0x2f0] sm:$0xff]
    %v283 = vld [vmem:[#allocation2 + $0x2f8] sm:$0xff]
    %v284 = vld [vmem:[#allocation2 + $0x300] sm:$0xff]
    %v285 = vld [vmem:[#allocation2 + $0x308] sm:$0xff]
    %v286 = vld [vmem:[#allocation2 + $0x318] sm:$0xff]
    %v287 = vld [vmem:[#allocation2 + $0x320] sm:$0xff]
    %v288 = vld [vmem:[#allocation2 + $0x328] sm:$0xff]
    %v289 = vld [vmem:[#allocation2 + $0x330] sm:$0xff]
    %v290 = vld [vmem:[#allocation2 + $0x338] sm:$0xff]
    %v291 = vld [vmem:[#allocation2 + $0x340] sm:$0xff]
    %v292 = vld [vmem:[#allocation2 + $0x348] sm:$0xff]
    %v293 = vld [vmem:[#allocation2 + $0x350] sm:$0xff]
    %v294 = vld [vmem:[#allocation2 + $0x360] sm:$0xff]
    %v295 = vld [vmem:[#allocation2 + $0x368] sm:$0xff]
    %v296 = vld [vmem:[#allocation2 + $0x370] sm:$0xff]
    %v297 = vld [vmem:[#allocation2 + $0x378] sm:$0xff]
    %v298 = vld [vmem:[#allocation2 + $0x380] sm:$0xff]
    %v299 = vld [vmem:[#allocation2 + $0x388] sm:$0xff]
    %v300 = vld [vmem:[#allocation2 + $0x390] sm:$0xff]
    %v301 = vld [vmem:[#allocation2 + $0x398] sm:$0xff]
    %v302 = vld [vmem:[#allocation2 + $0x3a8] sm:$0xff]
    %v303 = vld [vmem:[#allocation2 + $0x3b0] sm:$0xff]
    %v304 = vld [vmem:[#allocation2 + $0x3b8] sm:$0xff]
    %v305 = vld [vmem:[#allocation2 + $0x3c0] sm:$0xff]
    %v306 = vld [vmem:[#allocation2 + $0x3c8] sm:$0xff]
    %v307 = vld [vmem:[#allocation2 + $0x3d0] sm:$0xff]
    %v308 = vld [vmem:[#allocation2 + $0x3d8] sm:$0xff]
    %v309 = vld [vmem:[#allocation2 + $0x3e0] sm:$0xff]
    %v310 = vld [vmem:[#allocation2 + $0x3f0] sm:$0xff]
    %v311 = vld [vmem:[#allocation2 + $0x3f8] sm:$0xff]
    %v312 = vld [vmem:[#allocation2 + $0x400] sm:$0xff]
    %v313 = vld [vmem:[#allocation2 + $0x408] sm:$0xff]
    %v314 = vld [vmem:[#allocation2 + $0x410] sm:$0xff]
    %v315 = vld [vmem:[#allocation2 + $0x418] sm:$0xff]
    %v316 = vld [vmem:[#allocation2 + $0x420] sm:$0xff]
    %v317 = vld [vmem:[#allocation2 + $0x428] sm:$0xff]
    %v318 = vld [vmem:[#allocation2 + $0x438] sm:$0xff]
    %v319 = vld [vmem:[#allocation2 + $0x440] sm:$0xff]
    %v320 = vld [vmem:[#allocation2 + $0x448] sm:$0xff]
    %v321 = vld [vmem:[#allocation2 + $0x450] sm:$0xff]
    %v322 = vld [vmem:[#allocation2 + $0x458] sm:$0xff]
    %v323 = vld [vmem:[#allocation2 + $0x460] sm:$0xff]
    %v324 = vld [vmem:[#allocation2 + $0x468] sm:$0xff]
    %v325 = vld [vmem:[#allocation2 + $0x470] sm:$0xff]
    %s326 = sshll.u32 %s158, 4
    %327 = dma.done %s106, %s326
    %s328 = scalar_lea.hbm %s4, 49152
    %s330 = sshll.u32 1, 14
    %s331 = sxor.u32 4294967295, %s330
    %s333 = sadd.s32 2, %s73
    %s335 = sshll.u32 7, 26
    %s336 = sxor.u32 4294967295, %s335
    %s337 = sand.u32 0, %s336
    %s338 = sshll.u32 %s333, 26
    %s339 = sor.u32 %s337, %s338
    %s340 = sshll.u32 [#allocation2], 4
    %s341 = int_to_ptr.vmem [resolvable:$true] %s340
    %344 = sst [smem:[#allocation20]] 1024
    %s345 = scalar_lea.smem [#allocation20], 1
    %346 = sst [smem:[%s345]] 1152
    %s347 = scalar_lea.smem [#allocation20], 2
    %348 = sst [smem:[%s347]] 8
    %s349 = scalar_lea.smem [#allocation20], 3
    %350 = sst [smem:[%s349]] 64
    %s351 = scalar_lea.smem [#allocation20], 4
    %352 = sst [smem:[%s351]] 128
    %s353 = scalar_lea.smem [#allocation20], 5
    %354 = sst [smem:[%s353]] 2
    %s355 = scalar_lea.smem [#allocation20], 6
    %356 = sst [smem:[%s355]] 512
    %s357 = scalar_lea.smem [#allocation20], 7
    %358 = sst [smem:[%s357]] 64
    %s359 = scalar_lea.smem [#allocation20], 8
    %360 = sst [smem:[%s359]] 4
    %362 = dma.general %s328, 16384, %s341, [#allocation3], [#allocation19], [#allocation20], %s339, 0
    %v363 = vld [vmem:[%s105] sm:$0xff]
    %v364 = vld [vmem:[%s105 + $0x8] sm:$0xff]
    %v365 = vld [vmem:[%s105 + $0x10] sm:$0xff]
    %v366 = vld [vmem:[%s105 + $0x18] sm:$0xff]
    %v367 = vld [vmem:[%s105 + $0x20] sm:$0xff]
    %v368 = vld [vmem:[%s105 + $0x28] sm:$0xff]
    %v369 = vld [vmem:[%s105 + $0x30] sm:$0xff]
    %v370 = vld [vmem:[%s105 + $0x38] sm:$0xff]
    %v371 = vld [vmem:[%s105 + $0x48] sm:$0xff]
    %v372 = vld [vmem:[%s105 + $0x50] sm:$0xff]
    %v373 = vld [vmem:[%s105 + $0x58] sm:$0xff]
    %v374 = vld [vmem:[%s105 + $0x60] sm:$0xff]
    %v375 = vld [vmem:[%s105 + $0x68] sm:$0xff]
    %v376 = vld [vmem:[%s105 + $0x70] sm:$0xff]
    %v377 = vld [vmem:[%s105 + $0x78] sm:$0xff]
    %v378 = vld [vmem:[%s105 + $0x80] sm:$0xff]
    %v379 = vld [vmem:[%s105 + $0x90] sm:$0xff]
    %v380 = vld [vmem:[%s105 + $0x98] sm:$0xff]
    %v381 = vld [vmem:[%s105 + $0xa0] sm:$0xff]
    %v382 = vld [vmem:[%s105 + $0xa8] sm:$0xff]
    %v383 = vld [vmem:[%s105 + $0xb0] sm:$0xff]
    %v384 = vld [vmem:[%s105 + $0xb8] sm:$0xff]
    %v385 = vld [vmem:[%s105 + $0xc0] sm:$0xff]
    %v386 = vld [vmem:[%s105 + $0xc8] sm:$0xff]
    %v387 = vld [vmem:[%s105 + $0xd8] sm:$0xff]
    %v388 = vld [vmem:[%s105 + $0xe0] sm:$0xff]
    %v389 = vld [vmem:[%s105 + $0xe8] sm:$0xff]
    %v390 = vld [vmem:[%s105 + $0xf0] sm:$0xff]
    %v391 = vld [vmem:[%s105 + $0xf8] sm:$0xff]
    %v392 = vld [vmem:[%s105 + $0x100] sm:$0xff]
    %v393 = vld [vmem:[%s105 + $0x108] sm:$0xff]
    %v394 = vld [vmem:[%s105 + $0x110] sm:$0xff]
    %v395 = vld [vmem:[%s105 + $0x120] sm:$0xff]
    %v396 = vld [vmem:[%s105 + $0x128] sm:$0xff]
    %v397 = vld [vmem:[%s105 + $0x130] sm:$0xff]
    %v398 = vld [vmem:[%s105 + $0x138] sm:$0xff]
    %v399 = vld [vmem:[%s105 + $0x140] sm:$0xff]
    %v400 = vld [vmem:[%s105 + $0x148] sm:$0xff]
    %v401 = vld [vmem:[%s105 + $0x150] sm:$0xff]
    %v402 = vld [vmem:[%s105 + $0x158] sm:$0xff]
    %v403 = vld [vmem:[%s105 + $0x168] sm:$0xff]
    %v404 = vld [vmem:[%s105 + $0x170] sm:$0xff]
    %v405 = vld [vmem:[%s105 + $0x178] sm:$0xff]
    %v406 = vld [vmem:[%s105 + $0x180] sm:$0xff]
    %v407 = vld [vmem:[%s105 + $0x188] sm:$0xff]
    %v408 = vld [vmem:[%s105 + $0x190] sm:$0xff]
    %v409 = vld [vmem:[%s105 + $0x198] sm:$0xff]
    %v410 = vld [vmem:[%s105 + $0x1a0] sm:$0xff]
    %v411 = vld [vmem:[%s105 + $0x1b0] sm:$0xff]
    %v412 = vld [vmem:[%s105 + $0x1b8] sm:$0xff]
    %v413 = vld [vmem:[%s105 + $0x1c0] sm:$0xff]
    %v414 = vld [vmem:[%s105 + $0x1c8] sm:$0xff]
    %v415 = vld [vmem:[%s105 + $0x1d0] sm:$0xff]
    %v416 = vld [vmem:[%s105 + $0x1d8] sm:$0xff]
    %v417 = vld [vmem:[%s105 + $0x1e0] sm:$0xff]
    %v418 = vld [vmem:[%s105 + $0x1e8] sm:$0xff]
    %v419 = vld [vmem:[%s105 + $0x1f8] sm:$0xff]
    %v420 = vld [vmem:[%s105 + $0x200] sm:$0xff]
    %v421 = vld [vmem:[%s105 + $0x208] sm:$0xff]
    %v422 = vld [vmem:[%s105 + $0x210] sm:$0xff]
    %v423 = vld [vmem:[%s105 + $0x218] sm:$0xff]
    %v424 = vld [vmem:[%s105 + $0x220] sm:$0xff]
    %v425 = vld [vmem:[%s105 + $0x228] sm:$0xff]
    %v426 = vld [vmem:[%s105 + $0x230] sm:$0xff]
    %v427 = vld [vmem:[%s105 + $0x240] sm:$0xff]
    %v428 = vld [vmem:[%s105 + $0x248] sm:$0xff]
    %v429 = vld [vmem:[%s105 + $0x250] sm:$0xff]
    %v430 = vld [vmem:[%s105 + $0x258] sm:$0xff]
    %v431 = vld [vmem:[%s105 + $0x260] sm:$0xff]
    %v432 = vld [vmem:[%s105 + $0x268] sm:$0xff]
    %v433 = vld [vmem:[%s105 + $0x270] sm:$0xff]
    %v434 = vld [vmem:[%s105 + $0x278] sm:$0xff]
    %v435 = vld [vmem:[%s105 + $0x288] sm:$0xff]
    %v436 = vld [vmem:[%s105 + $0x290] sm:$0xff]
    %v437 = vld [vmem:[%s105 + $0x298] sm:$0xff]
    %v438 = vld [vmem:[%s105 + $0x2a0] sm:$0xff]
    %v439 = vld [vmem:[%s105 + $0x2a8] sm:$0xff]
    %v440 = vld [vmem:[%s105 + $0x2b0] sm:$0xff]
    %v441 = vld [vmem:[%s105 + $0x2b8] sm:$0xff]
    %v442 = vld [vmem:[%s105 + $0x2c0] sm:$0xff]
    %v443 = vld [vmem:[%s105 + $0x2d0] sm:$0xff]
    %v444 = vld [vmem:[%s105 + $0x2d8] sm:$0xff]
    %v445 = vld [vmem:[%s105 + $0x2e0] sm:$0xff]
    %v446 = vld [vmem:[%s105 + $0x2e8] sm:$0xff]
    %v447 = vld [vmem:[%s105 + $0x2f0] sm:$0xff]
    %v448 = vld [vmem:[%s105 + $0x2f8] sm:$0xff]
    %v449 = vld [vmem:[%s105 + $0x300] sm:$0xff]
    %v450 = vld [vmem:[%s105 + $0x308] sm:$0xff]
    %v451 = vld [vmem:[%s105 + $0x318] sm:$0xff]
    %v452 = vld [vmem:[%s105 + $0x320] sm:$0xff]
    %v453 = vld [vmem:[%s105 + $0x328] sm:$0xff]
    %v454 = vld [vmem:[%s105 + $0x330] sm:$0xff]
    %v455 = vld [vmem:[%s105 + $0x338] sm:$0xff]
    %v456 = vld [vmem:[%s105 + $0x340] sm:$0xff]
    %v457 = vld [vmem:[%s105 + $0x348] sm:$0xff]
    %v458 = vld [vmem:[%s105 + $0x350] sm:$0xff]
    %v459 = vld [vmem:[%s105 + $0x360] sm:$0xff]
    %v460 = vld [vmem:[%s105 + $0x368] sm:$0xff]
    %v461 = vld [vmem:[%s105 + $0x370] sm:$0xff]
    %v462 = vld [vmem:[%s105 + $0x378] sm:$0xff]
    %v463 = vld [vmem:[%s105 + $0x380] sm:$0xff]
    %v464 = vld [vmem:[%s105 + $0x388] sm:$0xff]
    %v465 = vld [vmem:[%s105 + $0x390] sm:$0xff]
    %v466 = vld [vmem:[%s105 + $0x398] sm:$0xff]
    %v467 = vld [vmem:[%s105 + $0x3a8] sm:$0xff]
    %v468 = vld [vmem:[%s105 + $0x3b0] sm:$0xff]
    %v469 = vld [vmem:[%s105 + $0x3b8] sm:$0xff]
    %v470 = vld [vmem:[%s105 + $0x3c0] sm:$0xff]
    %v471 = vld [vmem:[%s105 + $0x3c8] sm:$0xff]
    %v472 = vld [vmem:[%s105 + $0x3d0] sm:$0xff]
    %v473 = vld [vmem:[%s105 + $0x3d8] sm:$0xff]
    %v474 = vld [vmem:[%s105 + $0x3e0] sm:$0xff]
    %v475 = vld [vmem:[%s105 + $0x3f0] sm:$0xff]
    %v476 = vld [vmem:[%s105 + $0x3f8] sm:$0xff]
    %v477 = vld [vmem:[%s105 + $0x400] sm:$0xff]
    %v478 = vld [vmem:[%s105 + $0x408] sm:$0xff]
    %v479 = vld [vmem:[%s105 + $0x410] sm:$0xff]
    %v480 = vld [vmem:[%s105 + $0x418] sm:$0xff]
    %v481 = vld [vmem:[%s105 + $0x420] sm:$0xff]
    %v482 = vld [vmem:[%s105 + $0x428] sm:$0xff]
    %v483 = vld [vmem:[%s105 + $0x438] sm:$0xff]
    %v484 = vld [vmem:[%s105 + $0x440] sm:$0xff]
    %v485 = vld [vmem:[%s105 + $0x448] sm:$0xff]
    %v486 = vld [vmem:[%s105 + $0x450] sm:$0xff]
    %v487 = vld [vmem:[%s105 + $0x458] sm:$0xff]
    %v488 = vld [vmem:[%s105 + $0x460] sm:$0xff]
    %v489 = vld [vmem:[%s105 + $0x468] sm:$0xff]
    %v490 = vld [vmem:[%s105 + $0x470] sm:$0xff]
    %491 = vmatprep.subr.bf16.mxu0 %v364
    %492 = vmatpush1.bf16.msra.mxu0 %v363
    %493 = vmatprep.subr.bf16.mxu0 %v372
    %494 = vmatpush1.bf16.msra.mxu0 %v371
    %495 = vmatprep.subr.bf16.mxu0 %v380
    %496 = vmatpush1.bf16.msra.mxu0 %v379
    %497 = vmatprep.subr.bf16.mxu0 %v388
    %498 = vmatpush1.bf16.msra.mxu0 %v387
    %499 = vmatprep.subr.bf16.mxu0 %v396
    %500 = vmatpush1.bf16.msra.mxu0 %v395
    %501 = vmatprep.subr.bf16.mxu0 %v404
    %502 = vmatpush1.bf16.msra.mxu0 %v403
    %503 = vmatprep.subr.bf16.mxu0 %v412
    %504 = vmatpush1.bf16.msra.mxu0 %v411
    %505 = vmatprep.subr.bf16.mxu0 %v420
    %506 = vmatpush1.bf16.msra.mxu0 %v419
    %507 = vmatprep.subr.bf16.mxu0 %v428
    %508 = vmatpush1.bf16.msra.mxu0 %v427
    %509 = vmatprep.subr.bf16.mxu0 %v436
    %510 = vmatpush1.bf16.msra.mxu0 %v435
    %511 = vmatprep.subr.bf16.mxu0 %v444
    %512 = vmatpush1.bf16.msra.mxu0 %v443
    %513 = vmatprep.subr.bf16.mxu0 %v452
    %514 = vmatpush1.bf16.msra.mxu0 %v451
    %515 = vmatprep.subr.bf16.mxu0 %v460
    %516 = vmatpush1.bf16.msra.mxu0 %v459
    %517 = vmatprep.subr.bf16.mxu0 %v468
    %518 = vmatpush1.bf16.msra.mxu0 %v467
    %519 = vmatprep.subr.bf16.mxu0 %v476
    %520 = vmatpush1.bf16.msra.mxu0 %v475
    %521 = vmatprep.subr.bf16.mxu0 %v484
    %522 = vmatpush1.bf16.msra.mxu0 %v483
    %523 = vmatprep.mubr.bf16.mxu0 %v152
    %524 = vmatmul.mubr.bf16.gmra.mrb[0].mxu0 %v151
    %v525 = vpop.f32.mrb[0].mxu0
    %v526 = vadd.f32 0.0, %v525
    %v527 = vpop.f32.mrb[0].mxu0
    %v528 = vadd.f32 0.0, %v527
    %v529 = vpop.f32.mrb[0].mxu0
    %v530 = vpop.f32.mrb[0].mxu0
    %531 = vdwg.mxu0
    %532 = vmatprep.subr.bf16.mxu0 %v366
    %533 = vmatpush1.bf16.msra.mxu0 %v365
    %534 = vmatprep.subr.bf16.mxu0 %v374
    %535 = vmatpush1.bf16.msra.mxu0 %v373
    %536 = vmatprep.subr.bf16.mxu0 %v382
    %537 = vmatpush1.bf16.msra.mxu0 %v381
    %538 = vmatprep.subr.bf16.mxu0 %v390
    %539 = vmatpush1.bf16.msra.mxu0 %v389
    %540 = vmatprep.subr.bf16.mxu0 %v398
    %541 = vmatpush1.bf16.msra.mxu0 %v397
    %542 = vmatprep.subr.bf16.mxu0 %v406
    %543 = vmatpush1.bf16.msra.mxu0 %v405
    %544 = vmatprep.subr.bf16.mxu0 %v414
    %545 = vmatpush1.bf16.msra.mxu0 %v413
    %546 = vmatprep.subr.bf16.mxu0 %v422
    %547 = vmatpush1.bf16.msra.mxu0 %v421
    %548 = vmatprep.subr.bf16.mxu0 %v430
    %549 = vmatpush1.bf16.msra.mxu0 %v429
    %550 = vmatprep.subr.bf16.mxu0 %v438
    %551 = vmatpush1.bf16.msra.mxu0 %v437
    %552 = vmatprep.subr.bf16.mxu0 %v446
    %553 = vmatpush1.bf16.msra.mxu0 %v445
    %554 = vmatprep.subr.bf16.mxu0 %v454
    %555 = vmatpush1.bf16.msra.mxu0 %v453
    %556 = vmatprep.subr.bf16.mxu0 %v462
    %557 = vmatpush1.bf16.msra.mxu0 %v461
    %558 = vmatprep.subr.bf16.mxu0 %v470
    %559 = vmatpush1.bf16.msra.mxu0 %v469
    %560 = vmatprep.subr.bf16.mxu0 %v478
    %561 = vmatpush1.bf16.msra.mxu0 %v477
    %562 = vmatprep.subr.bf16.mxu0 %v486
    %563 = vmatpush1.bf16.msra.mxu0 %v485
    %564 = vmatprep.mubr.bf16.mxu0 %v152
    %565 = vmatmul.mubr.bf16.gmra.mrb[0].mxu0 %v151
    %v566 = vpop.f32.mrb[0].mxu0
    %v567 = vadd.f32 0.0, %v566
    %v568 = vpop.f32.mrb[0].mxu0
    %v569 = vadd.f32 0.0, %v568
    %v570 = vpop.f32.mrb[0].mxu0
    %v571 = vpop.f32.mrb[0].mxu0
    %572 = vdwg.mxu0
    %573 = vmatprep.subr.bf16.mxu0 %v368
    %574 = vmatpush1.bf16.msra.mxu0 %v367
    %575 = vmatprep.subr.bf16.mxu0 %v376
    %576 = vmatpush1.bf16.msra.mxu0 %v375
    %577 = vmatprep.subr.bf16.mxu0 %v384
    %578 = vmatpush1.bf16.msra.mxu0 %v383
    %579 = vmatprep.subr.bf16.mxu0 %v392
    %580 = vmatpush1.bf16.msra.mxu0 %v391
    %581 = vmatprep.subr.bf16.mxu0 %v400
    %582 = vmatpush1.bf16.msra.mxu0 %v399
    %583 = vmatprep.subr.bf16.mxu0 %v408
    %584 = vmatpush1.bf16.msra.mxu0 %v407
    %585 = vmatprep.subr.bf16.mxu0 %v416
    %586 = vmatpush1.bf16.msra.mxu0 %v415
    %587 = vmatprep.subr.bf16.mxu0 %v424
    %588 = vmatpush1.bf16.msra.mxu0 %v423
    %589 = vmatprep.subr.bf16.mxu0 %v432
    %590 = vmatpush1.bf16.msra.mxu0 %v431
    %591 = vmatprep.subr.bf16.mxu0 %v440
    %592 = vmatpush1.bf16.msra.mxu0 %v439
    %593 = vmatprep.subr.bf16.mxu0 %v448
    %594 = vmatpush1.bf16.msra.mxu0 %v447
    %595 = vmatprep.subr.bf16.mxu0 %v456
    %596 = vmatpush1.bf16.msra.mxu0 %v455
    %597 = vmatprep.subr.bf16.mxu0 %v464
    %598 = vmatpush1.bf16.msra.mxu0 %v463
    %599 = vmatprep.subr.bf16.mxu0 %v472
    %600 = vmatpush1.bf16.msra.mxu0 %v471
    %601 = vmatprep.subr.bf16.mxu0 %v480
    %602 = vmatpush1.bf16.msra.mxu0 %v479
    %603 = vmatprep.subr.bf16.mxu0 %v488
    %604 = vmatpush1.bf16.msra.mxu0 %v487
    %605 = vmatprep.mubr.bf16.mxu0 %v152
    %606 = vmatmul.mubr.bf16.gmra.mrb[0].mxu0 %v151
    %v607 = vpop.f32.mrb[0].mxu0
    %v608 = vadd.f32 0.0, %v607
    %v609 = vpop.f32.mrb[0].mxu0
    %v610 = vadd.f32 0.0, %v609
    %v611 = vpop.f32.mrb[0].mxu0
    %v612 = vpop.f32.mrb[0].mxu0
    %613 = vdwg.mxu0
    %614 = vmatprep.subr.bf16.mxu0 %v370
    %615 = vmatpush1.bf16.msra.mxu0 %v369
    %616 = vmatprep.subr.bf16.mxu0 %v378
    %617 = vmatpush1.bf16.msra.mxu0 %v377
    %618 = vmatprep.subr.bf16.mxu0 %v386
    %619 = vmatpush1.bf16.msra.mxu0 %v385
    %620 = vmatprep.subr.bf16.mxu0 %v394
    %621 = vmatpush1.bf16.msra.mxu0 %v393
    %622 = vmatprep.subr.bf16.mxu0 %v402
    %623 = vmatpush1.bf16.msra.mxu0 %v401
    %624 = vmatprep.subr.bf16.mxu0 %v410
    %625 = vmatpush1.bf16.msra.mxu0 %v409
    %626 = vmatprep.subr.bf16.mxu0 %v418
    %627 = vmatpush1.bf16.msra.mxu0 %v417
    %628 = vmatprep.subr.bf16.mxu0 %v426
    %629 = vmatpush1.bf16.msra.mxu0 %v425
    %630 = vmatprep.subr.bf16.mxu0 %v434
    %631 = vmatpush1.bf16.msra.mxu0 %v433
    %632 = vmatprep.subr.bf16.mxu0 %v442
    %633 = vmatpush1.bf16.msra.mxu0 %v441
    %634 = vmatprep.subr.bf16.mxu0 %v450
    %635 = vmatpush1.bf16.msra.mxu0 %v449
    %636 = vmatprep.subr.bf16.mxu0 %v458
    %637 = vmatpush1.bf16.msra.mxu0 %v457
    %638 = vmatprep.subr.bf16.mxu0 %v466
    %639 = vmatpush1.bf16.msra.mxu0 %v465
    %640 = vmatprep.subr.bf16.mxu0 %v474
    %641 = vmatpush1.bf16.msra.mxu0 %v473
    %642 = vmatprep.subr.bf16.mxu0 %v482
    %643 = vmatpush1.bf16.msra.mxu0 %v481
    %644 = vmatprep.subr.bf16.mxu0 %v490
    %645 = vmatpush1.bf16.msra.mxu0 %v489
    %646 = vmatprep.mubr.bf16.mxu0 %v152
    %647 = vmatmul.mubr.bf16.gmra.mrb[0].mxu0 %v151
    %v648 = vpop.f32.mrb[0].mxu0
    %v649 = vadd.f32 0.0, %v648
    %v650 = vpop.f32.mrb[0].mxu0
    %v651 = vadd.f32 0.0, %v650
    %v652 = vpop.f32.mrb[0].mxu0
    %v653 = vpop.f32.mrb[0].mxu0
    %654 = vdwg.mxu0
    %655 = vmatprep.subr.bf16.mxu0 %v199
    %656 = vmatpush1.bf16.msra.mxu0 %v198
    %657 = vmatprep.subr.bf16.mxu0 %v207
    %658 = vmatpush1.bf16.msra.mxu0 %v206
    %659 = vmatprep.subr.bf16.mxu0 %v215
    %660 = vmatpush1.bf16.msra.mxu0 %v214
    %661 = vmatprep.subr.bf16.mxu0 %v223
    %662 = vmatpush1.bf16.msra.mxu0 %v222
    %663 = vmatprep.subr.bf16.mxu0 %v231
    %664 = vmatpush1.bf16.msra.mxu0 %v230
    %665 = vmatprep.subr.bf16.mxu0 %v239
    %666 = vmatpush1.bf16.msra.mxu0 %v238
    %667 = vmatprep.subr.bf16.mxu0 %v247
    %668 = vmatpush1.bf16.msra.mxu0 %v246
    %669 = vmatprep.subr.bf16.mxu0 %v255
    %670 = vmatpush1.bf16.msra.mxu0 %v254
    %671 = vmatprep.subr.bf16.mxu0 %v263
    %672 = vmatpush1.bf16.msra.mxu0 %v262
    %673 = vmatprep.subr.bf16.mxu0 %v271
    %674 = vmatpush1.bf16.msra.mxu0 %v270
    %675 = vmatprep.subr.bf16.mxu0 %v279
    %676 = vmatpush1.bf16.msra.mxu0 %v278
    %677 = vmatprep.subr.bf16.mxu0 %v287
    %678 = vmatpush1.bf16.msra.mxu0 %v286
    %679 = vmatprep.subr.bf16.mxu0 %v295
    %680 = vmatpush1.bf16.msra.mxu0 %v294
    %681 = vmatprep.subr.bf16.mxu0 %v303
    %682 = vmatpush1.bf16.msra.mxu0 %v302
    %683 = vmatprep.subr.bf16.mxu0 %v311
    %684 = vmatpush1.bf16.msra.mxu0 %v310
    %685 = vmatprep.subr.bf16.mxu0 %v319
    %686 = vmatpush1.bf16.msra.mxu0 %v318
    %687 = vmatprep.mubr.bf16.mxu0 %v150
    %688 = vmatmul.mubr.bf16.gmra.mrb[0].mxu0 %v149
    %v689 = vpop.f32.mrb[0].mxu0
    %v690 = vadd.f32 %v526, %v689
    %v691 = vpop.f32.mrb[0].mxu0
    %v692 = vadd.f32 %v528, %v691
    %v693 = vpop.f32.mrb[0].mxu0
    %v694 = vpop.f32.mrb[0].mxu0
    %695 = vdwg.mxu0
    %696 = vmatprep.subr.bf16.mxu0 %v201
    %697 = vmatpush1.bf16.msra.mxu0 %v200
    %698 = vmatprep.subr.bf16.mxu0 %v209
    %699 = vmatpush1.bf16.msra.mxu0 %v208
    %700 = vmatprep.subr.bf16.mxu0 %v217
    %701 = vmatpush1.bf16.msra.mxu0 %v216
    %702 = vmatprep.subr.bf16.mxu0 %v225
    %703 = vmatpush1.bf16.msra.mxu0 %v224
    %704 = vmatprep.subr.bf16.mxu0 %v233
    %705 = vmatpush1.bf16.msra.mxu0 %v232
    %706 = vmatprep.subr.bf16.mxu0 %v241
    %707 = vmatpush1.bf16.msra.mxu0 %v240
    %708 = vmatprep.subr.bf16.mxu0 %v249
    %709 = vmatpush1.bf16.msra.mxu0 %v248
    %710 = vmatprep.subr.bf16.mxu0 %v257
    %711 = vmatpush1.bf16.msra.mxu0 %v256
    %712 = vmatprep.subr.bf16.mxu0 %v265
    %713 = vmatpush1.bf16.msra.mxu0 %v264
    %714 = vmatprep.subr.bf16.mxu0 %v273
    %715 = vmatpush1.bf16.msra.mxu0 %v272
    %716 = vmatprep.subr.bf16.mxu0 %v281
    %717 = vmatpush1.bf16.msra.mxu0 %v280
    %718 = vmatprep.subr.bf16.mxu0 %v289
    %719 = vmatpush1.bf16.msra.mxu0 %v288
    %720 = vmatprep.subr.bf16.mxu0 %v297
    %721 = vmatpush1.bf16.msra.mxu0 %v296
    %722 = vmatprep.subr.bf16.mxu0 %v305
    %723 = vmatpush1.bf16.msra.mxu0 %v304
    %724 = vmatprep.subr.bf16.mxu0 %v313
    %725 = vmatpush1.bf16.msra.mxu0 %v312
    %726 = vmatprep.subr.bf16.mxu0 %v321
    %727 = vmatpush1.bf16.msra.mxu0 %v320
    %728 = vmatprep.mubr.bf16.mxu0 %v150
    %729 = vmatmul.mubr.bf16.gmra.mrb[0].mxu0 %v149
    %v730 = vpop.f32.mrb[0].mxu0
    %v731 = vadd.f32 %v567, %v730
    %v732 = vpop.f32.mrb[0].mxu0
    %v733 = vadd.f32 %v569, %v732
    %v734 = vpop.f32.mrb[0].mxu0
    %v735 = vpop.f32.mrb[0].mxu0
    %736 = vdwg.mxu0
    %737 = vmatprep.subr.bf16.mxu0 %v203
    %738 = vmatpush1.bf16.msra.mxu0 %v202
    %739 = vmatprep.subr.bf16.mxu0 %v211
    %740 = vmatpush1.bf16.msra.mxu0 %v210
    %741 = vmatprep.subr.bf16.mxu0 %v219
    %742 = vmatpush1.bf16.msra.mxu0 %v218
    %743 = vmatprep.subr.bf16.mxu0 %v227
    %744 = vmatpush1.bf16.msra.mxu0 %v226
    %745 = vmatprep.subr.bf16.mxu0 %v235
    %746 = vmatpush1.bf16.msra.mxu0 %v234
    %747 = vmatprep.subr.bf16.mxu0 %v243
    %748 = vmatpush1.bf16.msra.mxu0 %v242
    %749 = vmatprep.subr.bf16.mxu0 %v251
    %750 = vmatpush1.bf16.msra.mxu0 %v250
    %751 = vmatprep.subr.bf16.mxu0 %v259
    %752 = vmatpush1.bf16.msra.mxu0 %v258
    %753 = vmatprep.subr.bf16.mxu0 %v267
    %754 = vmatpush1.bf16.msra.mxu0 %v266
    %755 = vmatprep.subr.bf16.mxu0 %v275
    %756 = vmatpush1.bf16.msra.mxu0 %v274
    %757 = vmatprep.subr.bf16.mxu0 %v283
    %758 = vmatpush1.bf16.msra.mxu0 %v282
    %759 = vmatprep.subr.bf16.mxu0 %v291
    %760 = vmatpush1.bf16.msra.mxu0 %v290
    %761 = vmatprep.subr.bf16.mxu0 %v299
    %762 = vmatpush1.bf16.msra.mxu0 %v298
    %763 = vmatprep.subr.bf16.mxu0 %v307
    %764 = vmatpush1.bf16.msra.mxu0 %v306
    %765 = vmatprep.subr.bf16.mxu0 %v315
    %766 = vmatpush1.bf16.msra.mxu0 %v314
    %767 = vmatprep.subr.bf16.mxu0 %v323
    %768 = vmatpush1.bf16.msra.mxu0 %v322
    %769 = vmatprep.mubr.bf16.mxu0 %v150
    %770 = vmatmul.mubr.bf16.gmra.mrb[0].mxu0 %v149
    %v771 = vpop.f32.mrb[0].mxu0
    %v772 = vadd.f32 %v608, %v771
    %v773 = vpop.f32.mrb[0].mxu0
    %v774 = vadd.f32 %v610, %v773
    %v775 = vpop.f32.mrb[0].mxu0
    %v776 = vpop.f32.mrb[0].mxu0
    %777 = vdwg.mxu0
    %778 = vmatprep.subr.bf16.mxu0 %v205
    %779 = vmatpush1.bf16.msra.mxu0 %v204
    %780 = vmatprep.subr.bf16.mxu0 %v213
    %781 = vmatpush1.bf16.msra.mxu0 %v212
    %782 = vmatprep.subr.bf16.mxu0 %v221
    %783 = vmatpush1.bf16.msra.mxu0 %v220
    %784 = vmatprep.subr.bf16.mxu0 %v229
    %785 = vmatpush1.bf16.msra.mxu0 %v228
    %786 = vmatprep.subr.bf16.mxu0 %v237
    %787 = vmatpush1.bf16.msra.mxu0 %v236
    %788 = vmatprep.subr.bf16.mxu0 %v245
    %789 = vmatpush1.bf16.msra.mxu0 %v244
    %790 = vmatprep.subr.bf16.mxu0 %v253
    %791 = vmatpush1.bf16.msra.mxu0 %v252
    %792 = vmatprep.subr.bf16.mxu0 %v261
    %793 = vmatpush1.bf16.msra.mxu0 %v260
    %794 = vmatprep.subr.bf16.mxu0 %v269
    %795 = vmatpush1.bf16.msra.mxu0 %v268
    %796 = vmatprep.subr.bf16.mxu0 %v277
    %797 = vmatpush1.bf16.msra.mxu0 %v276
    %798 = vmatprep.subr.bf16.mxu0 %v285
    %799 = vmatpush1.bf16.msra.mxu0 %v284
    %800 = vmatprep.subr.bf16.mxu0 %v293
    %801 = vmatpush1.bf16.msra.mxu0 %v292
    %802 = vmatprep.subr.bf16.mxu0 %v301
    %803 = vmatpush1.bf16.msra.mxu0 %v300
    %804 = vmatprep.subr.bf16.mxu0 %v309
    %805 = vmatpush1.bf16.msra.mxu0 %v308
    %806 = vmatprep.subr.bf16.mxu0 %v317
    %807 = vmatpush1.bf16.msra.mxu0 %v316
    %808 = vmatprep.subr.bf16.mxu0 %v325
    %809 = vmatpush1.bf16.msra.mxu0 %v324
    %810 = vmatprep.mubr.bf16.mxu0 %v150
    %811 = vmatmul.mubr.bf16.gmra.mrb[0].mxu0 %v149
    %v812 = vpop.f32.mrb[0].mxu0
    %v813 = vadd.f32 %v649, %v812
    %v814 = vpop.f32.mrb[0].mxu0
    %v815 = vadd.f32 %v651, %v814
    %v816 = vpop.f32.mrb[0].mxu0
    %v817 = vpop.f32.mrb[0].mxu0
    %818 = vdwg.mxu0
    %s819 = sshll.u32 %s158, 4
    %820 = dma.done %s163, %s819
    %s822 = sshll.u32 1, 14
    %s823 = sxor.u32 4294967295, %s822
    %s825 = sadd.s32 2, %s73
    %s827 = sshll.u32 7, 26
    %s828 = sxor.u32 4294967295, %s827
    %s829 = sand.u32 0, %s828
    %s830 = sshll.u32 %s825, 26
    %s831 = sor.u32 %s829, %s830
    %s832 = sshll.u32 %s105, 4
    %s833 = int_to_ptr.vmem [resolvable:$true] %s832
    %836 = sst [smem:[#allocation22]] 1024
    %s837 = scalar_lea.smem [#allocation22], 1
    %838 = sst [smem:[%s837]] 1152
    %s839 = scalar_lea.smem [#allocation22], 2
    %840 = sst [smem:[%s839]] 8
    %s841 = scalar_lea.smem [#allocation22], 3
    %842 = sst [smem:[%s841]] 64
    %s843 = scalar_lea.smem [#allocation22], 4
    %844 = sst [smem:[%s843]] 128
    %s845 = scalar_lea.smem [#allocation22], 5
    %846 = sst [smem:[%s845]] 2
    %s847 = scalar_lea.smem [#allocation22], 6
    %848 = sst [smem:[%s847]] 512
    %s849 = scalar_lea.smem [#allocation22], 7
    %850 = sst [smem:[%s849]] 64
    %s851 = scalar_lea.smem [#allocation22], 8
    %852 = sst [smem:[%s851]] 4
    %854 = dma.general %s5, 16384, %s833, %s106, [#allocation21], [#allocation22], %s831, 0
    %v855 = vld [vmem:[%s162] sm:$0xff]
    %v856 = vld [vmem:[%s162 + $0x8] sm:$0xff]
    %v857 = vld [vmem:[%s162 + $0x10] sm:$0xff]
    %v858 = vld [vmem:[%s162 + $0x18] sm:$0xff]
    %v859 = vld [vmem:[%s162 + $0x20] sm:$0xff]
    %v860 = vld [vmem:[%s162 + $0x28] sm:$0xff]
    %v861 = vld [vmem:[%s162 + $0x30] sm:$0xff]
    %v862 = vld [vmem:[%s162 + $0x38] sm:$0xff]
    %v863 = vld [vmem:[%s162 + $0x48] sm:$0xff]
    %v864 = vld [vmem:[%s162 + $0x50] sm:$0xff]
    %v865 = vld [vmem:[%s162 + $0x58] sm:$0xff]
    %v866 = vld [vmem:[%s162 + $0x60] sm:$0xff]
    %v867 = vld [vmem:[%s162 + $0x68] sm:$0xff]
    %v868 = vld [vmem:[%s162 + $0x70] sm:$0xff]
    %v869 = vld [vmem:[%s162 + $0x78] sm:$0xff]
    %v870 = vld [vmem:[%s162 + $0x80] sm:$0xff]
    %v871 = vld [vmem:[%s162 + $0x90] sm:$0xff]
    %v872 = vld [vmem:[%s162 + $0x98] sm:$0xff]
    %v873 = vld [vmem:[%s162 + $0xa0] sm:$0xff]
    %v874 = vld [vmem:[%s162 + $0xa8] sm:$0xff]
    %v875 = vld [vmem:[%s162 + $0xb0] sm:$0xff]
    %v876 = vld [vmem:[%s162 + $0xb8] sm:$0xff]
    %v877 = vld [vmem:[%s162 + $0xc0] sm:$0xff]
    %v878 = vld [vmem:[%s162 + $0xc8] sm:$0xff]
    %v879 = vld [vmem:[%s162 + $0xd8] sm:$0xff]
    %v880 = vld [vmem:[%s162 + $0xe0] sm:$0xff]
    %v881 = vld [vmem:[%s162 + $0xe8] sm:$0xff]
    %v882 = vld [vmem:[%s162 + $0xf0] sm:$0xff]
    %v883 = vld [vmem:[%s162 + $0xf8] sm:$0xff]
    %v884 = vld [vmem:[%s162 + $0x100] sm:$0xff]
    %v885 = vld [vmem:[%s162 + $0x108] sm:$0xff]
    %v886 = vld [vmem:[%s162 + $0x110] sm:$0xff]
    %v887 = vld [vmem:[%s162 + $0x120] sm:$0xff]
    %v888 = vld [vmem:[%s162 + $0x128] sm:$0xff]
    %v889 = vld [vmem:[%s162 + $0x130] sm:$0xff]
    %v890 = vld [vmem:[%s162 + $0x138] sm:$0xff]
    %v891 = vld [vmem:[%s162 + $0x140] sm:$0xff]
    %v892 = vld [vmem:[%s162 + $0x148] sm:$0xff]
    %v893 = vld [vmem:[%s162 + $0x150] sm:$0xff]
    %v894 = vld [vmem:[%s162 + $0x158] sm:$0xff]
    %v895 = vld [vmem:[%s162 + $0x168] sm:$0xff]
    %v896 = vld [vmem:[%s162 + $0x170] sm:$0xff]
    %v897 = vld [vmem:[%s162 + $0x178] sm:$0xff]
    %v898 = vld [vmem:[%s162 + $0x180] sm:$0xff]
    %v899 = vld [vmem:[%s162 + $0x188] sm:$0xff]
    %v900 = vld [vmem:[%s162 + $0x190] sm:$0xff]
    %v901 = vld [vmem:[%s162 + $0x198] sm:$0xff]
    %v902 = vld [vmem:[%s162 + $0x1a0] sm:$0xff]
    %v903 = vld [vmem:[%s162 + $0x1b0] sm:$0xff]
    %v904 = vld [vmem:[%s162 + $0x1b8] sm:$0xff]
    %v905 = vld [vmem:[%s162 + $0x1c0] sm:$0xff]
    %v906 = vld [vmem:[%s162 + $0x1c8] sm:$0xff]
    %v907 = vld [vmem:[%s162 + $0x1d0] sm:$0xff]
    %v908 = vld [vmem:[%s162 + $0x1d8] sm:$0xff]
    %v909 = vld [vmem:[%s162 + $0x1e0] sm:$0xff]
    %v910 = vld [vmem:[%s162 + $0x1e8] sm:$0xff]
    %v911 = vld [vmem:[%s162 + $0x1f8] sm:$0xff]
    %v912 = vld [vmem:[%s162 + $0x200] sm:$0xff]
    %v913 = vld [vmem:[%s162 + $0x208] sm:$0xff]
    %v914 = vld [vmem:[%s162 + $0x210] sm:$0xff]
    %v915 = vld [vmem:[%s162 + $0x218] sm:$0xff]
    %v916 = vld [vmem:[%s162 + $0x220] sm:$0xff]
    %v917 = vld [vmem:[%s162 + $0x228] sm:$0xff]
    %v918 = vld [vmem:[%s162 + $0x230] sm:$0xff]
    %v919 = vld [vmem:[%s162 + $0x240] sm:$0xff]
    %v920 = vld [vmem:[%s162 + $0x248] sm:$0xff]
    %v921 = vld [vmem:[%s162 + $0x250] sm:$0xff]
    %v922 = vld [vmem:[%s162 + $0x258] sm:$0xff]
    %v923 = vld [vmem:[%s162 + $0x260] sm:$0xff]
    %v924 = vld [vmem:[%s162 + $0x268] sm:$0xff]
    %v925 = vld [vmem:[%s162 + $0x270] sm:$0xff]
    %v926 = vld [vmem:[%s162 + $0x278] sm:$0xff]
    %v927 = vld [vmem:[%s162 + $0x288] sm:$0xff]
    %v928 = vld [vmem:[%s162 + $0x290] sm:$0xff]
    %v929 = vld [vmem:[%s162 + $0x298] sm:$0xff]
    %v930 = vld [vmem:[%s162 + $0x2a0] sm:$0xff]
    %v931 = vld [vmem:[%s162 + $0x2a8] sm:$0xff]
    %v932 = vld [vmem:[%s162 + $0x2b0] sm:$0xff]
    %v933 = vld [vmem:[%s162 + $0x2b8] sm:$0xff]
    %v934 = vld [vmem:[%s162 + $0x2c0] sm:$0xff]
    %v935 = vld [vmem:[%s162 + $0x2d0] sm:$0xff]
    %v936 = vld [vmem:[%s162 + $0x2d8] sm:$0xff]
    %v937 = vld [vmem:[%s162 + $0x2e0] sm:$0xff]
    %v938 = vld [vmem:[%s162 + $0x2e8] sm:$0xff]
    %v939 = vld [vmem:[%s162 + $0x2f0] sm:$0xff]
    %v940 = vld [vmem:[%s162 + $0x2f8] sm:$0xff]
    %v941 = vld [vmem:[%s162 + $0x300] sm:$0xff]
    %v942 = vld [vmem:[%s162 + $0x308] sm:$0xff]
    %v943 = vld [vmem:[%s162 + $0x318] sm:$0xff]
    %v944 = vld [vmem:[%s162 + $0x320] sm:$0xff]
    %v945 = vld [vmem:[%s162 + $0x328] sm:$0xff]
    %v946 = vld [vmem:[%s162 + $0x330] sm:$0xff]
    %v947 = vld [vmem:[%s162 + $0x338] sm:$0xff]
    %v948 = vld [vmem:[%s162 + $0x340] sm:$0xff]
    %v949 = vld [vmem:[%s162 + $0x348] sm:$0xff]
    %v950 = vld [vmem:[%s162 + $0x350] sm:$0xff]
    %v951 = vld [vmem:[%s162 + $0x360] sm:$0xff]
    %v952 = vld [vmem:[%s162 + $0x368] sm:$0xff]
    %v953 = vld [vmem:[%s162 + $0x370] sm:$0xff]
    %v954 = vld [vmem:[%s162 + $0x378] sm:$0xff]
    %v955 = vld [vmem:[%s162 + $0x380] sm:$0xff]
    %v956 = vld [vmem:[%s162 + $0x388] sm:$0xff]
    %v957 = vld [vmem:[%s162 + $0x390] sm:$0xff]
    %v958 = vld [vmem:[%s162 + $0x398] sm:$0xff]
    %v959 = vld [vmem:[%s162 + $0x3a8] sm:$0xff]
    %v960 = vld [vmem:[%s162 + $0x3b0] sm:$0xff]
    %v961 = vld [vmem:[%s162 + $0x3b8] sm:$0xff]
    %v962 = vld [vmem:[%s162 + $0x3c0] sm:$0xff]
    %v963 = vld [vmem:[%s162 + $0x3c8] sm:$0xff]
    %v964 = vld [vmem:[%s162 + $0x3d0] sm:$0xff]
    %v965 = vld [vmem:[%s162 + $0x3d8] sm:$0xff]
    %v966 = vld [vmem:[%s162 + $0x3e0] sm:$0xff]
    %v967 = vld [vmem:[%s162 + $0x3f0] sm:$0xff]
    %v968 = vld [vmem:[%s162 + $0x3f8] sm:$0xff]
    %v969 = vld [vmem:[%s162 + $0x400] sm:$0xff]
    %v970 = vld [vmem:[%s162 + $0x408] sm:$0xff]
    %v971 = vld [vmem:[%s162 + $0x410] sm:$0xff]
    %v972 = vld [vmem:[%s162 + $0x418] sm:$0xff]
    %v973 = vld [vmem:[%s162 + $0x420] sm:$0xff]
    %v974 = vld [vmem:[%s162 + $0x428] sm:$0xff]
    %v975 = vld [vmem:[%s162 + $0x438] sm:$0xff]
    %v976 = vld [vmem:[%s162 + $0x440] sm:$0xff]
    %v977 = vld [vmem:[%s162 + $0x448] sm:$0xff]
    %v978 = vld [vmem:[%s162 + $0x450] sm:$0xff]
    %v979 = vld [vmem:[%s162 + $0x458] sm:$0xff]
    %v980 = vld [vmem:[%s162 + $0x460] sm:$0xff]
    %v981 = vld [vmem:[%s162 + $0x468] sm:$0xff]
    %v982 = vld [vmem:[%s162 + $0x470] sm:$0xff]
    %983 = vmatprep.subr.bf16.mxu0 %v856
    %984 = vmatpush1.bf16.msra.mxu0 %v855
    %985 = vmatprep.subr.bf16.mxu0 %v864
    %986 = vmatpush1.bf16.msra.mxu0 %v863
    %987 = vmatprep.subr.bf16.mxu0 %v872
    %988 = vmatpush1.bf16.msra.mxu0 %v871
    %989 = vmatprep.subr.bf16.mxu0 %v880
    %990 = vmatpush1.bf16.msra.mxu0 %v879
    %991 = vmatprep.subr.bf16.mxu0 %v888
    %992 = vmatpush1.bf16.msra.mxu0 %v887
    %993 = vmatprep.subr.bf16.mxu0 %v896
    %994 = vmatpush1.bf16.msra.mxu0 %v895
    %995 = vmatprep.subr.bf16.mxu0 %v904
    %996 = vmatpush1.bf16.msra.mxu0 %v903
    %997 = vmatprep.subr.bf16.mxu0 %v912
    %998 = vmatpush1.bf16.msra.mxu0 %v911
    %999 = vmatprep.subr.bf16.mxu0 %v920
    %1000 = vmatpush1.bf16.msra.mxu0 %v919
    %1001 = vmatprep.subr.bf16.mxu0 %v928
    %1002 = vmatpush1.bf16.msra.mxu0 %v927
    %1003 = vmatprep.subr.bf16.mxu0 %v936
    %1004 = vmatpush1.bf16.msra.mxu0 %v935
    %1005 = vmatprep.subr.bf16.mxu0 %v944
    %1006 = vmatpush1.bf16.msra.mxu0 %v943
    %1007 = vmatprep.subr.bf16.mxu0 %v952
    %1008 = vmatpush1.bf16.msra.mxu0 %v951
    %1009 = vmatprep.subr.bf16.mxu0 %v960
    %1010 = vmatpush1.bf16.msra.mxu0 %v959
    %1011 = vmatprep.subr.bf16.mxu0 %v968
    %1012 = vmatpush1.bf16.msra.mxu0 %v967
    %1013 = vmatprep.subr.bf16.mxu0 %v976
    %1014 = vmatpush1.bf16.msra.mxu0 %v975
    %1015 = vmatprep.mubr.bf16.mxu0 %v154
    %1016 = vmatmul.mubr.bf16.gmra.mrb[0].mxu0 %v153
    %v1017 = vpop.f32.mrb[0].mxu0
    %v1018 = vadd.f32 0.0, %v1017
    %v1019 = vpop.f32.mrb[0].mxu0
    %v1020 = vadd.f32 0.0, %v1019
    %v1021 = vpop.f32.mrb[0].mxu0
    %v1022 = vpop.f32.mrb[0].mxu0
    %1023 = vdwg.mxu0
    %1024 = vmatprep.subr.bf16.mxu0 %v858
    %1025 = vmatpush1.bf16.msra.mxu0 %v857
    %1026 = vmatprep.subr.bf16.mxu0 %v866
    %1027 = vmatpush1.bf16.msra.mxu0 %v865
    %1028 = vmatprep.subr.bf16.mxu0 %v874
    %1029 = vmatpush1.bf16.msra.mxu0 %v873
    %1030 = vmatprep.subr.bf16.mxu0 %v882
    %1031 = vmatpush1.bf16.msra.mxu0 %v881
    %1032 = vmatprep.subr.bf16.mxu0 %v890
    %1033 = vmatpush1.bf16.msra.mxu0 %v889
    %1034 = vmatprep.subr.bf16.mxu0 %v898
    %1035 = vmatpush1.bf16.msra.mxu0 %v897
    %1036 = vmatprep.subr.bf16.mxu0 %v906
    %1037 = vmatpush1.bf16.msra.mxu0 %v905
    %1038 = vmatprep.subr.bf16.mxu0 %v914
    %1039 = vmatpush1.bf16.msra.mxu0 %v913
    %1040 = vmatprep.subr.bf16.mxu0 %v922
    %1041 = vmatpush1.bf16.msra.mxu0 %v921
    %1042 = vmatprep.subr.bf16.mxu0 %v930
    %1043 = vmatpush1.bf16.msra.mxu0 %v929
    %1044 = vmatprep.subr.bf16.mxu0 %v938
    %1045 = vmatpush1.bf16.msra.mxu0 %v937
    %1046 = vmatprep.subr.bf16.mxu0 %v946
    %1047 = vmatpush1.bf16.msra.mxu0 %v945
    %1048 = vmatprep.subr.bf16.mxu0 %v954
    %1049 = vmatpush1.bf16.msra.mxu0 %v953
    %1050 = vmatprep.subr.bf16.mxu0 %v962
    %1051 = vmatpush1.bf16.msra.mxu0 %v961
    %1052 = vmatprep.subr.bf16.mxu0 %v970
    %1053 = vmatpush1.bf16.msra.mxu0 %v969
    %1054 = vmatprep.subr.bf16.mxu0 %v978
    %1055 = vmatpush1.bf16.msra.mxu0 %v977
    %1056 = vmatprep.mubr.bf16.mxu0 %v154
    %1057 = vmatmul.mubr.bf16.gmra.mrb[0].mxu0 %v153
    %v1058 = vpop.f32.mrb[0].mxu0
    %v1059 = vadd.f32 0.0, %v1058
    %v1060 = vpop.f32.mrb[0].mxu0
    %v1061 = vadd.f32 0.0, %v1060
    %v1062 = vpop.f32.mrb[0].mxu0
    %v1063 = vpop.f32.mrb[0].mxu0
    %1064 = vdwg.mxu0
    %1065 = vmatprep.subr.bf16.mxu0 %v860
    %1066 = vmatpush1.bf16.msra.mxu0 %v859
    %1067 = vmatprep.subr.bf16.mxu0 %v868
    %1068 = vmatpush1.bf16.msra.mxu0 %v867
    %1069 = vmatprep.subr.bf16.mxu0 %v876
    %1070 = vmatpush1.bf16.msra.mxu0 %v875
    %1071 = vmatprep.subr.bf16.mxu0 %v884
    %1072 = vmatpush1.bf16.msra.mxu0 %v883
    %1073 = vmatprep.subr.bf16.mxu0 %v892
    %1074 = vmatpush1.bf16.msra.mxu0 %v891
    %1075 = vmatprep.subr.bf16.mxu0 %v900
    %1076 = vmatpush1.bf16.msra.mxu0 %v899
    %1077 = vmatprep.subr.bf16.mxu0 %v908
    %1078 = vmatpush1.bf16.msra.mxu0 %v907
    %1079 = vmatprep.subr.bf16.mxu0 %v916
    %1080 = vmatpush1.bf16.msra.mxu0 %v915
    %1081 = vmatprep.subr.bf16.mxu0 %v924
    %1082 = vmatpush1.bf16.msra.mxu0 %v923
    %1083 = vmatprep.subr.bf16.mxu0 %v932
    %1084 = vmatpush1.bf16.msra.mxu0 %v931
    %1085 = vmatprep.subr.bf16.mxu0 %v940
    %1086 = vmatpush1.bf16.msra.mxu0 %v939
    %1087 = vmatprep.subr.bf16.mxu0 %v948
    %1088 = vmatpush1.bf16.msra.mxu0 %v947
    %1089 = vmatprep.subr.bf16.mxu0 %v956
    %1090 = vmatpush1.bf16.msra.mxu0 %v955
    %1091 = vmatprep.subr.bf16.mxu0 %v964
    %1092 = vmatpush1.bf16.msra.mxu0 %v963
    %1093 = vmatprep.subr.bf16.mxu0 %v972
    %1094 = vmatpush1.bf16.msra.mxu0 %v971
    %1095 = vmatprep.subr.bf16.mxu0 %v980
    %1096 = vmatpush1.bf16.msra.mxu0 %v979
    %1097 = vmatprep.mubr.bf16.mxu0 %v154
    %1098 = vmatmul.mubr.bf16.gmra.mrb[0].mxu0 %v153
    %v1099 = vpop.f32.mrb[0].mxu0
    %v1100 = vadd.f32 0.0, %v1099
    %v1101 = vpop.f32.mrb[0].mxu0
    %v1102 = vadd.f32 0.0, %v1101
    %v1103 = vpop.f32.mrb[0].mxu0
    %v1104 = vpop.f32.mrb[0].mxu0
    %1105 = vdwg.mxu0
    %1106 = vmatprep.subr.bf16.mxu0 %v862
    %1107 = vmatpush1.bf16.msra.mxu0 %v861
    %1108 = vmatprep.subr.bf16.mxu0 %v870
    %1109 = vmatpush1.bf16.msra.mxu0 %v869
    %1110 = vmatprep.subr.bf16.mxu0 %v878
    %1111 = vmatpush1.bf16.msra.mxu0 %v877
    %1112 = vmatprep.subr.bf16.mxu0 %v886
    %1113 = vmatpush1.bf16.msra.mxu0 %v885
    %1114 = vmatprep.subr.bf16.mxu0 %v894
    %1115 = vmatpush1.bf16.msra.mxu0 %v893
    %1116 = vmatprep.subr.bf16.mxu0 %v902
    %1117 = vmatpush1.bf16.msra.mxu0 %v901
    %1118 = vmatprep.subr.bf16.mxu0 %v910
    %1119 = vmatpush1.bf16.msra.mxu0 %v909
    %1120 = vmatprep.subr.bf16.mxu0 %v918
    %1121 = vmatpush1.bf16.msra.mxu0 %v917
    %1122 = vmatprep.subr.bf16.mxu0 %v926
    %1123 = vmatpush1.bf16.msra.mxu0 %v925
    %1124 = vmatprep.subr.bf16.mxu0 %v934
    %1125 = vmatpush1.bf16.msra.mxu0 %v933
    %1126 = vmatprep.subr.bf16.mxu0 %v942
    %1127 = vmatpush1.bf16.msra.mxu0 %v941
    %1128 = vmatprep.subr.bf16.mxu0 %v950
    %1129 = vmatpush1.bf16.msra.mxu0 %v949
    %1130 = vmatprep.subr.bf16.mxu0 %v958
    %1131 = vmatpush1.bf16.msra.mxu0 %v957
    %1132 = vmatprep.subr.bf16.mxu0 %v966
    %1133 = vmatpush1.bf16.msra.mxu0 %v965
    %1134 = vmatprep.subr.bf16.mxu0 %v974
    %1135 = vmatpush1.bf16.msra.mxu0 %v973
    %1136 = vmatprep.subr.bf16.mxu0 %v982
    %1137 = vmatpush1.bf16.msra.mxu0 %v981
    %1138 = vmatprep.mubr.bf16.mxu0 %v154
    %1139 = vmatmul.mubr.bf16.gmra.mrb[0].mxu0 %v153
    %v1140 = vpop.f32.mrb[0].mxu0
    %v1141 = vadd.f32 0.0, %v1140
    %v1142 = vpop.f32.mrb[0].mxu0
    %v1143 = vadd.f32 0.0, %v1142
    %v1144 = vpop.f32.mrb[0].mxu0
    %v1145 = vpop.f32.mrb[0].mxu0
    %1146 = vdwg.mxu0
    %v1147 = vadd.f32 %v690, %v1018
    %v1148 = vadd.f32 %v692, %v1020
    %v1149 = vadd.f32 %v731, %v1059
    %v1150 = vadd.f32 %v733, %v1061
    %v1151 = vadd.f32 %v772, %v1100
    %v1152 = vadd.f32 %v774, %v1102
    %v1153 = vadd.f32 %v813, %v1141
    %v1154 = vadd.f32 %v815, %v1143
    %s1155 = sshll.u32 %s158, 4
    %1156 = dma.done [#allocation3], %s1155
    %s1157 = scalar_lea.hbm %s5, 16384
    %s1159 = sshll.u32 1, 14
    %s1160 = sxor.u32 4294967295, %s1159
    %s1162 = sadd.s32 2, %s73
    %s1164 = sshll.u32 7, 26
    %s1165 = sxor.u32 4294967295, %s1164
    %s1166 = sand.u32 0, %s1165
    %s1167 = sshll.u32 %s1162, 26
    %s1168 = sor.u32 %s1166, %s1167
    %s1169 = sshll.u32 %s162, 4
    %s1170 = int_to_ptr.vmem [resolvable:$true] %s1169
    %1173 = sst [smem:[#allocation24]] 1024
    %s1174 = scalar_lea.smem [#allocation24], 1
    %1175 = sst [smem:[%s1174]] 1152
    %s1176 = scalar_lea.smem [#allocation24], 2
    %1177 = sst [smem:[%s1176]] 8
    %s1178 = scalar_lea.smem [#allocation24], 3
    %1179 = sst [smem:[%s1178]] 64
    %s1180 = scalar_lea.smem [#allocation24], 4
    %1181 = sst [smem:[%s1180]] 128
    %s1182 = scalar_lea.smem [#allocation24], 5
    %1183 = sst [smem:[%s1182]] 2
    %s1184 = scalar_lea.smem [#allocation24], 6
    %1185 = sst [smem:[%s1184]] 512
    %s1186 = scalar_lea.smem [#allocation24], 7
    %1187 = sst [smem:[%s1186]] 64
    %s1188 = scalar_lea.smem [#allocation24], 8
    %1189 = sst [smem:[%s1188]] 4
    %1191 = dma.general %s1157, 16384, %s1170, %s163, [#allocation23], [#allocation24], %s1168, 0
    %v1192 = vld [vmem:[#allocation2] sm:$0xff]
    %v1193 = vld [vmem:[#allocation2 + $0x8] sm:$0xff]
    %v1194 = vld [vmem:[#allocation2 + $0x10] sm:$0xff]
    %v1195 = vld [vmem:[#allocation2 + $0x18] sm:$0xff]
    %v1196 = vld [vmem:[#allocation2 + $0x20] sm:$0xff]
    %v1197 = vld [vmem:[#allocation2 + $0x28] sm:$0xff]
    %v1198 = vld [vmem:[#allocation2 + $0x30] sm:$0xff]
    %v1199 = vld [vmem:[#allocation2 + $0x38] sm:$0xff]
    %v1200 = vld [vmem:[#allocation2 + $0x48] sm:$0xff]
    %v1201 = vld [vmem:[#allocation2 + $0x50] sm:$0xff]
    %v1202 = vld [vmem:[#allocation2 + $0x58] sm:$0xff]
    %v1203 = vld [vmem:[#allocation2 + $0x60] sm:$0xff]
    %v1204 = vld [vmem:[#allocation2 + $0x68] sm:$0xff]
    %v1205 = vld [vmem:[#allocation2 + $0x70] sm:$0xff]
    %v1206 = vld [vmem:[#allocation2 + $0x78] sm:$0xff]
    %v1207 = vld [vmem:[#allocation2 + $0x80] sm:$0xff]
    %v1208 = vld [vmem:[#allocation2 + $0x90] sm:$0xff]
    %v1209 = vld [vmem:[#allocation2 + $0x98] sm:$0xff]
    %v1210 = vld [vmem:[#allocation2 + $0xa0] sm:$0xff]
    %v1211 = vld [vmem:[#allocation2 + $0xa8] sm:$0xff]
    %v1212 = vld [vmem:[#allocation2 + $0xb0] sm:$0xff]
    %v1213 = vld [vmem:[#allocation2 + $0xb8] sm:$0xff]
    %v1214 = vld [vmem:[#allocation2 + $0xc0] sm:$0xff]
    %v1215 = vld [vmem:[#allocation2 + $0xc8] sm:$0xff]
    %v1216 = vld [vmem:[#allocation2 + $0xd8] sm:$0xff]
    %v1217 = vld [vmem:[#allocation2 + $0xe0] sm:$0xff]
    %v1218 = vld [vmem:[#allocation2 + $0xe8] sm:$0xff]
    %v1219 = vld [vmem:[#allocation2 + $0xf0] sm:$0xff]
    %v1220 = vld [vmem:[#allocation2 + $0xf8] sm:$0xff]
    %v1221 = vld [vmem:[#allocation2 + $0x100] sm:$0xff]
    %v1222 = vld [vmem:[#allocation2 + $0x108] sm:$0xff]
    %v1223 = vld [vmem:[#allocation2 + $0x110] sm:$0xff]
    %v1224 = vld [vmem:[#allocation2 + $0x120] sm:$0xff]
    %v1225 = vld [vmem:[#allocation2 + $0x128] sm:$0xff]
    %v1226 = vld [vmem:[#allocation2 + $0x130] sm:$0xff]
    %v1227 = vld [vmem:[#allocation2 + $0x138] sm:$0xff]
    %v1228 = vld [vmem:[#allocation2 + $0x140] sm:$0xff]
    %v1229 = vld [vmem:[#allocation2 + $0x148] sm:$0xff]
    %v1230 = vld [vmem:[#allocation2 + $0x150] sm:$0xff]
    %v1231 = vld [vmem:[#allocation2 + $0x158] sm:$0xff]
    %v1232 = vld [vmem:[#allocation2 + $0x168] sm:$0xff]
    %v1233 = vld [vmem:[#allocation2 + $0x170] sm:$0xff]
    %v1234 = vld [vmem:[#allocation2 + $0x178] sm:$0xff]
    %v1235 = vld [vmem:[#allocation2 + $0x180] sm:$0xff]
    %v1236 = vld [vmem:[#allocation2 + $0x188] sm:$0xff]
    %v1237 = vld [vmem:[#allocation2 + $0x190] sm:$0xff]
    %v1238 = vld [vmem:[#allocation2 + $0x198] sm:$0xff]
    %v1239 = vld [vmem:[#allocation2 + $0x1a0] sm:$0xff]
    %v1240 = vld [vmem:[#allocation2 + $0x1b0] sm:$0xff]
    %v1241 = vld [vmem:[#allocation2 + $0x1b8] sm:$0xff]
    %v1242 = vld [vmem:[#allocation2 + $0x1c0] sm:$0xff]
    %v1243 = vld [vmem:[#allocation2 + $0x1c8] sm:$0xff]
    %v1244 = vld [vmem:[#allocation2 + $0x1d0] sm:$0xff]
    %v1245 = vld [vmem:[#allocation2 + $0x1d8] sm:$0xff]
    %v1246 = vld [vmem:[#allocation2 + $0x1e0] sm:$0xff]
    %v1247 = vld [vmem:[#allocation2 + $0x1e8] sm:$0xff]
    %v1248 = vld [vmem:[#allocation2 + $0x1f8] sm:$0xff]
    %v1249 = vld [vmem:[#allocation2 + $0x200] sm:$0xff]
    %v1250 = vld [vmem:[#allocation2 + $0x208] sm:$0xff]
    %v1251 = vld [vmem:[#allocation2 + $0x210] sm:$0xff]
    %v1252 = vld [vmem:[#allocation2 + $0x218] sm:$0xff]
    %v1253 = vld [vmem:[#allocation2 + $0x220] sm:$0xff]
    %v1254 = vld [vmem:[#allocation2 + $0x228] sm:$0xff]
    %v1255 = vld [vmem:[#allocation2 + $0x230] sm:$0xff]
    %v1256 = vld [vmem:[#allocation2 + $0x240] sm:$0xff]
    %v1257 = vld [vmem:[#allocation2 + $0x248] sm:$0xff]
    %v1258 = vld [vmem:[#allocation2 + $0x250] sm:$0xff]
    %v1259 = vld [vmem:[#allocation2 + $0x258] sm:$0xff]
    %v1260 = vld [vmem:[#allocation2 + $0x260] sm:$0xff]
    %v1261 = vld [vmem:[#allocation2 + $0x268] sm:$0xff]
    %v1262 = vld [vmem:[#allocation2 + $0x270] sm:$0xff]
    %v1263 = vld [vmem:[#allocation2 + $0x278] sm:$0xff]
    %v1264 = vld [vmem:[#allocation2 + $0x288] sm:$0xff]
    %v1265 = vld [vmem:[#allocation2 + $0x290] sm:$0xff]
    %v1266 = vld [vmem:[#allocation2 + $0x298] sm:$0xff]
    %v1267 = vld [vmem:[#allocation2 + $0x2a0] sm:$0xff]
    %v1268 = vld [vmem:[#allocation2 + $0x2a8] sm:$0xff]
    %v1269 = vld [vmem:[#allocation2 + $0x2b0] sm:$0xff]
    %v1270 = vld [vmem:[#allocation2 + $0x2b8] sm:$0xff]
    %v1271 = vld [vmem:[#allocation2 + $0x2c0] sm:$0xff]
    %v1272 = vld [vmem:[#allocation2 + $0x2d0] sm:$0xff]
    %v1273 = vld [vmem:[#allocation2 + $0x2d8] sm:$0xff]
    %v1274 = vld [vmem:[#allocation2 + $0x2e0] sm:$0xff]
    %v1275 = vld [vmem:[#allocation2 + $0x2e8] sm:$0xff]
    %v1276 = vld [vmem:[#allocation2 + $0x2f0] sm:$0xff]
    %v1277 = vld [vmem:[#allocation2 + $0x2f8] sm:$0xff]
    %v1278 = vld [vmem:[#allocation2 + $0x300] sm:$0xff]
    %v1279 = vld [vmem:[#allocation2 + $0x308] sm:$0xff]
    %v1280 = vld [vmem:[#allocation2 + $0x318] sm:$0xff]
    %v1281 = vld [vmem:[#allocation2 + $0x320] sm:$0xff]
    %v1282 = vld [vmem:[#allocation2 + $0x328] sm:$0xff]
    %v1283 = vld [vmem:[#allocation2 + $0x330] sm:$0xff]
    %v1284 = vld [vmem:[#allocation2 + $0x338] sm:$0xff]
    %v1285 = vld [vmem:[#allocation2 + $0x340] sm:$0xff]
    %v1286 = vld [vmem:[#allocation2 + $0x348] sm:$0xff]
    %v1287 = vld [vmem:[#allocation2 + $0x350] sm:$0xff]
    %v1288 = vld [vmem:[#allocation2 + $0x360] sm:$0xff]
    %v1289 = vld [vmem:[#allocation2 + $0x368] sm:$0xff]
    %v1290 = vld [vmem:[#allocation2 + $0x370] sm:$0xff]
    %v1291 = vld [vmem:[#allocation2 + $0x378] sm:$0xff]
    %v1292 = vld [vmem:[#allocation2 + $0x380] sm:$0xff]
    %v1293 = vld [vmem:[#allocation2 + $0x388] sm:$0xff]
    %v1294 = vld [vmem:[#allocation2 + $0x390] sm:$0xff]
    %v1295 = vld [vmem:[#allocation2 + $0x398] sm:$0xff]
    %v1296 = vld [vmem:[#allocation2 + $0x3a8] sm:$0xff]
    %v1297 = vld [vmem:[#allocation2 + $0x3b0] sm:$0xff]
    %v1298 = vld [vmem:[#allocation2 + $0x3b8] sm:$0xff]
    %v1299 = vld [vmem:[#allocation2 + $0x3c0] sm:$0xff]
    %v1300 = vld [vmem:[#allocation2 + $0x3c8] sm:$0xff]
    %v1301 = vld [vmem:[#allocation2 + $0x3d0] sm:$0xff]
    %v1302 = vld [vmem:[#allocation2 + $0x3d8] sm:$0xff]
    %v1303 = vld [vmem:[#allocation2 + $0x3e0] sm:$0xff]
    %v1304 = vld [vmem:[#allocation2 + $0x3f0] sm:$0xff]
    %v1305 = vld [vmem:[#allocation2 + $0x3f8] sm:$0xff]
    %v1306 = vld [vmem:[#allocation2 + $0x400] sm:$0xff]
    %v1307 = vld [vmem:[#allocation2 + $0x408] sm:$0xff]
    %v1308 = vld [vmem:[#allocation2 + $0x410] sm:$0xff]
    %v1309 = vld [vmem:[#allocation2 + $0x418] sm:$0xff]
    %v1310 = vld [vmem:[#allocation2 + $0x420] sm:$0xff]
    %v1311 = vld [vmem:[#allocation2 + $0x428] sm:$0xff]
    %v1312 = vld [vmem:[#allocation2 + $0x438] sm:$0xff]
    %v1313 = vld [vmem:[#allocation2 + $0x440] sm:$0xff]
    %v1314 = vld [vmem:[#allocation2 + $0x448] sm:$0xff]
    %v1315 = vld [vmem:[#allocation2 + $0x450] sm:$0xff]
    %v1316 = vld [vmem:[#allocation2 + $0x458] sm:$0xff]
    %v1317 = vld [vmem:[#allocation2 + $0x460] sm:$0xff]
    %v1318 = vld [vmem:[#allocation2 + $0x468] sm:$0xff]
    %v1319 = vld [vmem:[#allocation2 + $0x470] sm:$0xff]
    %1320 = vmatprep.subr.bf16.mxu0 %v1193
    %1321 = vmatpush1.bf16.msra.mxu0 %v1192
    %1322 = vmatprep.subr.bf16.mxu0 %v1201
    %1323 = vmatpush1.bf16.msra.mxu0 %v1200
    %1324 = vmatprep.subr.bf16.mxu0 %v1209
    %1325 = vmatpush1.bf16.msra.mxu0 %v1208
    %1326 = vmatprep.subr.bf16.mxu0 %v1217
    %1327 = vmatpush1.bf16.msra.mxu0 %v1216
    %1328 = vmatprep.subr.bf16.mxu0 %v1225
    %1329 = vmatpush1.bf16.msra.mxu0 %v1224
    %1330 = vmatprep.subr.bf16.mxu0 %v1233
    %1331 = vmatpush1.bf16.msra.mxu0 %v1232
    %1332 = vmatprep.subr.bf16.mxu0 %v1241
    %1333 = vmatpush1.bf16.msra.mxu0 %v1240
    %1334 = vmatprep.subr.bf16.mxu0 %v1249
    %1335 = vmatpush1.bf16.msra.mxu0 %v1248
    %1336 = vmatprep.subr.bf16.mxu0 %v1257
    %1337 = vmatpush1.bf16.msra.mxu0 %v1256
    %1338 = vmatprep.subr.bf16.mxu0 %v1265
    %1339 = vmatpush1.bf16.msra.mxu0 %v1264
    %1340 = vmatprep.subr.bf16.mxu0 %v1273
    %1341 = vmatpush1.bf16.msra.mxu0 %v1272
    %1342 = vmatprep.subr.bf16.mxu0 %v1281
    %1343 = vmatpush1.bf16.msra.mxu0 %v1280
    %1344 = vmatprep.subr.bf16.mxu0 %v1289
    %1345 = vmatpush1.bf16.msra.mxu0 %v1288
    %1346 = vmatprep.subr.bf16.mxu0 %v1297
    %1347 = vmatpush1.bf16.msra.mxu0 %v1296
    %1348 = vmatprep.subr.bf16.mxu0 %v1305
    %1349 = vmatpush1.bf16.msra.mxu0 %v1304
    %1350 = vmatprep.subr.bf16.mxu0 %v1313
    %1351 = vmatpush1.bf16.msra.mxu0 %v1312
    %1352 = vmatprep.mubr.bf16.mxu0 %v156
    %1353 = vmatmul.mubr.bf16.gmra.mrb[0].mxu0 %v155
    %v1354 = vpop.f32.mrb[0].mxu0
    %v1355 = vadd.f32 0.0, %v1354
    %v1356 = vpop.f32.mrb[0].mxu0
    %v1357 = vadd.f32 0.0, %v1356
    %v1358 = vpop.f32.mrb[0].mxu0
    %v1359 = vpop.f32.mrb[0].mxu0
    %1360 = vdwg.mxu0
    %1361 = vmatprep.subr.bf16.mxu0 %v1195
    %1362 = vmatpush1.bf16.msra.mxu0 %v1194
    %1363 = vmatprep.subr.bf16.mxu0 %v1203
    %1364 = vmatpush1.bf16.msra.mxu0 %v1202
    %1365 = vmatprep.subr.bf16.mxu0 %v1211
    %1366 = vmatpush1.bf16.msra.mxu0 %v1210
    %1367 = vmatprep.subr.bf16.mxu0 %v1219
    %1368 = vmatpush1.bf16.msra.mxu0 %v1218
    %1369 = vmatprep.subr.bf16.mxu0 %v1227
    %1370 = vmatpush1.bf16.msra.mxu0 %v1226
    %1371 = vmatprep.subr.bf16.mxu0 %v1235
    %1372 = vmatpush1.bf16.msra.mxu0 %v1234
    %1373 = vmatprep.subr.bf16.mxu0 %v1243
    %1374 = vmatpush1.bf16.msra.mxu0 %v1242
    %1375 = vmatprep.subr.bf16.mxu0 %v1251
    %1376 = vmatpush1.bf16.msra.mxu0 %v1250
    %1377 = vmatprep.subr.bf16.mxu0 %v1259
    %1378 = vmatpush1.bf16.msra.mxu0 %v1258
    %1379 = vmatprep.subr.bf16.mxu0 %v1267
    %1380 = vmatpush1.bf16.msra.mxu0 %v1266
    %1381 = vmatprep.subr.bf16.mxu0 %v1275
    %1382 = vmatpush1.bf16.msra.mxu0 %v1274
    %1383 = vmatprep.subr.bf16.mxu0 %v1283
    %1384 = vmatpush1.bf16.msra.mxu0 %v1282
    %1385 = vmatprep.subr.bf16.mxu0 %v1291
    %1386 = vmatpush1.bf16.msra.mxu0 %v1290
    %1387 = vmatprep.subr.bf16.mxu0 %v1299
    %1388 = vmatpush1.bf16.msra.mxu0 %v1298
    %1389 = vmatprep.subr.bf16.mxu0 %v1307
    %1390 = vmatpush1.bf16.msra.mxu0 %v1306
    %1391 = vmatprep.subr.bf16.mxu0 %v1315
    %1392 = vmatpush1.bf16.msra.mxu0 %v1314
    %1393 = vmatprep.mubr.bf16.mxu0 %v156
    %1394 = vmatmul.mubr.bf16.gmra.mrb[0].mxu0 %v155
    %v1395 = vpop.f32.mrb[0].mxu0
    %v1396 = vadd.f32 0.0, %v1395
    %v1397 = vpop.f32.mrb[0].mxu0
    %v1398 = vadd.f32 0.0, %v1397
    %v1399 = vpop.f32.mrb[0].mxu0
    %v1400 = vpop.f32.mrb[0].mxu0
    %1401 = vdwg.mxu0
    %1402 = vmatprep.subr.bf16.mxu0 %v1197
    %1403 = vmatpush1.bf16.msra.mxu0 %v1196
    %1404 = vmatprep.subr.bf16.mxu0 %v1205
    %1405 = vmatpush1.bf16.msra.mxu0 %v1204
    %1406 = vmatprep.subr.bf16.mxu0 %v1213
    %1407 = vmatpush1.bf16.msra.mxu0 %v1212
    %1408 = vmatprep.subr.bf16.mxu0 %v1221
    %1409 = vmatpush1.bf16.msra.mxu0 %v1220
    %1410 = vmatprep.subr.bf16.mxu0 %v1229
    %1411 = vmatpush1.bf16.msra.mxu0 %v1228
    %1412 = vmatprep.subr.bf16.mxu0 %v1237
    %1413 = vmatpush1.bf16.msra.mxu0 %v1236
    %1414 = vmatprep.subr.bf16.mxu0 %v1245
    %1415 = vmatpush1.bf16.msra.mxu0 %v1244
    %1416 = vmatprep.subr.bf16.mxu0 %v1253
    %1417 = vmatpush1.bf16.msra.mxu0 %v1252
    %1418 = vmatprep.subr.bf16.mxu0 %v1261
    %1419 = vmatpush1.bf16.msra.mxu0 %v1260
    %1420 = vmatprep.subr.bf16.mxu0 %v1269
    %1421 = vmatpush1.bf16.msra.mxu0 %v1268
    %1422 = vmatprep.subr.bf16.mxu0 %v1277
    %1423 = vmatpush1.bf16.msra.mxu0 %v1276
    %1424 = vmatprep.subr.bf16.mxu0 %v1285
    %1425 = vmatpush1.bf16.msra.mxu0 %v1284
    %1426 = vmatprep.subr.bf16.mxu0 %v1293
    %1427 = vmatpush1.bf16.msra.mxu0 %v1292
    %1428 = vmatprep.subr.bf16.mxu0 %v1301
    %1429 = vmatpush1.bf16.msra.mxu0 %v1300
    %1430 = vmatprep.subr.bf16.mxu0 %v1309
    %1431 = vmatpush1.bf16.msra.mxu0 %v1308
    %1432 = vmatprep.subr.bf16.mxu0 %v1317
    %1433 = vmatpush1.bf16.msra.mxu0 %v1316
    %1434 = vmatprep.mubr.bf16.mxu0 %v156
    %1435 = vmatmul.mubr.bf16.gmra.mrb[0].mxu0 %v155
    %v1436 = vpop.f32.mrb[0].mxu0
    %v1437 = vadd.f32 0.0, %v1436
    %v1438 = vpop.f32.mrb[0].mxu0
    %v1439 = vadd.f32 0.0, %v1438
    %v1440 = vpop.f32.mrb[0].mxu0
    %v1441 = vpop.f32.mrb[0].mxu0
    %1442 = vdwg.mxu0
    %1443 = vmatprep.subr.bf16.mxu0 %v1199
    %1444 = vmatpush1.bf16.msra.mxu0 %v1198
    %1445 = vmatprep.subr.bf16.mxu0 %v1207
    %1446 = vmatpush1.bf16.msra.mxu0 %v1206
    %1447 = vmatprep.subr.bf16.mxu0 %v1215
    %1448 = vmatpush1.bf16.msra.mxu0 %v1214
    %1449 = vmatprep.subr.bf16.mxu0 %v1223
    %1450 = vmatpush1.bf16.msra.mxu0 %v1222
    %1451 = vmatprep.subr.bf16.mxu0 %v1231
    %1452 = vmatpush1.bf16.msra.mxu0 %v1230
    %1453 = vmatprep.subr.bf16.mxu0 %v1239
    %1454 = vmatpush1.bf16.msra.mxu0 %v1238
    %1455 = vmatprep.subr.bf16.mxu0 %v1247
    %1456 = vmatpush1.bf16.msra.mxu0 %v1246
    %1457 = vmatprep.subr.bf16.mxu0 %v1255
    %1458 = vmatpush1.bf16.msra.mxu0 %v1254
    %1459 = vmatprep.subr.bf16.mxu0 %v1263
    %1460 = vmatpush1.bf16.msra.mxu0 %v1262
    %1461 = vmatprep.subr.bf16.mxu0 %v1271
    %1462 = vmatpush1.bf16.msra.mxu0 %v1270
    %1463 = vmatprep.subr.bf16.mxu0 %v1279
    %1464 = vmatpush1.bf16.msra.mxu0 %v1278
    %1465 = vmatprep.subr.bf16.mxu0 %v1287
    %1466 = vmatpush1.bf16.msra.mxu0 %v1286
    %1467 = vmatprep.subr.bf16.mxu0 %v1295
    %1468 = vmatpush1.bf16.msra.mxu0 %v1294
    %1469 = vmatprep.subr.bf16.mxu0 %v1303
    %1470 = vmatpush1.bf16.msra.mxu0 %v1302
    %1471 = vmatprep.subr.bf16.mxu0 %v1311
    %1472 = vmatpush1.bf16.msra.mxu0 %v1310
    %1473 = vmatprep.subr.bf16.mxu0 %v1319
    %1474 = vmatpush1.bf16.msra.mxu0 %v1318
    %1475 = vmatprep.mubr.bf16.mxu0 %v156
    %1476 = vmatmul.mubr.bf16.gmra.mrb[0].mxu0 %v155
    %v1477 = vpop.f32.mrb[0].mxu0
    %v1478 = vadd.f32 0.0, %v1477
    %v1479 = vpop.f32.mrb[0].mxu0
    %v1480 = vadd.f32 0.0, %v1479
    %v1481 = vpop.f32.mrb[0].mxu0
    %v1482 = vpop.f32.mrb[0].mxu0
    %1483 = vdwg.mxu0
    %v1484 = vadd.f32 %v1147, %v1355
    %v1485 = vadd.f32 %v1148, %v1357
    %v1486 = vadd.f32 %v1149, %v1396
    %v1487 = vadd.f32 %v1150, %v1398
    %v1488 = vadd.f32 %v1151, %v1437
    %v1489 = vadd.f32 %v1152, %v1439
    %v1490 = vadd.f32 %v1153, %v1478
    %v1491 = vadd.f32 %v1154, %v1480
    %v1492 = vld [vmem:[#allocation7] sm:$0xff]
    %v1494 = vlaneseq
    %v1495 = vshrl.u32 %v1494, 7
    %v1496 = vsub.s32 0, %v1495
    %v1497 = vrot.slane %v1492, %v1496
    %v1498 = vlaneseq
    %v1499 = vshrl.u32 %v1498, 7
    %v1500 = vsub.s32 1, %v1499
    %v1501 = vrot.slane %v1492, %v1500
    %v1502 = vlaneseq
    %v1503 = vshrl.u32 %v1502, 7
    %v1504 = vsub.s32 2, %v1503
    %v1505 = vrot.slane %v1492, %v1504
    %v1506 = vlaneseq
    %v1507 = vshrl.u32 %v1506, 7
    %v1508 = vsub.s32 3, %v1507
    %v1509 = vrot.slane %v1492, %v1508
    %v1510 = vlaneseq
    %v1511 = vshrl.u32 %v1510, 7
    %v1512 = vsub.s32 4, %v1511
    %v1513 = vrot.slane %v1492, %v1512
    %v1514 = vlaneseq
    %v1515 = vshrl.u32 %v1514, 7
    %v1516 = vsub.s32 5, %v1515
    %v1517 = vrot.slane %v1492, %v1516
    %v1518 = vlaneseq
    %v1519 = vshrl.u32 %v1518, 7
    %v1520 = vsub.s32 6, %v1519
    %v1521 = vrot.slane %v1492, %v1520
    %v1522 = vlaneseq
    %v1523 = vshrl.u32 %v1522, 7
    %v1524 = vsub.s32 7, %v1523
    %v1525 = vrot.slane %v1492, %v1524
    %v1534 = vadd.f32 %v1484, %v1497
    %v1535 = vadd.f32 %v1485, %v1501
    %v1536 = vadd.f32 %v1486, %v1505
    %v1537 = vadd.f32 %v1487, %v1509
    %v1538 = vadd.f32 %v1488, %v1513
    %v1539 = vadd.f32 %v1489, %v1517
    %v1540 = vadd.f32 %v1490, %v1521
    %v1541 = vadd.f32 %v1491, %v1525
    %v1542 = vmax.f32 %v1534, 0.0
    %v1543 = vmax.f32 %v1535, 0.0
    %v1544 = vmax.f32 %v1536, 0.0
    %v1545 = vmax.f32 %v1537, 0.0
    %v1546 = vmax.f32 %v1538, 0.0
    %v1547 = vmax.f32 %v1539, 0.0
    %v1548 = vmax.f32 %v1540, 0.0
    %v1549 = vmax.f32 %v1541, 0.0
    %v1550 = vpack.c.bf16 %v1542, %v1542
    %v1551 = vpack.c.bf16 %v1543, %v1543
    %v1552 = vpack.c.bf16 %v1544, %v1544
    %v1553 = vpack.c.bf16 %v1545, %v1545
    %v1554 = vpack.c.bf16 %v1546, %v1546
    %v1555 = vpack.c.bf16 %v1547, %v1547
    %v1556 = vpack.c.bf16 %v1548, %v1548
    %v1557 = vpack.c.bf16 %v1549, %v1549
    %s1558 = sshll.u32 %s158, 4
    %1559 = dma.done %s106, %s1558
    %s1560 = scalar_lea.hbm %s5, 32768
    %s1562 = sshll.u32 1, 14
    %s1563 = sxor.u32 4294967295, %s1562
    %s1565 = sadd.s32 2, %s73
    %s1567 = sshll.u32 7, 26
    %s1568 = sxor.u32 4294967295, %s1567
    %s1569 = sand.u32 0, %s1568
    %s1570 = sshll.u32 %s1565, 26
    %s1571 = sor.u32 %s1569, %s1570
    %s1572 = sshll.u32 [#allocation2], 4
    %s1573 = int_to_ptr.vmem [resolvable:$true] %s1572
    %1576 = sst [smem:[#allocation26]] 1024
    %s1577 = scalar_lea.smem [#allocation26], 1
    %1578 = sst [smem:[%s1577]] 1152
    %s1579 = scalar_lea.smem [#allocation26], 2
    %1580 = sst [smem:[%s1579]] 8
    %s1581 = scalar_lea.smem [#allocation26], 3
    %1582 = sst [smem:[%s1581]] 64
    %s1583 = scalar_lea.smem [#allocation26], 4
    %1584 = sst [smem:[%s1583]] 128
    %s1585 = scalar_lea.smem [#allocation26], 5
    %1586 = sst [smem:[%s1585]] 2
    %s1587 = scalar_lea.smem [#allocation26], 6
    %1588 = sst [smem:[%s1587]] 512
    %s1589 = scalar_lea.smem [#allocation26], 7
    %1590 = sst [smem:[%s1589]] 64
    %s1591 = scalar_lea.smem [#allocation26], 8
    %1592 = sst [smem:[%s1591]] 4
    %1594 = dma.general %s1560, 16384, %s1573, [#allocation3], [#allocation25], [#allocation26], %s1571, 0
    %v1595 = vld [vmem:[%s105] sm:$0xff]
    %v1596 = vld [vmem:[%s105 + $0x8] sm:$0xff]
    %v1597 = vld [vmem:[%s105 + $0x10] sm:$0xff]
    %v1598 = vld [vmem:[%s105 + $0x18] sm:$0xff]
    %v1599 = vld [vmem:[%s105 + $0x20] sm:$0xff]
    %v1600 = vld [vmem:[%s105 + $0x28] sm:$0xff]
    %v1601 = vld [vmem:[%s105 + $0x30] sm:$0xff]
    %v1602 = vld [vmem:[%s105 + $0x38] sm:$0xff]
    %v1603 = vld [vmem:[%s105 + $0x48] sm:$0xff]
    %v1604 = vld [vmem:[%s105 + $0x50] sm:$0xff]
    %v1605 = vld [vmem:[%s105 + $0x58] sm:$0xff]
    %v1606 = vld [vmem:[%s105 + $0x60] sm:$0xff]
    %v1607 = vld [vmem:[%s105 + $0x68] sm:$0xff]
    %v1608 = vld [vmem:[%s105 + $0x70] sm:$0xff]
    %v1609 = vld [vmem:[%s105 + $0x78] sm:$0xff]
    %v1610 = vld [vmem:[%s105 + $0x80] sm:$0xff]
    %v1611 = vld [vmem:[%s105 + $0x90] sm:$0xff]
    %v1612 = vld [vmem:[%s105 + $0x98] sm:$0xff]
    %v1613 = vld [vmem:[%s105 + $0xa0] sm:$0xff]
    %v1614 = vld [vmem:[%s105 + $0xa8] sm:$0xff]
    %v1615 = vld [vmem:[%s105 + $0xb0] sm:$0xff]
    %v1616 = vld [vmem:[%s105 + $0xb8] sm:$0xff]
    %v1617 = vld [vmem:[%s105 + $0xc0] sm:$0xff]
    %v1618 = vld [vmem:[%s105 + $0xc8] sm:$0xff]
    %v1619 = vld [vmem:[%s105 + $0xd8] sm:$0xff]
    %v1620 = vld [vmem:[%s105 + $0xe0] sm:$0xff]
    %v1621 = vld [vmem:[%s105 + $0xe8] sm:$0xff]
    %v1622 = vld [vmem:[%s105 + $0xf0] sm:$0xff]
    %v1623 = vld [vmem:[%s105 + $0xf8] sm:$0xff]
    %v1624 = vld [vmem:[%s105 + $0x100] sm:$0xff]
    %v1625 = vld [vmem:[%s105 + $0x108] sm:$0xff]
    %v1626 = vld [vmem:[%s105 + $0x110] sm:$0xff]
    %v1627 = vld [vmem:[%s105 + $0x120] sm:$0xff]
    %v1628 = vld [vmem:[%s105 + $0x128] sm:$0xff]
    %v1629 = vld [vmem:[%s105 + $0x130] sm:$0xff]
    %v1630 = vld [vmem:[%s105 + $0x138] sm:$0xff]
    %v1631 = vld [vmem:[%s105 + $0x140] sm:$0xff]
    %v1632 = vld [vmem:[%s105 + $0x148] sm:$0xff]
    %v1633 = vld [vmem:[%s105 + $0x150] sm:$0xff]
    %v1634 = vld [vmem:[%s105 + $0x158] sm:$0xff]
    %v1635 = vld [vmem:[%s105 + $0x168] sm:$0xff]
    %v1636 = vld [vmem:[%s105 + $0x170] sm:$0xff]
    %v1637 = vld [vmem:[%s105 + $0x178] sm:$0xff]
    %v1638 = vld [vmem:[%s105 + $0x180] sm:$0xff]
    %v1639 = vld [vmem:[%s105 + $0x188] sm:$0xff]
    %v1640 = vld [vmem:[%s105 + $0x190] sm:$0xff]
    %v1641 = vld [vmem:[%s105 + $0x198] sm:$0xff]
    %v1642 = vld [vmem:[%s105 + $0x1a0] sm:$0xff]
    %v1643 = vld [vmem:[%s105 + $0x1b0] sm:$0xff]
    %v1644 = vld [vmem:[%s105 + $0x1b8] sm:$0xff]
    %v1645 = vld [vmem:[%s105 + $0x1c0] sm:$0xff]
    %v1646 = vld [vmem:[%s105 + $0x1c8] sm:$0xff]
    %v1647 = vld [vmem:[%s105 + $0x1d0] sm:$0xff]
    %v1648 = vld [vmem:[%s105 + $0x1d8] sm:$0xff]
    %v1649 = vld [vmem:[%s105 + $0x1e0] sm:$0xff]
    %v1650 = vld [vmem:[%s105 + $0x1e8] sm:$0xff]
    %v1651 = vld [vmem:[%s105 + $0x1f8] sm:$0xff]
    %v1652 = vld [vmem:[%s105 + $0x200] sm:$0xff]
    %v1653 = vld [vmem:[%s105 + $0x208] sm:$0xff]
    %v1654 = vld [vmem:[%s105 + $0x210] sm:$0xff]
    %v1655 = vld [vmem:[%s105 + $0x218] sm:$0xff]
    %v1656 = vld [vmem:[%s105 + $0x220] sm:$0xff]
    %v1657 = vld [vmem:[%s105 + $0x228] sm:$0xff]
    %v1658 = vld [vmem:[%s105 + $0x230] sm:$0xff]
    %v1659 = vld [vmem:[%s105 + $0x240] sm:$0xff]
    %v1660 = vld [vmem:[%s105 + $0x248] sm:$0xff]
    %v1661 = vld [vmem:[%s105 + $0x250] sm:$0xff]
    %v1662 = vld [vmem:[%s105 + $0x258] sm:$0xff]
    %v1663 = vld [vmem:[%s105 + $0x260] sm:$0xff]
    %v1664 = vld [vmem:[%s105 + $0x268] sm:$0xff]
    %v1665 = vld [vmem:[%s105 + $0x270] sm:$0xff]
    %v1666 = vld [vmem:[%s105 + $0x278] sm:$0xff]
    %v1667 = vld [vmem:[%s105 + $0x288] sm:$0xff]
    %v1668 = vld [vmem:[%s105 + $0x290] sm:$0xff]
    %v1669 = vld [vmem:[%s105 + $0x298] sm:$0xff]
    %v1670 = vld [vmem:[%s105 + $0x2a0] sm:$0xff]
    %v1671 = vld [vmem:[%s105 + $0x2a8] sm:$0xff]
    %v1672 = vld [vmem:[%s105 + $0x2b0] sm:$0xff]
    %v1673 = vld [vmem:[%s105 + $0x2b8] sm:$0xff]
    %v1674 = vld [vmem:[%s105 + $0x2c0] sm:$0xff]
    %v1675 = vld [vmem:[%s105 + $0x2d0] sm:$0xff]
    %v1676 = vld [vmem:[%s105 + $0x2d8] sm:$0xff]
    %v1677 = vld [vmem:[%s105 + $0x2e0] sm:$0xff]
    %v1678 = vld [vmem:[%s105 + $0x2e8] sm:$0xff]
    %v1679 = vld [vmem:[%s105 + $0x2f0] sm:$0xff]
    %v1680 = vld [vmem:[%s105 + $0x2f8] sm:$0xff]
    %v1681 = vld [vmem:[%s105 + $0x300] sm:$0xff]
    %v1682 = vld [vmem:[%s105 + $0x308] sm:$0xff]
    %v1683 = vld [vmem:[%s105 + $0x318] sm:$0xff]
    %v1684 = vld [vmem:[%s105 + $0x320] sm:$0xff]
    %v1685 = vld [vmem:[%s105 + $0x328] sm:$0xff]
    %v1686 = vld [vmem:[%s105 + $0x330] sm:$0xff]
    %v1687 = vld [vmem:[%s105 + $0x338] sm:$0xff]
    %v1688 = vld [vmem:[%s105 + $0x340] sm:$0xff]
    %v1689 = vld [vmem:[%s105 + $0x348] sm:$0xff]
    %v1690 = vld [vmem:[%s105 + $0x350] sm:$0xff]
    %v1691 = vld [vmem:[%s105 + $0x360] sm:$0xff]
    %v1692 = vld [vmem:[%s105 + $0x368] sm:$0xff]
    %v1693 = vld [vmem:[%s105 + $0x370] sm:$0xff]
    %v1694 = vld [vmem:[%s105 + $0x378] sm:$0xff]
    %v1695 = vld [vmem:[%s105 + $0x380] sm:$0xff]
    %v1696 = vld [vmem:[%s105 + $0x388] sm:$0xff]
    %v1697 = vld [vmem:[%s105 + $0x390] sm:$0xff]
    %v1698 = vld [vmem:[%s105 + $0x398] sm:$0xff]
    %v1699 = vld [vmem:[%s105 + $0x3a8] sm:$0xff]
    %v1700 = vld [vmem:[%s105 + $0x3b0] sm:$0xff]
    %v1701 = vld [vmem:[%s105 + $0x3b8] sm:$0xff]
    %v1702 = vld [vmem:[%s105 + $0x3c0] sm:$0xff]
    %v1703 = vld [vmem:[%s105 + $0x3c8] sm:$0xff]
    %v1704 = vld [vmem:[%s105 + $0x3d0] sm:$0xff]
    %v1705 = vld [vmem:[%s105 + $0x3d8] sm:$0xff]
    %v1706 = vld [vmem:[%s105 + $0x3e0] sm:$0xff]
    %v1707 = vld [vmem:[%s105 + $0x3f0] sm:$0xff]
    %v1708 = vld [vmem:[%s105 + $0x3f8] sm:$0xff]
    %v1709 = vld [vmem:[%s105 + $0x400] sm:$0xff]
    %v1710 = vld [vmem:[%s105 + $0x408] sm:$0xff]
    %v1711 = vld [vmem:[%s105 + $0x410] sm:$0xff]
    %v1712 = vld [vmem:[%s105 + $0x418] sm:$0xff]
    %v1713 = vld [vmem:[%s105 + $0x420] sm:$0xff]
    %v1714 = vld [vmem:[%s105 + $0x428] sm:$0xff]
    %v1715 = vld [vmem:[%s105 + $0x438] sm:$0xff]
    %v1716 = vld [vmem:[%s105 + $0x440] sm:$0xff]
    %v1717 = vld [vmem:[%s105 + $0x448] sm:$0xff]
    %v1718 = vld [vmem:[%s105 + $0x450] sm:$0xff]
    %v1719 = vld [vmem:[%s105 + $0x458] sm:$0xff]
    %v1720 = vld [vmem:[%s105 + $0x460] sm:$0xff]
    %v1721 = vld [vmem:[%s105 + $0x468] sm:$0xff]
    %v1722 = vld [vmem:[%s105 + $0x470] sm:$0xff]
    %s1723 = sshll.u32 %s158, 4
    %1724 = dma.done %s163, %s1723
    %s1725 = scalar_lea.hbm %s5, 49152
    %s1727 = sshll.u32 1, 14
    %s1728 = sxor.u32 4294967295, %s1727
    %s1730 = sadd.s32 2, %s73
    %s1732 = sshll.u32 7, 26
    %s1733 = sxor.u32 4294967295, %s1732
    %s1734 = sand.u32 0, %s1733
    %s1735 = sshll.u32 %s1730, 26
    %s1736 = sor.u32 %s1734, %s1735
    %s1737 = sshll.u32 %s105, 4
    %s1738 = int_to_ptr.vmem [resolvable:$true] %s1737
    %1741 = sst [smem:[#allocation28]] 1024
    %s1742 = scalar_lea.smem [#allocation28], 1
    %1743 = sst [smem:[%s1742]] 1152
    %s1744 = scalar_lea.smem [#allocation28], 2
    %1745 = sst [smem:[%s1744]] 8
    %s1746 = scalar_lea.smem [#allocation28], 3
    %1747 = sst [smem:[%s1746]] 64
    %s1748 = scalar_lea.smem [#allocation28], 4
    %1749 = sst [smem:[%s1748]] 128
    %s1750 = scalar_lea.smem [#allocation28], 5
    %1751 = sst [smem:[%s1750]] 2
    %s1752 = scalar_lea.smem [#allocation28], 6
    %1753 = sst [smem:[%s1752]] 512
    %s1754 = scalar_lea.smem [#allocation28], 7
    %1755 = sst [smem:[%s1754]] 64
    %s1756 = scalar_lea.smem [#allocation28], 8
    %1757 = sst [smem:[%s1756]] 4
    %1759 = dma.general %s1725, 16384, %s1738, %s106, [#allocation27], [#allocation28], %s1736, 0
    %v1760 = vld [vmem:[%s162] sm:$0xff]
    %v1761 = vld [vmem:[%s162 + $0x8] sm:$0xff]
    %v1762 = vld [vmem:[%s162 + $0x10] sm:$0xff]
    %v1763 = vld [vmem:[%s162 + $0x18] sm:$0xff]
    %v1764 = vld [vmem:[%s162 + $0x20] sm:$0xff]
    %v1765 = vld [vmem:[%s162 + $0x28] sm:$0xff]
    %v1766 = vld [vmem:[%s162 + $0x30] sm:$0xff]
    %v1767 = vld [vmem:[%s162 + $0x38] sm:$0xff]
    %v1768 = vld [vmem:[%s162 + $0x48] sm:$0xff]
    %v1769 = vld [vmem:[%s162 + $0x50] sm:$0xff]
    %v1770 = vld [vmem:[%s162 + $0x58] sm:$0xff]
    %v1771 = vld [vmem:[%s162 + $0x60] sm:$0xff]
    %v1772 = vld [vmem:[%s162 + $0x68] sm:$0xff]
    %v1773 = vld [vmem:[%s162 + $0x70] sm:$0xff]
    %v1774 = vld [vmem:[%s162 + $0x78] sm:$0xff]
    %v1775 = vld [vmem:[%s162 + $0x80] sm:$0xff]
    %v1776 = vld [vmem:[%s162 + $0x90] sm:$0xff]
    %v1777 = vld [vmem:[%s162 + $0x98] sm:$0xff]
    %v1778 = vld [vmem:[%s162 + $0xa0] sm:$0xff]
    %v1779 = vld [vmem:[%s162 + $0xa8] sm:$0xff]
    %v1780 = vld [vmem:[%s162 + $0xb0] sm:$0xff]
    %v1781 = vld [vmem:[%s162 + $0xb8] sm:$0xff]
    %v1782 = vld [vmem:[%s162 + $0xc0] sm:$0xff]
    %v1783 = vld [vmem:[%s162 + $0xc8] sm:$0xff]
    %v1784 = vld [vmem:[%s162 + $0xd8] sm:$0xff]
    %v1785 = vld [vmem:[%s162 + $0xe0] sm:$0xff]
    %v1786 = vld [vmem:[%s162 + $0xe8] sm:$0xff]
    %v1787 = vld [vmem:[%s162 + $0xf0] sm:$0xff]
    %v1788 = vld [vmem:[%s162 + $0xf8] sm:$0xff]
    %v1789 = vld [vmem:[%s162 + $0x100] sm:$0xff]
    %v1790 = vld [vmem:[%s162 + $0x108] sm:$0xff]
    %v1791 = vld [vmem:[%s162 + $0x110] sm:$0xff]
    %v1792 = vld [vmem:[%s162 + $0x120] sm:$0xff]
    %v1793 = vld [vmem:[%s162 + $0x128] sm:$0xff]
    %v1794 = vld [vmem:[%s162 + $0x130] sm:$0xff]
    %v1795 = vld [vmem:[%s162 + $0x138] sm:$0xff]
    %v1796 = vld [vmem:[%s162 + $0x140] sm:$0xff]
    %v1797 = vld [vmem:[%s162 + $0x148] sm:$0xff]
    %v1798 = vld [vmem:[%s162 + $0x150] sm:$0xff]
    %v1799 = vld [vmem:[%s162 + $0x158] sm:$0xff]
    %v1800 = vld [vmem:[%s162 + $0x168] sm:$0xff]
    %v1801 = vld [vmem:[%s162 + $0x170] sm:$0xff]
    %v1802 = vld [vmem:[%s162 + $0x178] sm:$0xff]
    %v1803 = vld [vmem:[%s162 + $0x180] sm:$0xff]
    %v1804 = vld [vmem:[%s162 + $0x188] sm:$0xff]
    %v1805 = vld [vmem:[%s162 + $0x190] sm:$0xff]
    %v1806 = vld [vmem:[%s162 + $0x198] sm:$0xff]
    %v1807 = vld [vmem:[%s162 + $0x1a0] sm:$0xff]
    %v1808 = vld [vmem:[%s162 + $0x1b0] sm:$0xff]
    %v1809 = vld [vmem:[%s162 + $0x1b8] sm:$0xff]
    %v1810 = vld [vmem:[%s162 + $0x1c0] sm:$0xff]
    %v1811 = vld [vmem:[%s162 + $0x1c8] sm:$0xff]
    %v1812 = vld [vmem:[%s162 + $0x1d0] sm:$0xff]
    %v1813 = vld [vmem:[%s162 + $0x1d8] sm:$0xff]
    %v1814 = vld [vmem:[%s162 + $0x1e0] sm:$0xff]
    %v1815 = vld [vmem:[%s162 + $0x1e8] sm:$0xff]
    %v1816 = vld [vmem:[%s162 + $0x1f8] sm:$0xff]
    %v1817 = vld [vmem:[%s162 + $0x200] sm:$0xff]
    %v1818 = vld [vmem:[%s162 + $0x208] sm:$0xff]
    %v1819 = vld [vmem:[%s162 + $0x210] sm:$0xff]
    %v1820 = vld [vmem:[%s162 + $0x218] sm:$0xff]
    %v1821 = vld [vmem:[%s162 + $0x220] sm:$0xff]
    %v1822 = vld [vmem:[%s162 + $0x228] sm:$0xff]
    %v1823 = vld [vmem:[%s162 + $0x230] sm:$0xff]
    %v1824 = vld [vmem:[%s162 + $0x240] sm:$0xff]
    %v1825 = vld [vmem:[%s162 + $0x248] sm:$0xff]
    %v1826 = vld [vmem:[%s162 + $0x250] sm:$0xff]
    %v1827 = vld [vmem:[%s162 + $0x258] sm:$0xff]
    %v1828 = vld [vmem:[%s162 + $0x260] sm:$0xff]
    %v1829 = vld [vmem:[%s162 + $0x268] sm:$0xff]
    %v1830 = vld [vmem:[%s162 + $0x270] sm:$0xff]
    %v1831 = vld [vmem:[%s162 + $0x278] sm:$0xff]
    %v1832 = vld [vmem:[%s162 + $0x288] sm:$0xff]
    %v1833 = vld [vmem:[%s162 + $0x290] sm:$0xff]
    %v1834 = vld [vmem:[%s162 + $0x298] sm:$0xff]
    %v1835 = vld [vmem:[%s162 + $0x2a0] sm:$0xff]
    %v1836 = vld [vmem:[%s162 + $0x2a8] sm:$0xff]
    %v1837 = vld [vmem:[%s162 + $0x2b0] sm:$0xff]
    %v1838 = vld [vmem:[%s162 + $0x2b8] sm:$0xff]
    %v1839 = vld [vmem:[%s162 + $0x2c0] sm:$0xff]
    %v1840 = vld [vmem:[%s162 + $0x2d0] sm:$0xff]
    %v1841 = vld [vmem:[%s162 + $0x2d8] sm:$0xff]
    %v1842 = vld [vmem:[%s162 + $0x2e0] sm:$0xff]
    %v1843 = vld [vmem:[%s162 + $0x2e8] sm:$0xff]
    %v1844 = vld [vmem:[%s162 + $0x2f0] sm:$0xff]
    %v1845 = vld [vmem:[%s162 + $0x2f8] sm:$0xff]
    %v1846 = vld [vmem:[%s162 + $0x300] sm:$0xff]
    %v1847 = vld [vmem:[%s162 + $0x308] sm:$0xff]
    %v1848 = vld [vmem:[%s162 + $0x318] sm:$0xff]
    %v1849 = vld [vmem:[%s162 + $0x320] sm:$0xff]
    %v1850 = vld [vmem:[%s162 + $0x328] sm:$0xff]
    %v1851 = vld [vmem:[%s162 + $0x330] sm:$0xff]
    %v1852 = vld [vmem:[%s162 + $0x338] sm:$0xff]
    %v1853 = vld [vmem:[%s162 + $0x340] sm:$0xff]
    %v1854 = vld [vmem:[%s162 + $0x348] sm:$0xff]
    %v1855 = vld [vmem:[%s162 + $0x350] sm:$0xff]
    %v1856 = vld [vmem:[%s162 + $0x360] sm:$0xff]
    %v1857 = vld [vmem:[%s162 + $0x368] sm:$0xff]
    %v1858 = vld [vmem:[%s162 + $0x370] sm:$0xff]
    %v1859 = vld [vmem:[%s162 + $0x378] sm:$0xff]
    %v1860 = vld [vmem:[%s162 + $0x380] sm:$0xff]
    %v1861 = vld [vmem:[%s162 + $0x388] sm:$0xff]
    %v1862 = vld [vmem:[%s162 + $0x390] sm:$0xff]
    %v1863 = vld [vmem:[%s162 + $0x398] sm:$0xff]
    %v1864 = vld [vmem:[%s162 + $0x3a8] sm:$0xff]
    %v1865 = vld [vmem:[%s162 + $0x3b0] sm:$0xff]
    %v1866 = vld [vmem:[%s162 + $0x3b8] sm:$0xff]
    %v1867 = vld [vmem:[%s162 + $0x3c0] sm:$0xff]
    %v1868 = vld [vmem:[%s162 + $0x3c8] sm:$0xff]
    %v1869 = vld [vmem:[%s162 + $0x3d0] sm:$0xff]
    %v1870 = vld [vmem:[%s162 + $0x3d8] sm:$0xff]
    %v1871 = vld [vmem:[%s162 + $0x3e0] sm:$0xff]
    %v1872 = vld [vmem:[%s162 + $0x3f0] sm:$0xff]
    %v1873 = vld [vmem:[%s162 + $0x3f8] sm:$0xff]
    %v1874 = vld [vmem:[%s162 + $0x400] sm:$0xff]
    %v1875 = vld [vmem:[%s162 + $0x408] sm:$0xff]
    %v1876 = vld [vmem:[%s162 + $0x410] sm:$0xff]
    %v1877 = vld [vmem:[%s162 + $0x418] sm:$0xff]
    %v1878 = vld [vmem:[%s162 + $0x420] sm:$0xff]
    %v1879 = vld [vmem:[%s162 + $0x428] sm:$0xff]
    %v1880 = vld [vmem:[%s162 + $0x438] sm:$0xff]
    %v1881 = vld [vmem:[%s162 + $0x440] sm:$0xff]
    %v1882 = vld [vmem:[%s162 + $0x448] sm:$0xff]
    %v1883 = vld [vmem:[%s162 + $0x450] sm:$0xff]
    %v1884 = vld [vmem:[%s162 + $0x458] sm:$0xff]
    %v1885 = vld [vmem:[%s162 + $0x460] sm:$0xff]
    %v1886 = vld [vmem:[%s162 + $0x468] sm:$0xff]
    %v1887 = vld [vmem:[%s162 + $0x470] sm:$0xff]
    %1888 = vmatprep.subr.bf16.mxu0 %v1761
    %1889 = vmatpush1.bf16.msra.mxu0 %v1760
    %1890 = vmatprep.subr.bf16.mxu0 %v1769
    %1891 = vmatpush1.bf16.msra.mxu0 %v1768
    %1892 = vmatprep.subr.bf16.mxu0 %v1777
    %1893 = vmatpush1.bf16.msra.mxu0 %v1776
    %1894 = vmatprep.subr.bf16.mxu0 %v1785
    %1895 = vmatpush1.bf16.msra.mxu0 %v1784
    %1896 = vmatprep.subr.bf16.mxu0 %v1793
    %1897 = vmatpush1.bf16.msra.mxu0 %v1792
    %1898 = vmatprep.subr.bf16.mxu0 %v1801
    %1899 = vmatpush1.bf16.msra.mxu0 %v1800
    %1900 = vmatprep.subr.bf16.mxu0 %v1809
    %1901 = vmatpush1.bf16.msra.mxu0 %v1808
    %1902 = vmatprep.subr.bf16.mxu0 %v1817
    %1903 = vmatpush1.bf16.msra.mxu0 %v1816
    %1904 = vmatprep.subr.bf16.mxu0 %v1825
    %1905 = vmatpush1.bf16.msra.mxu0 %v1824
    %1906 = vmatprep.subr.bf16.mxu0 %v1833
    %1907 = vmatpush1.bf16.msra.mxu0 %v1832
    %1908 = vmatprep.subr.bf16.mxu0 %v1841
    %1909 = vmatpush1.bf16.msra.mxu0 %v1840
    %1910 = vmatprep.subr.bf16.mxu0 %v1849
    %1911 = vmatpush1.bf16.msra.mxu0 %v1848
    %1912 = vmatprep.subr.bf16.mxu0 %v1857
    %1913 = vmatpush1.bf16.msra.mxu0 %v1856
    %1914 = vmatprep.subr.bf16.mxu0 %v1865
    %1915 = vmatpush1.bf16.msra.mxu0 %v1864
    %1916 = vmatprep.subr.bf16.mxu0 %v1873
    %1917 = vmatpush1.bf16.msra.mxu0 %v1872
    %1918 = vmatprep.subr.bf16.mxu0 %v1881
    %1919 = vmatpush1.bf16.msra.mxu0 %v1880
    %1920 = vmatprep.mubr.bf16.mxu0 %v1553
    %1921 = vmatmul.mubr.bf16.gmra.mrb[0].mxu0 %v1552
    %v1922 = vpop.f32.mrb[0].mxu0
    %v1923 = vadd.f32 0.0, %v1922
    %v1924 = vpop.f32.mrb[0].mxu0
    %v1925 = vadd.f32 0.0, %v1924
    %v1926 = vpop.f32.mrb[0].mxu0
    %v1927 = vpop.f32.mrb[0].mxu0
    %1928 = vdwg.mxu0
    %1929 = vmatprep.subr.bf16.mxu0 %v1763
    %1930 = vmatpush1.bf16.msra.mxu0 %v1762
    %1931 = vmatprep.subr.bf16.mxu0 %v1771
    %1932 = vmatpush1.bf16.msra.mxu0 %v1770
    %1933 = vmatprep.subr.bf16.mxu0 %v1779
    %1934 = vmatpush1.bf16.msra.mxu0 %v1778
    %1935 = vmatprep.subr.bf16.mxu0 %v1787
    %1936 = vmatpush1.bf16.msra.mxu0 %v1786
    %1937 = vmatprep.subr.bf16.mxu0 %v1795
    %1938 = vmatpush1.bf16.msra.mxu0 %v1794
    %1939 = vmatprep.subr.bf16.mxu0 %v1803
    %1940 = vmatpush1.bf16.msra.mxu0 %v1802
    %1941 = vmatprep.subr.bf16.mxu0 %v1811
    %1942 = vmatpush1.bf16.msra.mxu0 %v1810
    %1943 = vmatprep.subr.bf16.mxu0 %v1819
    %1944 = vmatpush1.bf16.msra.mxu0 %v1818
    %1945 = vmatprep.subr.bf16.mxu0 %v1827
    %1946 = vmatpush1.bf16.msra.mxu0 %v1826
    %1947 = vmatprep.subr.bf16.mxu0 %v1835
    %1948 = vmatpush1.bf16.msra.mxu0 %v1834
    %1949 = vmatprep.subr.bf16.mxu0 %v1843
    %1950 = vmatpush1.bf16.msra.mxu0 %v1842
    %1951 = vmatprep.subr.bf16.mxu0 %v1851
    %1952 = vmatpush1.bf16.msra.mxu0 %v1850
    %1953 = vmatprep.subr.bf16.mxu0 %v1859
    %1954 = vmatpush1.bf16.msra.mxu0 %v1858
    %1955 = vmatprep.subr.bf16.mxu0 %v1867
    %1956 = vmatpush1.bf16.msra.mxu0 %v1866
    %1957 = vmatprep.subr.bf16.mxu0 %v1875
    %1958 = vmatpush1.bf16.msra.mxu0 %v1874
    %1959 = vmatprep.subr.bf16.mxu0 %v1883
    %1960 = vmatpush1.bf16.msra.mxu0 %v1882
    %1961 = vmatprep.mubr.bf16.mxu0 %v1553
    %1962 = vmatmul.mubr.bf16.gmra.mrb[0].mxu0 %v1552
    %v1963 = vpop.f32.mrb[0].mxu0
    %v1964 = vadd.f32 0.0, %v1963
    %v1965 = vpop.f32.mrb[0].mxu0
    %v1966 = vadd.f32 0.0, %v1965
    %v1967 = vpop.f32.mrb[0].mxu0
    %v1968 = vpop.f32.mrb[0].mxu0
    %1969 = vdwg.mxu0
    %1970 = vmatprep.subr.bf16.mxu0 %v1765
    %1971 = vmatpush1.bf16.msra.mxu0 %v1764
    %1972 = vmatprep.subr.bf16.mxu0 %v1773
    %1973 = vmatpush1.bf16.msra.mxu0 %v1772
    %1974 = vmatprep.subr.bf16.mxu0 %v1781
    %1975 = vmatpush1.bf16.msra.mxu0 %v1780
    %1976 = vmatprep.subr.bf16.mxu0 %v1789
    %1977 = vmatpush1.bf16.msra.mxu0 %v1788
    %1978 = vmatprep.subr.bf16.mxu0 %v1797
    %1979 = vmatpush1.bf16.msra.mxu0 %v1796
    %1980 = vmatprep.subr.bf16.mxu0 %v1805
    %1981 = vmatpush1.bf16.msra.mxu0 %v1804
    %1982 = vmatprep.subr.bf16.mxu0 %v1813
    %1983 = vmatpush1.bf16.msra.mxu0 %v1812
    %1984 = vmatprep.subr.bf16.mxu0 %v1821
    %1985 = vmatpush1.bf16.msra.mxu0 %v1820
    %1986 = vmatprep.subr.bf16.mxu0 %v1829
    %1987 = vmatpush1.bf16.msra.mxu0 %v1828
    %1988 = vmatprep.subr.bf16.mxu0 %v1837
    %1989 = vmatpush1.bf16.msra.mxu0 %v1836
    %1990 = vmatprep.subr.bf16.mxu0 %v1845
    %1991 = vmatpush1.bf16.msra.mxu0 %v1844
    %1992 = vmatprep.subr.bf16.mxu0 %v1853
    %1993 = vmatpush1.bf16.msra.mxu0 %v1852
    %1994 = vmatprep.subr.bf16.mxu0 %v1861
    %1995 = vmatpush1.bf16.msra.mxu0 %v1860
    %1996 = vmatprep.subr.bf16.mxu0 %v1869
    %1997 = vmatpush1.bf16.msra.mxu0 %v1868
    %1998 = vmatprep.subr.bf16.mxu0 %v1877
    %1999 = vmatpush1.bf16.msra.mxu0 %v1876
    %2000 = vmatprep.subr.bf16.mxu0 %v1885
    %2001 = vmatpush1.bf16.msra.mxu0 %v1884
    %2002 = vmatprep.mubr.bf16.mxu0 %v1553
    %2003 = vmatmul.mubr.bf16.gmra.mrb[0].mxu0 %v1552
    %v2004 = vpop.f32.mrb[0].mxu0
    %v2005 = vadd.f32 0.0, %v2004
    %v2006 = vpop.f32.mrb[0].mxu0
    %v2007 = vadd.f32 0.0, %v2006
    %v2008 = vpop.f32.mrb[0].mxu0
    %v2009 = vpop.f32.mrb[0].mxu0
    %2010 = vdwg.mxu0
    %2011 = vmatprep.subr.bf16.mxu0 %v1767
    %2012 = vmatpush1.bf16.msra.mxu0 %v1766
    %2013 = vmatprep.subr.bf16.mxu0 %v1775
    %2014 = vmatpush1.bf16.msra.mxu0 %v1774
    %2015 = vmatprep.subr.bf16.mxu0 %v1783
    %2016 = vmatpush1.bf16.msra.mxu0 %v1782
    %2017 = vmatprep.subr.bf16.mxu0 %v1791
    %2018 = vmatpush1.bf16.msra.mxu0 %v1790
    %2019 = vmatprep.subr.bf16.mxu0 %v1799
    %2020 = vmatpush1.bf16.msra.mxu0 %v1798
    %2021 = vmatprep.subr.bf16.mxu0 %v1807
    %2022 = vmatpush1.bf16.msra.mxu0 %v1806
    %2023 = vmatprep.subr.bf16.mxu0 %v1815
    %2024 = vmatpush1.bf16.msra.mxu0 %v1814
    %2025 = vmatprep.subr.bf16.mxu0 %v1823
    %2026 = vmatpush1.bf16.msra.mxu0 %v1822
    %2027 = vmatprep.subr.bf16.mxu0 %v1831
    %2028 = vmatpush1.bf16.msra.mxu0 %v1830
    %2029 = vmatprep.subr.bf16.mxu0 %v1839
    %2030 = vmatpush1.bf16.msra.mxu0 %v1838
    %2031 = vmatprep.subr.bf16.mxu0 %v1847
    %2032 = vmatpush1.bf16.msra.mxu0 %v1846
    %2033 = vmatprep.subr.bf16.mxu0 %v1855
    %2034 = vmatpush1.bf16.msra.mxu0 %v1854
    %2035 = vmatprep.subr.bf16.mxu0 %v1863
    %2036 = vmatpush1.bf16.msra.mxu0 %v1862
    %2037 = vmatprep.subr.bf16.mxu0 %v1871
    %2038 = vmatpush1.bf16.msra.mxu0 %v1870
    %2039 = vmatprep.subr.bf16.mxu0 %v1879
    %2040 = vmatpush1.bf16.msra.mxu0 %v1878
    %2041 = vmatprep.subr.bf16.mxu0 %v1887
    %2042 = vmatpush1.bf16.msra.mxu0 %v1886
    %2043 = vmatprep.mubr.bf16.mxu0 %v1553
    %2044 = vmatmul.mubr.bf16.gmra.mrb[0].mxu0 %v1552
    %v2045 = vpop.f32.mrb[0].mxu0
    %v2046 = vadd.f32 0.0, %v2045
    %v2047 = vpop.f32.mrb[0].mxu0
    %v2048 = vadd.f32 0.0, %v2047
    %v2049 = vpop.f32.mrb[0].mxu0
    %v2050 = vpop.f32.mrb[0].mxu0
    %2051 = vdwg.mxu0
    %2052 = vmatprep.subr.bf16.mxu0 %v1596
    %2053 = vmatpush1.bf16.msra.mxu0 %v1595
    %2054 = vmatprep.subr.bf16.mxu0 %v1604
    %2055 = vmatpush1.bf16.msra.mxu0 %v1603
    %2056 = vmatprep.subr.bf16.mxu0 %v1612
    %2057 = vmatpush1.bf16.msra.mxu0 %v1611
    %2058 = vmatprep.subr.bf16.mxu0 %v1620
    %2059 = vmatpush1.bf16.msra.mxu0 %v1619
    %2060 = vmatprep.subr.bf16.mxu0 %v1628
    %2061 = vmatpush1.bf16.msra.mxu0 %v1627
    %2062 = vmatprep.subr.bf16.mxu0 %v1636
    %2063 = vmatpush1.bf16.msra.mxu0 %v1635
    %2064 = vmatprep.subr.bf16.mxu0 %v1644
    %2065 = vmatpush1.bf16.msra.mxu0 %v1643
    %2066 = vmatprep.subr.bf16.mxu0 %v1652
    %2067 = vmatpush1.bf16.msra.mxu0 %v1651
    %2068 = vmatprep.subr.bf16.mxu0 %v1660
    %2069 = vmatpush1.bf16.msra.mxu0 %v1659
    %2070 = vmatprep.subr.bf16.mxu0 %v1668
    %2071 = vmatpush1.bf16.msra.mxu0 %v1667
    %2072 = vmatprep.subr.bf16.mxu0 %v1676
    %2073 = vmatpush1.bf16.msra.mxu0 %v1675
    %2074 = vmatprep.subr.bf16.mxu0 %v1684
    %2075 = vmatpush1.bf16.msra.mxu0 %v1683
    %2076 = vmatprep.subr.bf16.mxu0 %v1692
    %2077 = vmatpush1.bf16.msra.mxu0 %v1691
    %2078 = vmatprep.subr.bf16.mxu0 %v1700
    %2079 = vmatpush1.bf16.msra.mxu0 %v1699
    %2080 = vmatprep.subr.bf16.mxu0 %v1708
    %2081 = vmatpush1.bf16.msra.mxu0 %v1707
    %2082 = vmatprep.subr.bf16.mxu0 %v1716
    %2083 = vmatpush1.bf16.msra.mxu0 %v1715
    %2084 = vmatprep.mubr.bf16.mxu0 %v1551
    %2085 = vmatmul.mubr.bf16.gmra.mrb[0].mxu0 %v1550
    %v2086 = vpop.f32.mrb[0].mxu0
    %v2087 = vadd.f32 %v1923, %v2086
    %v2088 = vpop.f32.mrb[0].mxu0
    %v2089 = vadd.f32 %v1925, %v2088
    %v2090 = vpop.f32.mrb[0].mxu0
    %v2091 = vpop.f32.mrb[0].mxu0
    %2092 = vdwg.mxu0
    %2093 = vmatprep.subr.bf16.mxu0 %v1598
    %2094 = vmatpush1.bf16.msra.mxu0 %v1597
    %2095 = vmatprep.subr.bf16.mxu0 %v1606
    %2096 = vmatpush1.bf16.msra.mxu0 %v1605
    %2097 = vmatprep.subr.bf16.mxu0 %v1614
    %2098 = vmatpush1.bf16.msra.mxu0 %v1613
    %2099 = vmatprep.subr.bf16.mxu0 %v1622
    %2100 = vmatpush1.bf16.msra.mxu0 %v1621
    %2101 = vmatprep.subr.bf16.mxu0 %v1630
    %2102 = vmatpush1.bf16.msra.mxu0 %v1629
    %2103 = vmatprep.subr.bf16.mxu0 %v1638
    %2104 = vmatpush1.bf16.msra.mxu0 %v1637
    %2105 = vmatprep.subr.bf16.mxu0 %v1646
    %2106 = vmatpush1.bf16.msra.mxu0 %v1645
    %2107 = vmatprep.subr.bf16.mxu0 %v1654
    %2108 = vmatpush1.bf16.msra.mxu0 %v1653
    %2109 = vmatprep.subr.bf16.mxu0 %v1662
    %2110 = vmatpush1.bf16.msra.mxu0 %v1661
    %2111 = vmatprep.subr.bf16.mxu0 %v1670
    %2112 = vmatpush1.bf16.msra.mxu0 %v1669
    %2113 = vmatprep.subr.bf16.mxu0 %v1678
    %2114 = vmatpush1.bf16.msra.mxu0 %v1677
    %2115 = vmatprep.subr.bf16.mxu0 %v1686
    %2116 = vmatpush1.bf16.msra.mxu0 %v1685
    %2117 = vmatprep.subr.bf16.mxu0 %v1694
    %2118 = vmatpush1.bf16.msra.mxu0 %v1693
    %2119 = vmatprep.subr.bf16.mxu0 %v1702
    %2120 = vmatpush1.bf16.msra.mxu0 %v1701
    %2121 = vmatprep.subr.bf16.mxu0 %v1710
    %2122 = vmatpush1.bf16.msra.mxu0 %v1709
    %2123 = vmatprep.subr.bf16.mxu0 %v1718
    %2124 = vmatpush1.bf16.msra.mxu0 %v1717
    %2125 = vmatprep.mubr.bf16.mxu0 %v1551
    %2126 = vmatmul.mubr.bf16.gmra.mrb[0].mxu0 %v1550
    %v2127 = vpop.f32.mrb[0].mxu0
    %v2128 = vadd.f32 %v1964, %v2127
    %v2129 = vpop.f32.mrb[0].mxu0
    %v2130 = vadd.f32 %v1966, %v2129
    %v2131 = vpop.f32.mrb[0].mxu0
    %v2132 = vpop.f32.mrb[0].mxu0
    %2133 = vdwg.mxu0
    %2134 = vmatprep.subr.bf16.mxu0 %v1600
    %2135 = vmatpush1.bf16.msra.mxu0 %v1599
    %2136 = vmatprep.subr.bf16.mxu0 %v1608
    %2137 = vmatpush1.bf16.msra.mxu0 %v1607
    %2138 = vmatprep.subr.bf16.mxu0 %v1616
    %2139 = vmatpush1.bf16.msra.mxu0 %v1615
    %2140 = vmatprep.subr.bf16.mxu0 %v1624
    %2141 = vmatpush1.bf16.msra.mxu0 %v1623
    %2142 = vmatprep.subr.bf16.mxu0 %v1632
    %2143 = vmatpush1.bf16.msra.mxu0 %v1631
    %2144 = vmatprep.subr.bf16.mxu0 %v1640
    %2145 = vmatpush1.bf16.msra.mxu0 %v1639
    %2146 = vmatprep.subr.bf16.mxu0 %v1648
    %2147 = vmatpush1.bf16.msra.mxu0 %v1647
    %2148 = vmatprep.subr.bf16.mxu0 %v1656
    %2149 = vmatpush1.bf16.msra.mxu0 %v1655
    %2150 = vmatprep.subr.bf16.mxu0 %v1664
    %2151 = vmatpush1.bf16.msra.mxu0 %v1663
    %2152 = vmatprep.subr.bf16.mxu0 %v1672
    %2153 = vmatpush1.bf16.msra.mxu0 %v1671
    %2154 = vmatprep.subr.bf16.mxu0 %v1680
    %2155 = vmatpush1.bf16.msra.mxu0 %v1679
    %2156 = vmatprep.subr.bf16.mxu0 %v1688
    %2157 = vmatpush1.bf16.msra.mxu0 %v1687
    %2158 = vmatprep.subr.bf16.mxu0 %v1696
    %2159 = vmatpush1.bf16.msra.mxu0 %v1695
    %2160 = vmatprep.subr.bf16.mxu0 %v1704
    %2161 = vmatpush1.bf16.msra.mxu0 %v1703
    %2162 = vmatprep.subr.bf16.mxu0 %v1712
    %2163 = vmatpush1.bf16.msra.mxu0 %v1711
    %2164 = vmatprep.subr.bf16.mxu0 %v1720
    %2165 = vmatpush1.bf16.msra.mxu0 %v1719
    %2166 = vmatprep.mubr.bf16.mxu0 %v1551
    %2167 = vmatmul.mubr.bf16.gmra.mrb[0].mxu0 %v1550
    %v2168 = vpop.f32.mrb[0].mxu0
    %v2169 = vadd.f32 %v2005, %v2168
    %v2170 = vpop.f32.mrb[0].mxu0
    %v2171 = vadd.f32 %v2007, %v2170
    %v2172 = vpop.f32.mrb[0].mxu0
    %v2173 = vpop.f32.mrb[0].mxu0
    %2174 = vdwg.mxu0
    %2175 = vmatprep.subr.bf16.mxu0 %v1602
    %2176 = vmatpush1.bf16.msra.mxu0 %v1601
    %2177 = vmatprep.subr.bf16.mxu0 %v1610
    %2178 = vmatpush1.bf16.msra.mxu0 %v1609
    %2179 = vmatprep.subr.bf16.mxu0 %v1618
    %2180 = vmatpush1.bf16.msra.mxu0 %v1617
    %2181 = vmatprep.subr.bf16.mxu0 %v1626
    %2182 = vmatpush1.bf16.msra.mxu0 %v1625
    %2183 = vmatprep.subr.bf16.mxu0 %v1634
    %2184 = vmatpush1.bf16.msra.mxu0 %v1633
    %2185 = vmatprep.subr.bf16.mxu0 %v1642
    %2186 = vmatpush1.bf16.msra.mxu0 %v1641
    %2187 = vmatprep.subr.bf16.mxu0 %v1650
    %2188 = vmatpush1.bf16.msra.mxu0 %v1649
    %2189 = vmatprep.subr.bf16.mxu0 %v1658
    %2190 = vmatpush1.bf16.msra.mxu0 %v1657
    %2191 = vmatprep.subr.bf16.mxu0 %v1666
    %2192 = vmatpush1.bf16.msra.mxu0 %v1665
    %2193 = vmatprep.subr.bf16.mxu0 %v1674
    %2194 = vmatpush1.bf16.msra.mxu0 %v1673
    %2195 = vmatprep.subr.bf16.mxu0 %v1682
    %2196 = vmatpush1.bf16.msra.mxu0 %v1681
    %2197 = vmatprep.subr.bf16.mxu0 %v1690
    %2198 = vmatpush1.bf16.msra.mxu0 %v1689
    %2199 = vmatprep.subr.bf16.mxu0 %v1698
    %2200 = vmatpush1.bf16.msra.mxu0 %v1697
    %2201 = vmatprep.subr.bf16.mxu0 %v1706
    %2202 = vmatpush1.bf16.msra.mxu0 %v1705
    %2203 = vmatprep.subr.bf16.mxu0 %v1714
    %2204 = vmatpush1.bf16.msra.mxu0 %v1713
    %2205 = vmatprep.subr.bf16.mxu0 %v1722
    %2206 = vmatpush1.bf16.msra.mxu0 %v1721
    %2207 = vmatprep.mubr.bf16.mxu0 %v1551
    %2208 = vmatmul.mubr.bf16.gmra.mrb[0].mxu0 %v1550
    %v2209 = vpop.f32.mrb[0].mxu0
    %v2210 = vadd.f32 %v2046, %v2209
    %v2211 = vpop.f32.mrb[0].mxu0
    %v2212 = vadd.f32 %v2048, %v2211
    %v2213 = vpop.f32.mrb[0].mxu0
    %v2214 = vpop.f32.mrb[0].mxu0
    %2215 = vdwg.mxu0
    %s2216 = sshll.u32 %s158, 4
    %2217 = dma.done [#allocation3], %s2216
    %s2219 = sshll.u32 1, 14
    %s2220 = sxor.u32 4294967295, %s2219
    %s2222 = sadd.s32 2, %s73
    %s2224 = sshll.u32 7, 26
    %s2225 = sxor.u32 4294967295, %s2224
    %s2226 = sand.u32 0, %s2225
    %s2227 = sshll.u32 %s2222, 26
    %s2228 = sor.u32 %s2226, %s2227
    %s2229 = sshll.u32 %s162, 4
    %s2230 = int_to_ptr.vmem [resolvable:$true] %s2229
    %2233 = sst [smem:[#allocation30]] 1152
    %s2234 = scalar_lea.smem [#allocation30], 1
    %2235 = sst [smem:[%s2234]] 1152
    %s2236 = scalar_lea.smem [#allocation30], 2
    %2237 = sst [smem:[%s2236]] 9
    %s2238 = scalar_lea.smem [#allocation30], 3
    %2239 = sst [smem:[%s2238]] 64
    %s2240 = scalar_lea.smem [#allocation30], 4
    %2241 = sst [smem:[%s2240]] 128
    %s2242 = scalar_lea.smem [#allocation30], 5
    %2243 = sst [smem:[%s2242]] 2
    %s2244 = scalar_lea.smem [#allocation30], 6
    %2245 = sst [smem:[%s2244]] 576
    %s2246 = scalar_lea.smem [#allocation30], 7
    %2247 = sst [smem:[%s2246]] 64
    %s2248 = scalar_lea.smem [#allocation30], 8
    %2249 = sst [smem:[%s2248]] 4
    %2251 = dma.general %s6, 18432, %s2230, %s163, [#allocation29], [#allocation30], %s2228, 0
    %v2252 = vld [vmem:[#allocation2] sm:$0xff]
    %v2253 = vld [vmem:[#allocation2 + $0x8] sm:$0xff]
    %v2254 = vld [vmem:[#allocation2 + $0x10] sm:$0xff]
    %v2255 = vld [vmem:[#allocation2 + $0x18] sm:$0xff]
    %v2256 = vld [vmem:[#allocation2 + $0x20] sm:$0xff]
    %v2257 = vld [vmem:[#allocation2 + $0x28] sm:$0xff]
    %v2258 = vld [vmem:[#allocation2 + $0x30] sm:$0xff]
    %v2259 = vld [vmem:[#allocation2 + $0x38] sm:$0xff]
    %v2260 = vld [vmem:[#allocation2 + $0x48] sm:$0xff]
    %v2261 = vld [vmem:[#allocation2 + $0x50] sm:$0xff]
    %v2262 = vld [vmem:[#allocation2 + $0x58] sm:$0xff]
    %v2263 = vld [vmem:[#allocation2 + $0x60] sm:$0xff]
    %v2264 = vld [vmem:[#allocation2 + $0x68] sm:$0xff]
    %v2265 = vld [vmem:[#allocation2 + $0x70] sm:$0xff]
    %v2266 = vld [vmem:[#allocation2 + $0x78] sm:$0xff]
    %v2267 = vld [vmem:[#allocation2 + $0x80] sm:$0xff]
    %v2268 = vld [vmem:[#allocation2 + $0x90] sm:$0xff]
    %v2269 = vld [vmem:[#allocation2 + $0x98] sm:$0xff]
    %v2270 = vld [vmem:[#allocation2 + $0xa0] sm:$0xff]
    %v2271 = vld [vmem:[#allocation2 + $0xa8] sm:$0xff]
    %v2272 = vld [vmem:[#allocation2 + $0xb0] sm:$0xff]
    %v2273 = vld [vmem:[#allocation2 + $0xb8] sm:$0xff]
    %v2274 = vld [vmem:[#allocation2 + $0xc0] sm:$0xff]
    %v2275 = vld [vmem:[#allocation2 + $0xc8] sm:$0xff]
    %v2276 = vld [vmem:[#allocation2 + $0xd8] sm:$0xff]
    %v2277 = vld [vmem:[#allocation2 + $0xe0] sm:$0xff]
    %v2278 = vld [vmem:[#allocation2 + $0xe8] sm:$0xff]
    %v2279 = vld [vmem:[#allocation2 + $0xf0] sm:$0xff]
    %v2280 = vld [vmem:[#allocation2 + $0xf8] sm:$0xff]
    %v2281 = vld [vmem:[#allocation2 + $0x100] sm:$0xff]
    %v2282 = vld [vmem:[#allocation2 + $0x108] sm:$0xff]
    %v2283 = vld [vmem:[#allocation2 + $0x110] sm:$0xff]
    %v2284 = vld [vmem:[#allocation2 + $0x120] sm:$0xff]
    %v2285 = vld [vmem:[#allocation2 + $0x128] sm:$0xff]
    %v2286 = vld [vmem:[#allocation2 + $0x130] sm:$0xff]
    %v2287 = vld [vmem:[#allocation2 + $0x138] sm:$0xff]
    %v2288 = vld [vmem:[#allocation2 + $0x140] sm:$0xff]
    %v2289 = vld [vmem:[#allocation2 + $0x148] sm:$0xff]
    %v2290 = vld [vmem:[#allocation2 + $0x150] sm:$0xff]
    %v2291 = vld [vmem:[#allocation2 + $0x158] sm:$0xff]
    %v2292 = vld [vmem:[#allocation2 + $0x168] sm:$0xff]
    %v2293 = vld [vmem:[#allocation2 + $0x170] sm:$0xff]
    %v2294 = vld [vmem:[#allocation2 + $0x178] sm:$0xff]
    %v2295 = vld [vmem:[#allocation2 + $0x180] sm:$0xff]
    %v2296 = vld [vmem:[#allocation2 + $0x188] sm:$0xff]
    %v2297 = vld [vmem:[#allocation2 + $0x190] sm:$0xff]
    %v2298 = vld [vmem:[#allocation2 + $0x198] sm:$0xff]
    %v2299 = vld [vmem:[#allocation2 + $0x1a0] sm:$0xff]
    %v2300 = vld [vmem:[#allocation2 + $0x1b0] sm:$0xff]
    %v2301 = vld [vmem:[#allocation2 + $0x1b8] sm:$0xff]
    %v2302 = vld [vmem:[#allocation2 + $0x1c0] sm:$0xff]
    %v2303 = vld [vmem:[#allocation2 + $0x1c8] sm:$0xff]
    %v2304 = vld [vmem:[#allocation2 + $0x1d0] sm:$0xff]
    %v2305 = vld [vmem:[#allocation2 + $0x1d8] sm:$0xff]
    %v2306 = vld [vmem:[#allocation2 + $0x1e0] sm:$0xff]
    %v2307 = vld [vmem:[#allocation2 + $0x1e8] sm:$0xff]
    %v2308 = vld [vmem:[#allocation2 + $0x1f8] sm:$0xff]
    %v2309 = vld [vmem:[#allocation2 + $0x200] sm:$0xff]
    %v2310 = vld [vmem:[#allocation2 + $0x208] sm:$0xff]
    %v2311 = vld [vmem:[#allocation2 + $0x210] sm:$0xff]
    %v2312 = vld [vmem:[#allocation2 + $0x218] sm:$0xff]
    %v2313 = vld [vmem:[#allocation2 + $0x220] sm:$0xff]
    %v2314 = vld [vmem:[#allocation2 + $0x228] sm:$0xff]
    %v2315 = vld [vmem:[#allocation2 + $0x230] sm:$0xff]
    %v2316 = vld [vmem:[#allocation2 + $0x240] sm:$0xff]
    %v2317 = vld [vmem:[#allocation2 + $0x248] sm:$0xff]
    %v2318 = vld [vmem:[#allocation2 + $0x250] sm:$0xff]
    %v2319 = vld [vmem:[#allocation2 + $0x258] sm:$0xff]
    %v2320 = vld [vmem:[#allocation2 + $0x260] sm:$0xff]
    %v2321 = vld [vmem:[#allocation2 + $0x268] sm:$0xff]
    %v2322 = vld [vmem:[#allocation2 + $0x270] sm:$0xff]
    %v2323 = vld [vmem:[#allocation2 + $0x278] sm:$0xff]
    %v2324 = vld [vmem:[#allocation2 + $0x288] sm:$0xff]
    %v2325 = vld [vmem:[#allocation2 + $0x290] sm:$0xff]
    %v2326 = vld [vmem:[#allocation2 + $0x298] sm:$0xff]
    %v2327 = vld [vmem:[#allocation2 + $0x2a0] sm:$0xff]
    %v2328 = vld [vmem:[#allocation2 + $0x2a8] sm:$0xff]
    %v2329 = vld [vmem:[#allocation2 + $0x2b0] sm:$0xff]
    %v2330 = vld [vmem:[#allocation2 + $0x2b8] sm:$0xff]
    %v2331 = vld [vmem:[#allocation2 + $0x2c0] sm:$0xff]
    %v2332 = vld [vmem:[#allocation2 + $0x2d0] sm:$0xff]
    %v2333 = vld [vmem:[#allocation2 + $0x2d8] sm:$0xff]
    %v2334 = vld [vmem:[#allocation2 + $0x2e0] sm:$0xff]
    %v2335 = vld [vmem:[#allocation2 + $0x2e8] sm:$0xff]
    %v2336 = vld [vmem:[#allocation2 + $0x2f0] sm:$0xff]
    %v2337 = vld [vmem:[#allocation2 + $0x2f8] sm:$0xff]
    %v2338 = vld [vmem:[#allocation2 + $0x300] sm:$0xff]
    %v2339 = vld [vmem:[#allocation2 + $0x308] sm:$0xff]
    %v2340 = vld [vmem:[#allocation2 + $0x318] sm:$0xff]
    %v2341 = vld [vmem:[#allocation2 + $0x320] sm:$0xff]
    %v2342 = vld [vmem:[#allocation2 + $0x328] sm:$0xff]
    %v2343 = vld [vmem:[#allocation2 + $0x330] sm:$0xff]
    %v2344 = vld [vmem:[#allocation2 + $0x338] sm:$0xff]
    %v2345 = vld [vmem:[#allocation2 + $0x340] sm:$0xff]
    %v2346 = vld [vmem:[#allocation2 + $0x348] sm:$0xff]
    %v2347 = vld [vmem:[#allocation2 + $0x350] sm:$0xff]
    %v2348 = vld [vmem:[#allocation2 + $0x360] sm:$0xff]
    %v2349 = vld [vmem:[#allocation2 + $0x368] sm:$0xff]
    %v2350 = vld [vmem:[#allocation2 + $0x370] sm:$0xff]
    %v2351 = vld [vmem:[#allocation2 + $0x378] sm:$0xff]
    %v2352 = vld [vmem:[#allocation2 + $0x380] sm:$0xff]
    %v2353 = vld [vmem:[#allocation2 + $0x388] sm:$0xff]
    %v2354 = vld [vmem:[#allocation2 + $0x390] sm:$0xff]
    %v2355 = vld [vmem:[#allocation2 + $0x398] sm:$0xff]
    %v2356 = vld [vmem:[#allocation2 + $0x3a8] sm:$0xff]
    %v2357 = vld [vmem:[#allocation2 + $0x3b0] sm:$0xff]
    %v2358 = vld [vmem:[#allocation2 + $0x3b8] sm:$0xff]
    %v2359 = vld [vmem:[#allocation2 + $0x3c0] sm:$0xff]
    %v2360 = vld [vmem:[#allocation2 + $0x3c8] sm:$0xff]
    %v2361 = vld [vmem:[#allocation2 + $0x3d0] sm:$0xff]
    %v2362 = vld [vmem:[#allocation2 + $0x3d8] sm:$0xff]
    %v2363 = vld [vmem:[#allocation2 + $0x3e0] sm:$0xff]
    %v2364 = vld [vmem:[#allocation2 + $0x3f0] sm:$0xff]
    %v2365 = vld [vmem:[#allocation2 + $0x3f8] sm:$0xff]
    %v2366 = vld [vmem:[#allocation2 + $0x400] sm:$0xff]
    %v2367 = vld [vmem:[#allocation2 + $0x408] sm:$0xff]
    %v2368 = vld [vmem:[#allocation2 + $0x410] sm:$0xff]
    %v2369 = vld [vmem:[#allocation2 + $0x418] sm:$0xff]
    %v2370 = vld [vmem:[#allocation2 + $0x420] sm:$0xff]
    %v2371 = vld [vmem:[#allocation2 + $0x428] sm:$0xff]
    %v2372 = vld [vmem:[#allocation2 + $0x438] sm:$0xff]
    %v2373 = vld [vmem:[#allocation2 + $0x440] sm:$0xff]
    %v2374 = vld [vmem:[#allocation2 + $0x448] sm:$0xff]
    %v2375 = vld [vmem:[#allocation2 + $0x450] sm:$0xff]
    %v2376 = vld [vmem:[#allocation2 + $0x458] sm:$0xff]
    %v2377 = vld [vmem:[#allocation2 + $0x460] sm:$0xff]
    %v2378 = vld [vmem:[#allocation2 + $0x468] sm:$0xff]
    %v2379 = vld [vmem:[#allocation2 + $0x470] sm:$0xff]
    %2380 = vmatprep.subr.bf16.mxu0 %v2253
    %2381 = vmatpush1.bf16.msra.mxu0 %v2252
    %2382 = vmatprep.subr.bf16.mxu0 %v2261
    %2383 = vmatpush1.bf16.msra.mxu0 %v2260
    %2384 = vmatprep.subr.bf16.mxu0 %v2269
    %2385 = vmatpush1.bf16.msra.mxu0 %v2268
    %2386 = vmatprep.subr.bf16.mxu0 %v2277
    %2387 = vmatpush1.bf16.msra.mxu0 %v2276
    %2388 = vmatprep.subr.bf16.mxu0 %v2285
    %2389 = vmatpush1.bf16.msra.mxu0 %v2284
    %2390 = vmatprep.subr.bf16.mxu0 %v2293
    %2391 = vmatpush1.bf16.msra.mxu0 %v2292
    %2392 = vmatprep.subr.bf16.mxu0 %v2301
    %2393 = vmatpush1.bf16.msra.mxu0 %v2300
    %2394 = vmatprep.subr.bf16.mxu0 %v2309
    %2395 = vmatpush1.bf16.msra.mxu0 %v2308
    %2396 = vmatprep.subr.bf16.mxu0 %v2317
    %2397 = vmatpush1.bf16.msra.mxu0 %v2316
    %2398 = vmatprep.subr.bf16.mxu0 %v2325
    %2399 = vmatpush1.bf16.msra.mxu0 %v2324
    %2400 = vmatprep.subr.bf16.mxu0 %v2333
    %2401 = vmatpush1.bf16.msra.mxu0 %v2332
    %2402 = vmatprep.subr.bf16.mxu0 %v2341
    %2403 = vmatpush1.bf16.msra.mxu0 %v2340
    %2404 = vmatprep.subr.bf16.mxu0 %v2349
    %2405 = vmatpush1.bf16.msra.mxu0 %v2348
    %2406 = vmatprep.subr.bf16.mxu0 %v2357
    %2407 = vmatpush1.bf16.msra.mxu0 %v2356
    %2408 = vmatprep.subr.bf16.mxu0 %v2365
    %2409 = vmatpush1.bf16.msra.mxu0 %v2364
    %2410 = vmatprep.subr.bf16.mxu0 %v2373
    %2411 = vmatpush1.bf16.msra.mxu0 %v2372
    %2412 = vmatprep.mubr.bf16.mxu0 %v1555
    %2413 = vmatmul.mubr.bf16.gmra.mrb[0].mxu0 %v1554
    %v2414 = vpop.f32.mrb[0].mxu0
    %v2415 = vadd.f32 0.0, %v2414
    %v2416 = vpop.f32.mrb[0].mxu0
    %v2417 = vadd.f32 0.0, %v2416
    %v2418 = vpop.f32.mrb[0].mxu0
    %v2419 = vpop.f32.mrb[0].mxu0
    %2420 = vdwg.mxu0
    %2421 = vmatprep.subr.bf16.mxu0 %v2255
    %2422 = vmatpush1.bf16.msra.mxu0 %v2254
    %2423 = vmatprep.subr.bf16.mxu0 %v2263
    %2424 = vmatpush1.bf16.msra.mxu0 %v2262
    %2425 = vmatprep.subr.bf16.mxu0 %v2271
    %2426 = vmatpush1.bf16.msra.mxu0 %v2270
    %2427 = vmatprep.subr.bf16.mxu0 %v2279
    %2428 = vmatpush1.bf16.msra.mxu0 %v2278
    %2429 = vmatprep.subr.bf16.mxu0 %v2287
    %2430 = vmatpush1.bf16.msra.mxu0 %v2286
    %2431 = vmatprep.subr.bf16.mxu0 %v2295
    %2432 = vmatpush1.bf16.msra.mxu0 %v2294
    %2433 = vmatprep.subr.bf16.mxu0 %v2303
    %2434 = vmatpush1.bf16.msra.mxu0 %v2302
    %2435 = vmatprep.subr.bf16.mxu0 %v2311
    %2436 = vmatpush1.bf16.msra.mxu0 %v2310
    %2437 = vmatprep.subr.bf16.mxu0 %v2319
    %2438 = vmatpush1.bf16.msra.mxu0 %v2318
    %2439 = vmatprep.subr.bf16.mxu0 %v2327
    %2440 = vmatpush1.bf16.msra.mxu0 %v2326
    %2441 = vmatprep.subr.bf16.mxu0 %v2335
    %2442 = vmatpush1.bf16.msra.mxu0 %v2334
    %2443 = vmatprep.subr.bf16.mxu0 %v2343
    %2444 = vmatpush1.bf16.msra.mxu0 %v2342
    %2445 = vmatprep.subr.bf16.mxu0 %v2351
    %2446 = vmatpush1.bf16.msra.mxu0 %v2350
    %2447 = vmatprep.subr.bf16.mxu0 %v2359
    %2448 = vmatpush1.bf16.msra.mxu0 %v2358
    %2449 = vmatprep.subr.bf16.mxu0 %v2367
    %2450 = vmatpush1.bf16.msra.mxu0 %v2366
    %2451 = vmatprep.subr.bf16.mxu0 %v2375
    %2452 = vmatpush1.bf16.msra.mxu0 %v2374
    %2453 = vmatprep.mubr.bf16.mxu0 %v1555
    %2454 = vmatmul.mubr.bf16.gmra.mrb[0].mxu0 %v1554
    %v2455 = vpop.f32.mrb[0].mxu0
    %v2456 = vadd.f32 0.0, %v2455
    %v2457 = vpop.f32.mrb[0].mxu0
    %v2458 = vadd.f32 0.0, %v2457
    %v2459 = vpop.f32.mrb[0].mxu0
    %v2460 = vpop.f32.mrb[0].mxu0
    %2461 = vdwg.mxu0
    %2462 = vmatprep.subr.bf16.mxu0 %v2257
    %2463 = vmatpush1.bf16.msra.mxu0 %v2256
    %2464 = vmatprep.subr.bf16.mxu0 %v2265
    %2465 = vmatpush1.bf16.msra.mxu0 %v2264
    %2466 = vmatprep.subr.bf16.mxu0 %v2273
    %2467 = vmatpush1.bf16.msra.mxu0 %v2272
    %2468 = vmatprep.subr.bf16.mxu0 %v2281
    %2469 = vmatpush1.bf16.msra.mxu0 %v2280
    %2470 = vmatprep.subr.bf16.mxu0 %v2289
    %2471 = vmatpush1.bf16.msra.mxu0 %v2288
    %2472 = vmatprep.subr.bf16.mxu0 %v2297
    %2473 = vmatpush1.bf16.msra.mxu0 %v2296
    %2474 = vmatprep.subr.bf16.mxu0 %v2305
    %2475 = vmatpush1.bf16.msra.mxu0 %v2304
    %2476 = vmatprep.subr.bf16.mxu0 %v2313
    %2477 = vmatpush1.bf16.msra.mxu0 %v2312
    %2478 = vmatprep.subr.bf16.mxu0 %v2321
    %2479 = vmatpush1.bf16.msra.mxu0 %v2320
    %2480 = vmatprep.subr.bf16.mxu0 %v2329
    %2481 = vmatpush1.bf16.msra.mxu0 %v2328
    %2482 = vmatprep.subr.bf16.mxu0 %v2337
    %2483 = vmatpush1.bf16.msra.mxu0 %v2336
    %2484 = vmatprep.subr.bf16.mxu0 %v2345
    %2485 = vmatpush1.bf16.msra.mxu0 %v2344
    %2486 = vmatprep.subr.bf16.mxu0 %v2353
    %2487 = vmatpush1.bf16.msra.mxu0 %v2352
    %2488 = vmatprep.subr.bf16.mxu0 %v2361
    %2489 = vmatpush1.bf16.msra.mxu0 %v2360
    %2490 = vmatprep.subr.bf16.mxu0 %v2369
    %2491 = vmatpush1.bf16.msra.mxu0 %v2368
    %2492 = vmatprep.subr.bf16.mxu0 %v2377
    %2493 = vmatpush1.bf16.msra.mxu0 %v2376
    %2494 = vmatprep.mubr.bf16.mxu0 %v1555
    %2495 = vmatmul.mubr.bf16.gmra.mrb[0].mxu0 %v1554
    %v2496 = vpop.f32.mrb[0].mxu0
    %v2497 = vadd.f32 0.0, %v2496
    %v2498 = vpop.f32.mrb[0].mxu0
    %v2499 = vadd.f32 0.0, %v2498
    %v2500 = vpop.f32.mrb[0].mxu0
    %v2501 = vpop.f32.mrb[0].mxu0
    %2502 = vdwg.mxu0
    %2503 = vmatprep.subr.bf16.mxu0 %v2259
    %2504 = vmatpush1.bf16.msra.mxu0 %v2258
    %2505 = vmatprep.subr.bf16.mxu0 %v2267
    %2506 = vmatpush1.bf16.msra.mxu0 %v2266
    %2507 = vmatprep.subr.bf16.mxu0 %v2275
    %2508 = vmatpush1.bf16.msra.mxu0 %v2274
    %2509 = vmatprep.subr.bf16.mxu0 %v2283
    %2510 = vmatpush1.bf16.msra.mxu0 %v2282
    %2511 = vmatprep.subr.bf16.mxu0 %v2291
    %2512 = vmatpush1.bf16.msra.mxu0 %v2290
    %2513 = vmatprep.subr.bf16.mxu0 %v2299
    %2514 = vmatpush1.bf16.msra.mxu0 %v2298
    %2515 = vmatprep.subr.bf16.mxu0 %v2307
    %2516 = vmatpush1.bf16.msra.mxu0 %v2306
    %2517 = vmatprep.subr.bf16.mxu0 %v2315
    %2518 = vmatpush1.bf16.msra.mxu0 %v2314
    %2519 = vmatprep.subr.bf16.mxu0 %v2323
    %2520 = vmatpush1.bf16.msra.mxu0 %v2322
    %2521 = vmatprep.subr.bf16.mxu0 %v2331
    %2522 = vmatpush1.bf16.msra.mxu0 %v2330
    %2523 = vmatprep.subr.bf16.mxu0 %v2339
    %2524 = vmatpush1.bf16.msra.mxu0 %v2338
    %2525 = vmatprep.subr.bf16.mxu0 %v2347
    %2526 = vmatpush1.bf16.msra.mxu0 %v2346
    %2527 = vmatprep.subr.bf16.mxu0 %v2355
    %2528 = vmatpush1.bf16.msra.mxu0 %v2354
    %2529 = vmatprep.subr.bf16.mxu0 %v2363
    %2530 = vmatpush1.bf16.msra.mxu0 %v2362
    %2531 = vmatprep.subr.bf16.mxu0 %v2371
    %2532 = vmatpush1.bf16.msra.mxu0 %v2370
    %2533 = vmatprep.subr.bf16.mxu0 %v2379
    %2534 = vmatpush1.bf16.msra.mxu0 %v2378
    %2535 = vmatprep.mubr.bf16.mxu0 %v1555
    %2536 = vmatmul.mubr.bf16.gmra.mrb[0].mxu0 %v1554
    %v2537 = vpop.f32.mrb[0].mxu0
    %v2538 = vadd.f32 0.0, %v2537
    %v2539 = vpop.f32.mrb[0].mxu0
    %v2540 = vadd.f32 0.0, %v2539
    %v2541 = vpop.f32.mrb[0].mxu0
    %v2542 = vpop.f32.mrb[0].mxu0
    %2543 = vdwg.mxu0
    %v2544 = vadd.f32 %v2087, %v2415
    %v2545 = vadd.f32 %v2089, %v2417
    %v2546 = vadd.f32 %v2128, %v2456
    %v2547 = vadd.f32 %v2130, %v2458
    %v2548 = vadd.f32 %v2169, %v2497
    %v2549 = vadd.f32 %v2171, %v2499
    %v2550 = vadd.f32 %v2210, %v2538
    %v2551 = vadd.f32 %v2212, %v2540
    %s2552 = sshll.u32 %s158, 4
    %2553 = dma.done %s106, %s2552
    %s2554 = scalar_lea.hbm %s6, 18432
    %s2556 = sshll.u32 1, 14
    %s2557 = sxor.u32 4294967295, %s2556
    %s2559 = sadd.s32 2, %s73
    %s2561 = sshll.u32 7, 26
    %s2562 = sxor.u32 4294967295, %s2561
    %s2563 = sand.u32 0, %s2562
    %s2564 = sshll.u32 %s2559, 26
    %s2565 = sor.u32 %s2563, %s2564
    %s2566 = sshll.u32 [#allocation2], 4
    %s2567 = int_to_ptr.vmem [resolvable:$true] %s2566
    %2570 = sst [smem:[#allocation32]] 1152
    %s2571 = scalar_lea.smem [#allocation32], 1
    %2572 = sst [smem:[%s2571]] 1152
    %s2573 = scalar_lea.smem [#allocation32], 2
    %2574 = sst [smem:[%s2573]] 9
    %s2575 = scalar_lea.smem [#allocation32], 3
    %2576 = sst [smem:[%s2575]] 64
    %s2577 = scalar_lea.smem [#allocation32], 4
    %2578 = sst [smem:[%s2577]] 128
    %s2579 = scalar_lea.smem [#allocation32], 5
    %2580 = sst [smem:[%s2579]] 2
    %s2581 = scalar_lea.smem [#allocation32], 6
    %2582 = sst [smem:[%s2581]] 576
    %s2583 = scalar_lea.smem [#allocation32], 7
    %2584 = sst [smem:[%s2583]] 64
    %s2585 = scalar_lea.smem [#allocation32], 8
    %2586 = sst [smem:[%s2585]] 4
    %2588 = dma.general %s2554, 18432, %s2567, [#allocation3], [#allocation31], [#allocation32], %s2565, 0
    %v2589 = vld [vmem:[%s105] sm:$0xff]
    %v2590 = vld [vmem:[%s105 + $0x8] sm:$0xff]
    %v2591 = vld [vmem:[%s105 + $0x10] sm:$0xff]
    %v2592 = vld [vmem:[%s105 + $0x18] sm:$0xff]
    %v2593 = vld [vmem:[%s105 + $0x20] sm:$0xff]
    %v2594 = vld [vmem:[%s105 + $0x28] sm:$0xff]
    %v2595 = vld [vmem:[%s105 + $0x30] sm:$0xff]
    %v2596 = vld [vmem:[%s105 + $0x38] sm:$0xff]
    %v2597 = vld [vmem:[%s105 + $0x48] sm:$0xff]
    %v2598 = vld [vmem:[%s105 + $0x50] sm:$0xff]
    %v2599 = vld [vmem:[%s105 + $0x58] sm:$0xff]
    %v2600 = vld [vmem:[%s105 + $0x60] sm:$0xff]
    %v2601 = vld [vmem:[%s105 + $0x68] sm:$0xff]
    %v2602 = vld [vmem:[%s105 + $0x70] sm:$0xff]
    %v2603 = vld [vmem:[%s105 + $0x78] sm:$0xff]
    %v2604 = vld [vmem:[%s105 + $0x80] sm:$0xff]
    %v2605 = vld [vmem:[%s105 + $0x90] sm:$0xff]
    %v2606 = vld [vmem:[%s105 + $0x98] sm:$0xff]
    %v2607 = vld [vmem:[%s105 + $0xa0] sm:$0xff]
    %v2608 = vld [vmem:[%s105 + $0xa8] sm:$0xff]
    %v2609 = vld [vmem:[%s105 + $0xb0] sm:$0xff]
    %v2610 = vld [vmem:[%s105 + $0xb8] sm:$0xff]
    %v2611 = vld [vmem:[%s105 + $0xc0] sm:$0xff]
    %v2612 = vld [vmem:[%s105 + $0xc8] sm:$0xff]
    %v2613 = vld [vmem:[%s105 + $0xd8] sm:$0xff]
    %v2614 = vld [vmem:[%s105 + $0xe0] sm:$0xff]
    %v2615 = vld [vmem:[%s105 + $0xe8] sm:$0xff]
    %v2616 = vld [vmem:[%s105 + $0xf0] sm:$0xff]
    %v2617 = vld [vmem:[%s105 + $0xf8] sm:$0xff]
    %v2618 = vld [vmem:[%s105 + $0x100] sm:$0xff]
    %v2619 = vld [vmem:[%s105 + $0x108] sm:$0xff]
    %v2620 = vld [vmem:[%s105 + $0x110] sm:$0xff]
    %v2621 = vld [vmem:[%s105 + $0x120] sm:$0xff]
    %v2622 = vld [vmem:[%s105 + $0x128] sm:$0xff]
    %v2623 = vld [vmem:[%s105 + $0x130] sm:$0xff]
    %v2624 = vld [vmem:[%s105 + $0x138] sm:$0xff]
    %v2625 = vld [vmem:[%s105 + $0x140] sm:$0xff]
    %v2626 = vld [vmem:[%s105 + $0x148] sm:$0xff]
    %v2627 = vld [vmem:[%s105 + $0x150] sm:$0xff]
    %v2628 = vld [vmem:[%s105 + $0x158] sm:$0xff]
    %v2629 = vld [vmem:[%s105 + $0x168] sm:$0xff]
    %v2630 = vld [vmem:[%s105 + $0x170] sm:$0xff]
    %v2631 = vld [vmem:[%s105 + $0x178] sm:$0xff]
    %v2632 = vld [vmem:[%s105 + $0x180] sm:$0xff]
    %v2633 = vld [vmem:[%s105 + $0x188] sm:$0xff]
    %v2634 = vld [vmem:[%s105 + $0x190] sm:$0xff]
    %v2635 = vld [vmem:[%s105 + $0x198] sm:$0xff]
    %v2636 = vld [vmem:[%s105 + $0x1a0] sm:$0xff]
    %v2637 = vld [vmem:[%s105 + $0x1b0] sm:$0xff]
    %v2638 = vld [vmem:[%s105 + $0x1b8] sm:$0xff]
    %v2639 = vld [vmem:[%s105 + $0x1c0] sm:$0xff]
    %v2640 = vld [vmem:[%s105 + $0x1c8] sm:$0xff]
    %v2641 = vld [vmem:[%s105 + $0x1d0] sm:$0xff]
    %v2642 = vld [vmem:[%s105 + $0x1d8] sm:$0xff]
    %v2643 = vld [vmem:[%s105 + $0x1e0] sm:$0xff]
    %v2644 = vld [vmem:[%s105 + $0x1e8] sm:$0xff]
    %v2645 = vld [vmem:[%s105 + $0x1f8] sm:$0xff]
    %v2646 = vld [vmem:[%s105 + $0x200] sm:$0xff]
    %v2647 = vld [vmem:[%s105 + $0x208] sm:$0xff]
    %v2648 = vld [vmem:[%s105 + $0x210] sm:$0xff]
    %v2649 = vld [vmem:[%s105 + $0x218] sm:$0xff]
    %v2650 = vld [vmem:[%s105 + $0x220] sm:$0xff]
    %v2651 = vld [vmem:[%s105 + $0x228] sm:$0xff]
    %v2652 = vld [vmem:[%s105 + $0x230] sm:$0xff]
    %v2653 = vld [vmem:[%s105 + $0x240] sm:$0xff]
    %v2654 = vld [vmem:[%s105 + $0x248] sm:$0xff]
    %v2655 = vld [vmem:[%s105 + $0x250] sm:$0xff]
    %v2656 = vld [vmem:[%s105 + $0x258] sm:$0xff]
    %v2657 = vld [vmem:[%s105 + $0x260] sm:$0xff]
    %v2658 = vld [vmem:[%s105 + $0x268] sm:$0xff]
    %v2659 = vld [vmem:[%s105 + $0x270] sm:$0xff]
    %v2660 = vld [vmem:[%s105 + $0x278] sm:$0xff]
    %v2661 = vld [vmem:[%s105 + $0x288] sm:$0xff]
    %v2662 = vld [vmem:[%s105 + $0x290] sm:$0xff]
    %v2663 = vld [vmem:[%s105 + $0x298] sm:$0xff]
    %v2664 = vld [vmem:[%s105 + $0x2a0] sm:$0xff]
    %v2665 = vld [vmem:[%s105 + $0x2a8] sm:$0xff]
    %v2666 = vld [vmem:[%s105 + $0x2b0] sm:$0xff]
    %v2667 = vld [vmem:[%s105 + $0x2b8] sm:$0xff]
    %v2668 = vld [vmem:[%s105 + $0x2c0] sm:$0xff]
    %v2669 = vld [vmem:[%s105 + $0x2d0] sm:$0xff]
    %v2670 = vld [vmem:[%s105 + $0x2d8] sm:$0xff]
    %v2671 = vld [vmem:[%s105 + $0x2e0] sm:$0xff]
    %v2672 = vld [vmem:[%s105 + $0x2e8] sm:$0xff]
    %v2673 = vld [vmem:[%s105 + $0x2f0] sm:$0xff]
    %v2674 = vld [vmem:[%s105 + $0x2f8] sm:$0xff]
    %v2675 = vld [vmem:[%s105 + $0x300] sm:$0xff]
    %v2676 = vld [vmem:[%s105 + $0x308] sm:$0xff]
    %v2677 = vld [vmem:[%s105 + $0x318] sm:$0xff]
    %v2678 = vld [vmem:[%s105 + $0x320] sm:$0xff]
    %v2679 = vld [vmem:[%s105 + $0x328] sm:$0xff]
    %v2680 = vld [vmem:[%s105 + $0x330] sm:$0xff]
    %v2681 = vld [vmem:[%s105 + $0x338] sm:$0xff]
    %v2682 = vld [vmem:[%s105 + $0x340] sm:$0xff]
    %v2683 = vld [vmem:[%s105 + $0x348] sm:$0xff]
    %v2684 = vld [vmem:[%s105 + $0x350] sm:$0xff]
    %v2685 = vld [vmem:[%s105 + $0x360] sm:$0xff]
    %v2686 = vld [vmem:[%s105 + $0x368] sm:$0xff]
    %v2687 = vld [vmem:[%s105 + $0x370] sm:$0xff]
    %v2688 = vld [vmem:[%s105 + $0x378] sm:$0xff]
    %v2689 = vld [vmem:[%s105 + $0x380] sm:$0xff]
    %v2690 = vld [vmem:[%s105 + $0x388] sm:$0xff]
    %v2691 = vld [vmem:[%s105 + $0x390] sm:$0xff]
    %v2692 = vld [vmem:[%s105 + $0x398] sm:$0xff]
    %v2693 = vld [vmem:[%s105 + $0x3a8] sm:$0xff]
    %v2694 = vld [vmem:[%s105 + $0x3b0] sm:$0xff]
    %v2695 = vld [vmem:[%s105 + $0x3b8] sm:$0xff]
    %v2696 = vld [vmem:[%s105 + $0x3c0] sm:$0xff]
    %v2697 = vld [vmem:[%s105 + $0x3c8] sm:$0xff]
    %v2698 = vld [vmem:[%s105 + $0x3d0] sm:$0xff]
    %v2699 = vld [vmem:[%s105 + $0x3d8] sm:$0xff]
    %v2700 = vld [vmem:[%s105 + $0x3e0] sm:$0xff]
    %v2701 = vld [vmem:[%s105 + $0x3f0] sm:$0xff]
    %v2702 = vld [vmem:[%s105 + $0x3f8] sm:$0xff]
    %v2703 = vld [vmem:[%s105 + $0x400] sm:$0xff]
    %v2704 = vld [vmem:[%s105 + $0x408] sm:$0xff]
    %v2705 = vld [vmem:[%s105 + $0x410] sm:$0xff]
    %v2706 = vld [vmem:[%s105 + $0x418] sm:$0xff]
    %v2707 = vld [vmem:[%s105 + $0x420] sm:$0xff]
    %v2708 = vld [vmem:[%s105 + $0x428] sm:$0xff]
    %v2709 = vld [vmem:[%s105 + $0x438] sm:$0xff]
    %v2710 = vld [vmem:[%s105 + $0x440] sm:$0xff]
    %v2711 = vld [vmem:[%s105 + $0x448] sm:$0xff]
    %v2712 = vld [vmem:[%s105 + $0x450] sm:$0xff]
    %v2713 = vld [vmem:[%s105 + $0x458] sm:$0xff]
    %v2714 = vld [vmem:[%s105 + $0x460] sm:$0xff]
    %v2715 = vld [vmem:[%s105 + $0x468] sm:$0xff]
    %v2716 = vld [vmem:[%s105 + $0x470] sm:$0xff]
    %2717 = vmatprep.subr.bf16.mxu0 %v2590
    %2718 = vmatpush1.bf16.msra.mxu0 %v2589
    %2719 = vmatprep.subr.bf16.mxu0 %v2598
    %2720 = vmatpush1.bf16.msra.mxu0 %v2597
    %2721 = vmatprep.subr.bf16.mxu0 %v2606
    %2722 = vmatpush1.bf16.msra.mxu0 %v2605
    %2723 = vmatprep.subr.bf16.mxu0 %v2614
    %2724 = vmatpush1.bf16.msra.mxu0 %v2613
    %2725 = vmatprep.subr.bf16.mxu0 %v2622
    %2726 = vmatpush1.bf16.msra.mxu0 %v2621
    %2727 = vmatprep.subr.bf16.mxu0 %v2630
    %2728 = vmatpush1.bf16.msra.mxu0 %v2629
    %2729 = vmatprep.subr.bf16.mxu0 %v2638
    %2730 = vmatpush1.bf16.msra.mxu0 %v2637
    %2731 = vmatprep.subr.bf16.mxu0 %v2646
    %2732 = vmatpush1.bf16.msra.mxu0 %v2645
    %2733 = vmatprep.subr.bf16.mxu0 %v2654
    %2734 = vmatpush1.bf16.msra.mxu0 %v2653
    %2735 = vmatprep.subr.bf16.mxu0 %v2662
    %2736 = vmatpush1.bf16.msra.mxu0 %v2661
    %2737 = vmatprep.subr.bf16.mxu0 %v2670
    %2738 = vmatpush1.bf16.msra.mxu0 %v2669
    %2739 = vmatprep.subr.bf16.mxu0 %v2678
    %2740 = vmatpush1.bf16.msra.mxu0 %v2677
    %2741 = vmatprep.subr.bf16.mxu0 %v2686
    %2742 = vmatpush1.bf16.msra.mxu0 %v2685
    %2743 = vmatprep.subr.bf16.mxu0 %v2694
    %2744 = vmatpush1.bf16.msra.mxu0 %v2693
    %2745 = vmatprep.subr.bf16.mxu0 %v2702
    %2746 = vmatpush1.bf16.msra.mxu0 %v2701
    %2747 = vmatprep.subr.bf16.mxu0 %v2710
    %2748 = vmatpush1.bf16.msra.mxu0 %v2709
    %2749 = vmatprep.mubr.bf16.mxu0 %v1557
    %2750 = vmatmul.mubr.bf16.gmra.mrb[0].mxu0 %v1556
    %v2751 = vpop.f32.mrb[0].mxu0
    %v2752 = vadd.f32 0.0, %v2751
    %v2753 = vpop.f32.mrb[0].mxu0
    %v2754 = vadd.f32 0.0, %v2753
    %v2755 = vpop.f32.mrb[0].mxu0
    %v2756 = vpop.f32.mrb[0].mxu0
    %2757 = vdwg.mxu0
    %2758 = vmatprep.subr.bf16.mxu0 %v2592
    %2759 = vmatpush1.bf16.msra.mxu0 %v2591
    %2760 = vmatprep.subr.bf16.mxu0 %v2600
    %2761 = vmatpush1.bf16.msra.mxu0 %v2599
    %2762 = vmatprep.subr.bf16.mxu0 %v2608
    %2763 = vmatpush1.bf16.msra.mxu0 %v2607
    %2764 = vmatprep.subr.bf16.mxu0 %v2616
    %2765 = vmatpush1.bf16.msra.mxu0 %v2615
    %2766 = vmatprep.subr.bf16.mxu0 %v2624
    %2767 = vmatpush1.bf16.msra.mxu0 %v2623
    %2768 = vmatprep.subr.bf16.mxu0 %v2632
    %2769 = vmatpush1.bf16.msra.mxu0 %v2631
    %2770 = vmatprep.subr.bf16.mxu0 %v2640
    %2771 = vmatpush1.bf16.msra.mxu0 %v2639
    %2772 = vmatprep.subr.bf16.mxu0 %v2648
    %2773 = vmatpush1.bf16.msra.mxu0 %v2647
    %2774 = vmatprep.subr.bf16.mxu0 %v2656
    %2775 = vmatpush1.bf16.msra.mxu0 %v2655
    %2776 = vmatprep.subr.bf16.mxu0 %v2664
    %2777 = vmatpush1.bf16.msra.mxu0 %v2663
    %2778 = vmatprep.subr.bf16.mxu0 %v2672
    %2779 = vmatpush1.bf16.msra.mxu0 %v2671
    %2780 = vmatprep.subr.bf16.mxu0 %v2680
    %2781 = vmatpush1.bf16.msra.mxu0 %v2679
    %2782 = vmatprep.subr.bf16.mxu0 %v2688
    %2783 = vmatpush1.bf16.msra.mxu0 %v2687
    %2784 = vmatprep.subr.bf16.mxu0 %v2696
    %2785 = vmatpush1.bf16.msra.mxu0 %v2695
    %2786 = vmatprep.subr.bf16.mxu0 %v2704
    %2787 = vmatpush1.bf16.msra.mxu0 %v2703
    %2788 = vmatprep.subr.bf16.mxu0 %v2712
    %2789 = vmatpush1.bf16.msra.mxu0 %v2711
    %2790 = vmatprep.mubr.bf16.mxu0 %v1557
    %2791 = vmatmul.mubr.bf16.gmra.mrb[0].mxu0 %v1556
    %v2792 = vpop.f32.mrb[0].mxu0
    %v2793 = vadd.f32 0.0, %v2792
    %v2794 = vpop.f32.mrb[0].mxu0
    %v2795 = vadd.f32 0.0, %v2794
    %v2796 = vpop.f32.mrb[0].mxu0
    %v2797 = vpop.f32.mrb[0].mxu0
    %2798 = vdwg.mxu0
    %2799 = vmatprep.subr.bf16.mxu0 %v2594
    %2800 = vmatpush1.bf16.msra.mxu0 %v2593
    %2801 = vmatprep.subr.bf16.mxu0 %v2602
    %2802 = vmatpush1.bf16.msra.mxu0 %v2601
    %2803 = vmatprep.subr.bf16.mxu0 %v2610
    %2804 = vmatpush1.bf16.msra.mxu0 %v2609
    %2805 = vmatprep.subr.bf16.mxu0 %v2618
    %2806 = vmatpush1.bf16.msra.mxu0 %v2617
    %2807 = vmatprep.subr.bf16.mxu0 %v2626
    %2808 = vmatpush1.bf16.msra.mxu0 %v2625
    %2809 = vmatprep.subr.bf16.mxu0 %v2634
    %2810 = vmatpush1.bf16.msra.mxu0 %v2633
    %2811 = vmatprep.subr.bf16.mxu0 %v2642
    %2812 = vmatpush1.bf16.msra.mxu0 %v2641
    %2813 = vmatprep.subr.bf16.mxu0 %v2650
    %2814 = vmatpush1.bf16.msra.mxu0 %v2649
    %2815 = vmatprep.subr.bf16.mxu0 %v2658
    %2816 = vmatpush1.bf16.msra.mxu0 %v2657
    %2817 = vmatprep.subr.bf16.mxu0 %v2666
    %2818 = vmatpush1.bf16.msra.mxu0 %v2665
    %2819 = vmatprep.subr.bf16.mxu0 %v2674
    %2820 = vmatpush1.bf16.msra.mxu0 %v2673
    %2821 = vmatprep.subr.bf16.mxu0 %v2682
    %2822 = vmatpush1.bf16.msra.mxu0 %v2681
    %2823 = vmatprep.subr.bf16.mxu0 %v2690
    %2824 = vmatpush1.bf16.msra.mxu0 %v2689
    %2825 = vmatprep.subr.bf16.mxu0 %v2698
    %2826 = vmatpush1.bf16.msra.mxu0 %v2697
    %2827 = vmatprep.subr.bf16.mxu0 %v2706
    %2828 = vmatpush1.bf16.msra.mxu0 %v2705
    %2829 = vmatprep.subr.bf16.mxu0 %v2714
    %2830 = vmatpush1.bf16.msra.mxu0 %v2713
    %2831 = vmatprep.mubr.bf16.mxu0 %v1557
    %2832 = vmatmul.mubr.bf16.gmra.mrb[0].mxu0 %v1556
    %v2833 = vpop.f32.mrb[0].mxu0
    %v2834 = vadd.f32 0.0, %v2833
    %v2835 = vpop.f32.mrb[0].mxu0
    %v2836 = vadd.f32 0.0, %v2835
    %v2837 = vpop.f32.mrb[0].mxu0
    %v2838 = vpop.f32.mrb[0].mxu0
    %2839 = vdwg.mxu0
    %2840 = vmatprep.subr.bf16.mxu0 %v2596
    %2841 = vmatpush1.bf16.msra.mxu0 %v2595
    %2842 = vmatprep.subr.bf16.mxu0 %v2604
    %2843 = vmatpush1.bf16.msra.mxu0 %v2603
    %2844 = vmatprep.subr.bf16.mxu0 %v2612
    %2845 = vmatpush1.bf16.msra.mxu0 %v2611
    %2846 = vmatprep.subr.bf16.mxu0 %v2620
    %2847 = vmatpush1.bf16.msra.mxu0 %v2619
    %2848 = vmatprep.subr.bf16.mxu0 %v2628
    %2849 = vmatpush1.bf16.msra.mxu0 %v2627
    %2850 = vmatprep.subr.bf16.mxu0 %v2636
    %2851 = vmatpush1.bf16.msra.mxu0 %v2635
    %2852 = vmatprep.subr.bf16.mxu0 %v2644
    %2853 = vmatpush1.bf16.msra.mxu0 %v2643
    %2854 = vmatprep.subr.bf16.mxu0 %v2652
    %2855 = vmatpush1.bf16.msra.mxu0 %v2651
    %2856 = vmatprep.subr.bf16.mxu0 %v2660
    %2857 = vmatpush1.bf16.msra.mxu0 %v2659
    %2858 = vmatprep.subr.bf16.mxu0 %v2668
    %2859 = vmatpush1.bf16.msra.mxu0 %v2667
    %2860 = vmatprep.subr.bf16.mxu0 %v2676
    %2861 = vmatpush1.bf16.msra.mxu0 %v2675
    %2862 = vmatprep.subr.bf16.mxu0 %v2684
    %2863 = vmatpush1.bf16.msra.mxu0 %v2683
    %2864 = vmatprep.subr.bf16.mxu0 %v2692
    %2865 = vmatpush1.bf16.msra.mxu0 %v2691
    %2866 = vmatprep.subr.bf16.mxu0 %v2700
    %2867 = vmatpush1.bf16.msra.mxu0 %v2699
    %2868 = vmatprep.subr.bf16.mxu0 %v2708
    %2869 = vmatpush1.bf16.msra.mxu0 %v2707
    %2870 = vmatprep.subr.bf16.mxu0 %v2716
    %2871 = vmatpush1.bf16.msra.mxu0 %v2715
    %2872 = vmatprep.mubr.bf16.mxu0 %v1557
    %2873 = vmatmul.mubr.bf16.gmra.mrb[0].mxu0 %v1556
    %v2874 = vpop.f32.mrb[0].mxu0
    %v2875 = vadd.f32 0.0, %v2874
    %v2876 = vpop.f32.mrb[0].mxu0
    %v2877 = vadd.f32 0.0, %v2876
    %v2878 = vpop.f32.mrb[0].mxu0
    %v2879 = vpop.f32.mrb[0].mxu0
    %2880 = vdwg.mxu0
    %v2881 = vadd.f32 %v2544, %v2752
    %v2882 = vadd.f32 %v2545, %v2754
    %v2883 = vadd.f32 %v2546, %v2793
    %v2884 = vadd.f32 %v2547, %v2795
    %v2885 = vadd.f32 %v2548, %v2834
    %v2886 = vadd.f32 %v2549, %v2836
    %v2887 = vadd.f32 %v2550, %v2875
    %v2888 = vadd.f32 %v2551, %v2877
    %v2889 = vld [vmem:[#allocation9] sm:$0xff]
    %v2891 = vlaneseq
    %v2892 = vshrl.u32 %v2891, 7
    %v2893 = vsub.s32 0, %v2892
    %v2894 = vrot.slane %v2889, %v2893
    %v2895 = vlaneseq
    %v2896 = vshrl.u32 %v2895, 7
    %v2897 = vsub.s32 1, %v2896
    %v2898 = vrot.slane %v2889, %v2897
    %v2899 = vlaneseq
    %v2900 = vshrl.u32 %v2899, 7
    %v2901 = vsub.s32 2, %v2900
    %v2902 = vrot.slane %v2889, %v2901
    %v2903 = vlaneseq
    %v2904 = vshrl.u32 %v2903, 7
    %v2905 = vsub.s32 3, %v2904
    %v2906 = vrot.slane %v2889, %v2905
    %v2907 = vlaneseq
    %v2908 = vshrl.u32 %v2907, 7
    %v2909 = vsub.s32 4, %v2908
    %v2910 = vrot.slane %v2889, %v2909
    %v2911 = vlaneseq
    %v2912 = vshrl.u32 %v2911, 7
    %v2913 = vsub.s32 5, %v2912
    %v2914 = vrot.slane %v2889, %v2913
    %v2915 = vlaneseq
    %v2916 = vshrl.u32 %v2915, 7
    %v2917 = vsub.s32 6, %v2916
    %v2918 = vrot.slane %v2889, %v2917
    %v2919 = vlaneseq
    %v2920 = vshrl.u32 %v2919, 7
    %v2921 = vsub.s32 7, %v2920
    %v2922 = vrot.slane %v2889, %v2921
    %v2931 = vadd.f32 %v2881, %v2894
    %v2932 = vadd.f32 %v2882, %v2898
    %v2933 = vadd.f32 %v2883, %v2902
    %v2934 = vadd.f32 %v2884, %v2906
    %v2935 = vadd.f32 %v2885, %v2910
    %v2936 = vadd.f32 %v2886, %v2914
    %v2937 = vadd.f32 %v2887, %v2918
    %v2938 = vadd.f32 %v2888, %v2922
    %v2939 = vmax.f32 %v2931, 0.0
    %v2940 = vmax.f32 %v2932, 0.0
    %v2941 = vmax.f32 %v2933, 0.0
    %v2942 = vmax.f32 %v2934, 0.0
    %v2943 = vmax.f32 %v2935, 0.0
    %v2944 = vmax.f32 %v2936, 0.0
    %v2945 = vmax.f32 %v2937, 0.0
    %v2946 = vmax.f32 %v2938, 0.0
    %v2947 = vpack.c.bf16 %v2939, %v2939
    %v2948 = vpack.c.bf16 %v2940, %v2940
    %v2949 = vpack.c.bf16 %v2941, %v2941
    %v2950 = vpack.c.bf16 %v2942, %v2942
    %v2951 = vpack.c.bf16 %v2943, %v2943
    %v2952 = vpack.c.bf16 %v2944, %v2944
    %v2953 = vpack.c.bf16 %v2945, %v2945
    %v2954 = vpack.c.bf16 %v2946, %v2946
    %s2955 = smul.u32 %s157, 9
    %s2956 = sshll.u32 %s2955, 4
    %2957 = dma.done %s163, %s2956
    %s2958 = scalar_lea.hbm %s6, 36864
    %s2960 = sshll.u32 1, 14
    %s2961 = sxor.u32 4294967295, %s2960
    %s2963 = sadd.s32 2, %s73
    %s2965 = sshll.u32 7, 26
    %s2966 = sxor.u32 4294967295, %s2965
    %s2967 = sand.u32 0, %s2966
    %s2968 = sshll.u32 %s2963, 26
    %s2969 = sor.u32 %s2967, %s2968
    %s2970 = sshll.u32 %s105, 4
    %s2971 = int_to_ptr.vmem [resolvable:$true] %s2970
    %2974 = sst [smem:[#allocation34]] 1152
    %s2975 = scalar_lea.smem [#allocation34], 1
    %2976 = sst [smem:[%s2975]] 1152
    %s2977 = scalar_lea.smem [#allocation34], 2
    %2978 = sst [smem:[%s2977]] 9
    %s2979 = scalar_lea.smem [#allocation34], 3
    %2980 = sst [smem:[%s2979]] 64
    %s2981 = scalar_lea.smem [#allocation34], 4
    %2982 = sst [smem:[%s2981]] 128
    %s2983 = scalar_lea.smem [#allocation34], 5
    %2984 = sst [smem:[%s2983]] 2
    %s2985 = scalar_lea.smem [#allocation34], 6
    %2986 = sst [smem:[%s2985]] 576
    %s2987 = scalar_lea.smem [#allocation34], 7
    %2988 = sst [smem:[%s2987]] 64
    %s2989 = scalar_lea.smem [#allocation34], 8
    %2990 = sst [smem:[%s2989]] 4
    %2992 = dma.general %s2958, 18432, %s2971, %s106, [#allocation33], [#allocation34], %s2969, 0
    %v2993 = vld [vmem:[%s162] sm:$0xff]
    %v2994 = vld [vmem:[%s162 + $0x8] sm:$0xff]
    %v2995 = vld [vmem:[%s162 + $0x10] sm:$0xff]
    %v2996 = vld [vmem:[%s162 + $0x18] sm:$0xff]
    %v2997 = vld [vmem:[%s162 + $0x20] sm:$0xff]
    %v2998 = vld [vmem:[%s162 + $0x28] sm:$0xff]
    %v2999 = vld [vmem:[%s162 + $0x30] sm:$0xff]
    %v3000 = vld [vmem:[%s162 + $0x38] sm:$0xff]
    %v3001 = vld [vmem:[%s162 + $0x40] sm:$0xff]
    %v3002 = vld [vmem:[%s162 + $0x48] sm:$0xff]
    %v3003 = vld [vmem:[%s162 + $0x50] sm:$0xff]
    %v3004 = vld [vmem:[%s162 + $0x58] sm:$0xff]
    %v3005 = vld [vmem:[%s162 + $0x60] sm:$0xff]
    %v3006 = vld [vmem:[%s162 + $0x68] sm:$0xff]
    %v3007 = vld [vmem:[%s162 + $0x70] sm:$0xff]
    %v3008 = vld [vmem:[%s162 + $0x78] sm:$0xff]
    %v3009 = vld [vmem:[%s162 + $0x80] sm:$0xff]
    %v3010 = vld [vmem:[%s162 + $0x88] sm:$0xff]
    %v3011 = vld [vmem:[%s162 + $0x90] sm:$0xff]
    %v3012 = vld [vmem:[%s162 + $0x98] sm:$0xff]
    %v3013 = vld [vmem:[%s162 + $0xa0] sm:$0xff]
    %v3014 = vld [vmem:[%s162 + $0xa8] sm:$0xff]
    %v3015 = vld [vmem:[%s162 + $0xb0] sm:$0xff]
    %v3016 = vld [vmem:[%s162 + $0xb8] sm:$0xff]
    %v3017 = vld [vmem:[%s162 + $0xc0] sm:$0xff]
    %v3018 = vld [vmem:[%s162 + $0xc8] sm:$0xff]
    %v3019 = vld [vmem:[%s162 + $0xd0] sm:$0xff]
    %v3020 = vld [vmem:[%s162 + $0xd8] sm:$0xff]
    %v3021 = vld [vmem:[%s162 + $0xe0] sm:$0xff]
    %v3022 = vld [vmem:[%s162 + $0xe8] sm:$0xff]
    %v3023 = vld [vmem:[%s162 + $0xf0] sm:$0xff]
    %v3024 = vld [vmem:[%s162 + $0xf8] sm:$0xff]
    %v3025 = vld [vmem:[%s162 + $0x100] sm:$0xff]
    %v3026 = vld [vmem:[%s162 + $0x108] sm:$0xff]
    %v3027 = vld [vmem:[%s162 + $0x110] sm:$0xff]
    %v3028 = vld [vmem:[%s162 + $0x118] sm:$0xff]
    %v3029 = vld [vmem:[%s162 + $0x120] sm:$0xff]
    %v3030 = vld [vmem:[%s162 + $0x128] sm:$0xff]
    %v3031 = vld [vmem:[%s162 + $0x130] sm:$0xff]
    %v3032 = vld [vmem:[%s162 + $0x138] sm:$0xff]
    %v3033 = vld [vmem:[%s162 + $0x140] sm:$0xff]
    %v3034 = vld [vmem:[%s162 + $0x148] sm:$0xff]
    %v3035 = vld [vmem:[%s162 + $0x150] sm:$0xff]
    %v3036 = vld [vmem:[%s162 + $0x158] sm:$0xff]
    %v3037 = vld [vmem:[%s162 + $0x160] sm:$0xff]
    %v3038 = vld [vmem:[%s162 + $0x168] sm:$0xff]
    %v3039 = vld [vmem:[%s162 + $0x170] sm:$0xff]
    %v3040 = vld [vmem:[%s162 + $0x178] sm:$0xff]
    %v3041 = vld [vmem:[%s162 + $0x180] sm:$0xff]
    %v3042 = vld [vmem:[%s162 + $0x188] sm:$0xff]
    %v3043 = vld [vmem:[%s162 + $0x190] sm:$0xff]
    %v3044 = vld [vmem:[%s162 + $0x198] sm:$0xff]
    %v3045 = vld [vmem:[%s162 + $0x1a0] sm:$0xff]
    %v3046 = vld [vmem:[%s162 + $0x1a8] sm:$0xff]
    %v3047 = vld [vmem:[%s162 + $0x1b0] sm:$0xff]
    %v3048 = vld [vmem:[%s162 + $0x1b8] sm:$0xff]
    %v3049 = vld [vmem:[%s162 + $0x1c0] sm:$0xff]
    %v3050 = vld [vmem:[%s162 + $0x1c8] sm:$0xff]
    %v3051 = vld [vmem:[%s162 + $0x1d0] sm:$0xff]
    %v3052 = vld [vmem:[%s162 + $0x1d8] sm:$0xff]
    %v3053 = vld [vmem:[%s162 + $0x1e0] sm:$0xff]
    %v3054 = vld [vmem:[%s162 + $0x1e8] sm:$0xff]
    %v3055 = vld [vmem:[%s162 + $0x1f0] sm:$0xff]
    %v3056 = vld [vmem:[%s162 + $0x1f8] sm:$0xff]
    %v3057 = vld [vmem:[%s162 + $0x200] sm:$0xff]
    %v3058 = vld [vmem:[%s162 + $0x208] sm:$0xff]
    %v3059 = vld [vmem:[%s162 + $0x210] sm:$0xff]
    %v3060 = vld [vmem:[%s162 + $0x218] sm:$0xff]
    %v3061 = vld [vmem:[%s162 + $0x220] sm:$0xff]
    %v3062 = vld [vmem:[%s162 + $0x228] sm:$0xff]
    %v3063 = vld [vmem:[%s162 + $0x230] sm:$0xff]
    %v3064 = vld [vmem:[%s162 + $0x238] sm:$0xff]
    %v3065 = vld [vmem:[%s162 + $0x240] sm:$0xff]
    %v3066 = vld [vmem:[%s162 + $0x248] sm:$0xff]
    %v3067 = vld [vmem:[%s162 + $0x250] sm:$0xff]
    %v3068 = vld [vmem:[%s162 + $0x258] sm:$0xff]
    %v3069 = vld [vmem:[%s162 + $0x260] sm:$0xff]
    %v3070 = vld [vmem:[%s162 + $0x268] sm:$0xff]
    %v3071 = vld [vmem:[%s162 + $0x270] sm:$0xff]
    %v3072 = vld [vmem:[%s162 + $0x278] sm:$0xff]
    %v3073 = vld [vmem:[%s162 + $0x280] sm:$0xff]
    %v3074 = vld [vmem:[%s162 + $0x288] sm:$0xff]
    %v3075 = vld [vmem:[%s162 + $0x290] sm:$0xff]
    %v3076 = vld [vmem:[%s162 + $0x298] sm:$0xff]
    %v3077 = vld [vmem:[%s162 + $0x2a0] sm:$0xff]
    %v3078 = vld [vmem:[%s162 + $0x2a8] sm:$0xff]
    %v3079 = vld [vmem:[%s162 + $0x2b0] sm:$0xff]
    %v3080 = vld [vmem:[%s162 + $0x2b8] sm:$0xff]
    %v3081 = vld [vmem:[%s162 + $0x2c0] sm:$0xff]
    %v3082 = vld [vmem:[%s162 + $0x2c8] sm:$0xff]
    %v3083 = vld [vmem:[%s162 + $0x2d0] sm:$0xff]
    %v3084 = vld [vmem:[%s162 + $0x2d8] sm:$0xff]
    %v3085 = vld [vmem:[%s162 + $0x2e0] sm:$0xff]
    %v3086 = vld [vmem:[%s162 + $0x2e8] sm:$0xff]
    %v3087 = vld [vmem:[%s162 + $0x2f0] sm:$0xff]
    %v3088 = vld [vmem:[%s162 + $0x2f8] sm:$0xff]
    %v3089 = vld [vmem:[%s162 + $0x300] sm:$0xff]
    %v3090 = vld [vmem:[%s162 + $0x308] sm:$0xff]
    %v3091 = vld [vmem:[%s162 + $0x310] sm:$0xff]
    %v3092 = vld [vmem:[%s162 + $0x318] sm:$0xff]
    %v3093 = vld [vmem:[%s162 + $0x320] sm:$0xff]
    %v3094 = vld [vmem:[%s162 + $0x328] sm:$0xff]
    %v3095 = vld [vmem:[%s162 + $0x330] sm:$0xff]
    %v3096 = vld [vmem:[%s162 + $0x338] sm:$0xff]
    %v3097 = vld [vmem:[%s162 + $0x340] sm:$0xff]
    %v3098 = vld [vmem:[%s162 + $0x348] sm:$0xff]
    %v3099 = vld [vmem:[%s162 + $0x350] sm:$0xff]
    %v3100 = vld [vmem:[%s162 + $0x358] sm:$0xff]
    %v3101 = vld [vmem:[%s162 + $0x360] sm:$0xff]
    %v3102 = vld [vmem:[%s162 + $0x368] sm:$0xff]
    %v3103 = vld [vmem:[%s162 + $0x370] sm:$0xff]
    %v3104 = vld [vmem:[%s162 + $0x378] sm:$0xff]
    %v3105 = vld [vmem:[%s162 + $0x380] sm:$0xff]
    %v3106 = vld [vmem:[%s162 + $0x388] sm:$0xff]
    %v3107 = vld [vmem:[%s162 + $0x390] sm:$0xff]
    %v3108 = vld [vmem:[%s162 + $0x398] sm:$0xff]
    %v3109 = vld [vmem:[%s162 + $0x3a0] sm:$0xff]
    %v3110 = vld [vmem:[%s162 + $0x3a8] sm:$0xff]
    %v3111 = vld [vmem:[%s162 + $0x3b0] sm:$0xff]
    %v3112 = vld [vmem:[%s162 + $0x3b8] sm:$0xff]
    %v3113 = vld [vmem:[%s162 + $0x3c0] sm:$0xff]
    %v3114 = vld [vmem:[%s162 + $0x3c8] sm:$0xff]
    %v3115 = vld [vmem:[%s162 + $0x3d0] sm:$0xff]
    %v3116 = vld [vmem:[%s162 + $0x3d8] sm:$0xff]
    %v3117 = vld [vmem:[%s162 + $0x3e0] sm:$0xff]
    %v3118 = vld [vmem:[%s162 + $0x3e8] sm:$0xff]
    %v3119 = vld [vmem:[%s162 + $0x3f0] sm:$0xff]
    %v3120 = vld [vmem:[%s162 + $0x3f8] sm:$0xff]
    %v3121 = vld [vmem:[%s162 + $0x400] sm:$0xff]
    %v3122 = vld [vmem:[%s162 + $0x408] sm:$0xff]
    %v3123 = vld [vmem:[%s162 + $0x410] sm:$0xff]
    %v3124 = vld [vmem:[%s162 + $0x418] sm:$0xff]
    %v3125 = vld [vmem:[%s162 + $0x420] sm:$0xff]
    %v3126 = vld [vmem:[%s162 + $0x428] sm:$0xff]
    %v3127 = vld [vmem:[%s162 + $0x430] sm:$0xff]
    %v3128 = vld [vmem:[%s162 + $0x438] sm:$0xff]
    %v3129 = vld [vmem:[%s162 + $0x440] sm:$0xff]
    %v3130 = vld [vmem:[%s162 + $0x448] sm:$0xff]
    %v3131 = vld [vmem:[%s162 + $0x450] sm:$0xff]
    %v3132 = vld [vmem:[%s162 + $0x458] sm:$0xff]
    %v3133 = vld [vmem:[%s162 + $0x460] sm:$0xff]
    %v3134 = vld [vmem:[%s162 + $0x468] sm:$0xff]
    %v3135 = vld [vmem:[%s162 + $0x470] sm:$0xff]
    %v3136 = vld [vmem:[%s162 + $0x478] sm:$0xff]
    %s3137 = sshll.u32 %s2955, 4
    %3138 = dma.done [#allocation3], %s3137
    %s3139 = scalar_lea.hbm %s6, 55296
    %s3141 = sshll.u32 1, 14
    %s3142 = sxor.u32 4294967295, %s3141
    %s3144 = sadd.s32 2, %s73
    %s3146 = sshll.u32 7, 26
    %s3147 = sxor.u32 4294967295, %s3146
    %s3148 = sand.u32 0, %s3147
    %s3149 = sshll.u32 %s3144, 26
    %s3150 = sor.u32 %s3148, %s3149
    %s3151 = sshll.u32 %s162, 4
    %s3152 = int_to_ptr.vmem [resolvable:$true] %s3151
    %3155 = sst [smem:[#allocation36]] 1152
    %s3156 = scalar_lea.smem [#allocation36], 1
    %3157 = sst [smem:[%s3156]] 1152
    %s3158 = scalar_lea.smem [#allocation36], 2
    %3159 = sst [smem:[%s3158]] 9
    %s3160 = scalar_lea.smem [#allocation36], 3
    %3161 = sst [smem:[%s3160]] 64
    %s3162 = scalar_lea.smem [#allocation36], 4
    %3163 = sst [smem:[%s3162]] 128
    %s3164 = scalar_lea.smem [#allocation36], 5
    %3165 = sst [smem:[%s3164]] 2
    %s3166 = scalar_lea.smem [#allocation36], 6
    %3167 = sst [smem:[%s3166]] 576
    %s3168 = scalar_lea.smem [#allocation36], 7
    %3169 = sst [smem:[%s3168]] 64
    %s3170 = scalar_lea.smem [#allocation36], 8
    %3171 = sst [smem:[%s3170]] 4
    %3173 = dma.general %s3139, 18432, %s3152, %s163, [#allocation35], [#allocation36], %s3150, 0
    %v3174 = vld [vmem:[#allocation2] sm:$0xff]
    %v3175 = vld [vmem:[#allocation2 + $0x8] sm:$0xff]
    %v3176 = vld [vmem:[#allocation2 + $0x10] sm:$0xff]
    %v3177 = vld [vmem:[#allocation2 + $0x18] sm:$0xff]
    %v3178 = vld [vmem:[#allocation2 + $0x20] sm:$0xff]
    %v3179 = vld [vmem:[#allocation2 + $0x28] sm:$0xff]
    %v3180 = vld [vmem:[#allocation2 + $0x30] sm:$0xff]
    %v3181 = vld [vmem:[#allocation2 + $0x38] sm:$0xff]
    %v3182 = vld [vmem:[#allocation2 + $0x40] sm:$0xff]
    %v3183 = vld [vmem:[#allocation2 + $0x48] sm:$0xff]
    %v3184 = vld [vmem:[#allocation2 + $0x50] sm:$0xff]
    %v3185 = vld [vmem:[#allocation2 + $0x58] sm:$0xff]
    %v3186 = vld [vmem:[#allocation2 + $0x60] sm:$0xff]
    %v3187 = vld [vmem:[#allocation2 + $0x68] sm:$0xff]
    %v3188 = vld [vmem:[#allocation2 + $0x70] sm:$0xff]
    %v3189 = vld [vmem:[#allocation2 + $0x78] sm:$0xff]
    %v3190 = vld [vmem:[#allocation2 + $0x80] sm:$0xff]
    %v3191 = vld [vmem:[#allocation2 + $0x88] sm:$0xff]
    %v3192 = vld [vmem:[#allocation2 + $0x90] sm:$0xff]
    %v3193 = vld [vmem:[#allocation2 + $0x98] sm:$0xff]
    %v3194 = vld [vmem:[#allocation2 + $0xa0] sm:$0xff]
    %v3195 = vld [vmem:[#allocation2 + $0xa8] sm:$0xff]
    %v3196 = vld [vmem:[#allocation2 + $0xb0] sm:$0xff]
    %v3197 = vld [vmem:[#allocation2 + $0xb8] sm:$0xff]
    %v3198 = vld [vmem:[#allocation2 + $0xc0] sm:$0xff]
    %v3199 = vld [vmem:[#allocation2 + $0xc8] sm:$0xff]
    %v3200 = vld [vmem:[#allocation2 + $0xd0] sm:$0xff]
    %v3201 = vld [vmem:[#allocation2 + $0xd8] sm:$0xff]
    %v3202 = vld [vmem:[#allocation2 + $0xe0] sm:$0xff]
    %v3203 = vld [vmem:[#allocation2 + $0xe8] sm:$0xff]
    %v3204 = vld [vmem:[#allocation2 + $0xf0] sm:$0xff]
    %v3205 = vld [vmem:[#allocation2 + $0xf8] sm:$0xff]
    %v3206 = vld [vmem:[#allocation2 + $0x100] sm:$0xff]
    %v3207 = vld [vmem:[#allocation2 + $0x108] sm:$0xff]
    %v3208 = vld [vmem:[#allocation2 + $0x110] sm:$0xff]
    %v3209 = vld [vmem:[#allocation2 + $0x118] sm:$0xff]
    %v3210 = vld [vmem:[#allocation2 + $0x120] sm:$0xff]
    %v3211 = vld [vmem:[#allocation2 + $0x128] sm:$0xff]
    %v3212 = vld [vmem:[#allocation2 + $0x130] sm:$0xff]
    %v3213 = vld [vmem:[#allocation2 + $0x138] sm:$0xff]
    %v3214 = vld [vmem:[#allocation2 + $0x140] sm:$0xff]
    %v3215 = vld [vmem:[#allocation2 + $0x148] sm:$0xff]
    %v3216 = vld [vmem:[#allocation2 + $0x150] sm:$0xff]
    %v3217 = vld [vmem:[#allocation2 + $0x158] sm:$0xff]
    %v3218 = vld [vmem:[#allocation2 + $0x160] sm:$0xff]
    %v3219 = vld [vmem:[#allocation2 + $0x168] sm:$0xff]
    %v3220 = vld [vmem:[#allocation2 + $0x170] sm:$0xff]
    %v3221 = vld [vmem:[#allocation2 + $0x178] sm:$0xff]
    %v3222 = vld [vmem:[#allocation2 + $0x180] sm:$0xff]
    %v3223 = vld [vmem:[#allocation2 + $0x188] sm:$0xff]
    %v3224 = vld [vmem:[#allocation2 + $0x190] sm:$0xff]
    %v3225 = vld [vmem:[#allocation2 + $0x198] sm:$0xff]
    %v3226 = vld [vmem:[#allocation2 + $0x1a0] sm:$0xff]
    %v3227 = vld [vmem:[#allocation2 + $0x1a8] sm:$0xff]
    %v3228 = vld [vmem:[#allocation2 + $0x1b0] sm:$0xff]
    %v3229 = vld [vmem:[#allocation2 + $0x1b8] sm:$0xff]
    %v3230 = vld [vmem:[#allocation2 + $0x1c0] sm:$0xff]
    %v3231 = vld [vmem:[#allocation2 + $0x1c8] sm:$0xff]
    %v3232 = vld [vmem:[#allocation2 + $0x1d0] sm:$0xff]
    %v3233 = vld [vmem:[#allocation2 + $0x1d8] sm:$0xff]
    %v3234 = vld [vmem:[#allocation2 + $0x1e0] sm:$0xff]
    %v3235 = vld [vmem:[#allocation2 + $0x1e8] sm:$0xff]
    %v3236 = vld [vmem:[#allocation2 + $0x1f0] sm:$0xff]
    %v3237 = vld [vmem:[#allocation2 + $0x1f8] sm:$0xff]
    %v3238 = vld [vmem:[#allocation2 + $0x200] sm:$0xff]
    %v3239 = vld [vmem:[#allocation2 + $0x208] sm:$0xff]
    %v3240 = vld [vmem:[#allocation2 + $0x210] sm:$0xff]
    %v3241 = vld [vmem:[#allocation2 + $0x218] sm:$0xff]
    %v3242 = vld [vmem:[#allocation2 + $0x220] sm:$0xff]
    %v3243 = vld [vmem:[#allocation2 + $0x228] sm:$0xff]
    %v3244 = vld [vmem:[#allocation2 + $0x230] sm:$0xff]
    %v3245 = vld [vmem:[#allocation2 + $0x238] sm:$0xff]
    %v3246 = vld [vmem:[#allocation2 + $0x240] sm:$0xff]
    %v3247 = vld [vmem:[#allocation2 + $0x248] sm:$0xff]
    %v3248 = vld [vmem:[#allocation2 + $0x250] sm:$0xff]
    %v3249 = vld [vmem:[#allocation2 + $0x258] sm:$0xff]
    %v3250 = vld [vmem:[#allocation2 + $0x260] sm:$0xff]
    %v3251 = vld [vmem:[#allocation2 + $0x268] sm:$0xff]
    %v3252 = vld [vmem:[#allocation2 + $0x270] sm:$0xff]
    %v3253 = vld [vmem:[#allocation2 + $0x278] sm:$0xff]
    %v3254 = vld [vmem:[#allocation2 + $0x280] sm:$0xff]
    %v3255 = vld [vmem:[#allocation2 + $0x288] sm:$0xff]
    %v3256 = vld [vmem:[#allocation2 + $0x290] sm:$0xff]
    %v3257 = vld [vmem:[#allocation2 + $0x298] sm:$0xff]
    %v3258 = vld [vmem:[#allocation2 + $0x2a0] sm:$0xff]
    %v3259 = vld [vmem:[#allocation2 + $0x2a8] sm:$0xff]
    %v3260 = vld [vmem:[#allocation2 + $0x2b0] sm:$0xff]
    %v3261 = vld [vmem:[#allocation2 + $0x2b8] sm:$0xff]
    %v3262 = vld [vmem:[#allocation2 + $0x2c0] sm:$0xff]
    %v3263 = vld [vmem:[#allocation2 + $0x2c8] sm:$0xff]
    %v3264 = vld [vmem:[#allocation2 + $0x2d0] sm:$0xff]
    %v3265 = vld [vmem:[#allocation2 + $0x2d8] sm:$0xff]
    %v3266 = vld [vmem:[#allocation2 + $0x2e0] sm:$0xff]
    %v3267 = vld [vmem:[#allocation2 + $0x2e8] sm:$0xff]
    %v3268 = vld [vmem:[#allocation2 + $0x2f0] sm:$0xff]
    %v3269 = vld [vmem:[#allocation2 + $0x2f8] sm:$0xff]
    %v3270 = vld [vmem:[#allocation2 + $0x300] sm:$0xff]
    %v3271 = vld [vmem:[#allocation2 + $0x308] sm:$0xff]
    %v3272 = vld [vmem:[#allocation2 + $0x310] sm:$0xff]
    %v3273 = vld [vmem:[#allocation2 + $0x318] sm:$0xff]
    %v3274 = vld [vmem:[#allocation2 + $0x320] sm:$0xff]
    %v3275 = vld [vmem:[#allocation2 + $0x328] sm:$0xff]
    %v3276 = vld [vmem:[#allocation2 + $0x330] sm:$0xff]
    %v3277 = vld [vmem:[#allocation2 + $0x338] sm:$0xff]
    %v3278 = vld [vmem:[#allocation2 + $0x340] sm:$0xff]
    %v3279 = vld [vmem:[#allocation2 + $0x348] sm:$0xff]
    %v3280 = vld [vmem:[#allocation2 + $0x350] sm:$0xff]
    %v3281 = vld [vmem:[#allocation2 + $0x358] sm:$0xff]
    %v3282 = vld [vmem:[#allocation2 + $0x360] sm:$0xff]
    %v3283 = vld [vmem:[#allocation2 + $0x368] sm:$0xff]
    %v3284 = vld [vmem:[#allocation2 + $0x370] sm:$0xff]
    %v3285 = vld [vmem:[#allocation2 + $0x378] sm:$0xff]
    %v3286 = vld [vmem:[#allocation2 + $0x380] sm:$0xff]
    %v3287 = vld [vmem:[#allocation2 + $0x388] sm:$0xff]
    %v3288 = vld [vmem:[#allocation2 + $0x390] sm:$0xff]
    %v3289 = vld [vmem:[#allocation2 + $0x398] sm:$0xff]
    %v3290 = vld [vmem:[#allocation2 + $0x3a0] sm:$0xff]
    %v3291 = vld [vmem:[#allocation2 + $0x3a8] sm:$0xff]
    %v3292 = vld [vmem:[#allocation2 + $0x3b0] sm:$0xff]
    %v3293 = vld [vmem:[#allocation2 + $0x3b8] sm:$0xff]
    %v3294 = vld [vmem:[#allocation2 + $0x3c0] sm:$0xff]
    %v3295 = vld [vmem:[#allocation2 + $0x3c8] sm:$0xff]
    %v3296 = vld [vmem:[#allocation2 + $0x3d0] sm:$0xff]
    %v3297 = vld [vmem:[#allocation2 + $0x3d8] sm:$0xff]
    %v3298 = vld [vmem:[#allocation2 + $0x3e0] sm:$0xff]
    %v3299 = vld [vmem:[#allocation2 + $0x3e8] sm:$0xff]
    %v3300 = vld [vmem:[#allocation2 + $0x3f0] sm:$0xff]
    %v3301 = vld [vmem:[#allocation2 + $0x3f8] sm:$0xff]
    %v3302 = vld [vmem:[#allocation2 + $0x400] sm:$0xff]
    %v3303 = vld [vmem:[#allocation2 + $0x408] sm:$0xff]
    %v3304 = vld [vmem:[#allocation2 + $0x410] sm:$0xff]
    %v3305 = vld [vmem:[#allocation2 + $0x418] sm:$0xff]
    %v3306 = vld [vmem:[#allocation2 + $0x420] sm:$0xff]
    %v3307 = vld [vmem:[#allocation2 + $0x428] sm:$0xff]
    %v3308 = vld [vmem:[#allocation2 + $0x430] sm:$0xff]
    %v3309 = vld [vmem:[#allocation2 + $0x438] sm:$0xff]
    %v3310 = vld [vmem:[#allocation2 + $0x440] sm:$0xff]
    %v3311 = vld [vmem:[#allocation2 + $0x448] sm:$0xff]
    %v3312 = vld [vmem:[#allocation2 + $0x450] sm:$0xff]
    %v3313 = vld [vmem:[#allocation2 + $0x458] sm:$0xff]
    %v3314 = vld [vmem:[#allocation2 + $0x460] sm:$0xff]
    %v3315 = vld [vmem:[#allocation2 + $0x468] sm:$0xff]
    %v3316 = vld [vmem:[#allocation2 + $0x470] sm:$0xff]
    %v3317 = vld [vmem:[#allocation2 + $0x478] sm:$0xff]
    %3318 = vmatprep.subr.bf16.mxu0 %v3175
    %3319 = vmatpush1.bf16.msra.mxu0 %v3174
    %3320 = vmatprep.subr.bf16.mxu0 %v3184
    %3321 = vmatpush1.bf16.msra.mxu0 %v3183
    %3322 = vmatprep.subr.bf16.mxu0 %v3193
    %3323 = vmatpush1.bf16.msra.mxu0 %v3192
    %3324 = vmatprep.subr.bf16.mxu0 %v3202
    %3325 = vmatpush1.bf16.msra.mxu0 %v3201
    %3326 = vmatprep.subr.bf16.mxu0 %v3211
    %3327 = vmatpush1.bf16.msra.mxu0 %v3210
    %3328 = vmatprep.subr.bf16.mxu0 %v3220
    %3329 = vmatpush1.bf16.msra.mxu0 %v3219
    %3330 = vmatprep.subr.bf16.mxu0 %v3229
    %3331 = vmatpush1.bf16.msra.mxu0 %v3228
    %3332 = vmatprep.subr.bf16.mxu0 %v3238
    %3333 = vmatpush1.bf16.msra.mxu0 %v3237
    %3334 = vmatprep.subr.bf16.mxu0 %v3247
    %3335 = vmatpush1.bf16.msra.mxu0 %v3246
    %3336 = vmatprep.subr.bf16.mxu0 %v3256
    %3337 = vmatpush1.bf16.msra.mxu0 %v3255
    %3338 = vmatprep.subr.bf16.mxu0 %v3265
    %3339 = vmatpush1.bf16.msra.mxu0 %v3264
    %3340 = vmatprep.subr.bf16.mxu0 %v3274
    %3341 = vmatpush1.bf16.msra.mxu0 %v3273
    %3342 = vmatprep.subr.bf16.mxu0 %v3283
    %3343 = vmatpush1.bf16.msra.mxu0 %v3282
    %3344 = vmatprep.subr.bf16.mxu0 %v3292
    %3345 = vmatpush1.bf16.msra.mxu0 %v3291
    %3346 = vmatprep.subr.bf16.mxu0 %v3301
    %3347 = vmatpush1.bf16.msra.mxu0 %v3300
    %3348 = vmatprep.subr.bf16.mxu0 %v3310
    %3349 = vmatpush1.bf16.msra.mxu0 %v3309
    %3350 = vmatprep.mubr.bf16.mxu0 %v2950
    %3351 = vmatmul.mubr.bf16.gmra.mrb[0].mxu0 %v2949
    %v3352 = vpop.f32.mrb[0].mxu0
    %v3353 = vadd.f32 0.0, %v3352
    %v3354 = vpop.f32.mrb[0].mxu0
    %v3355 = vadd.f32 0.0, %v3354
    %v3356 = vpop.f32.mrb[0].mxu0
    %v3357 = vpop.f32.mrb[0].mxu0
    %3358 = vdwg.mxu0
    %3359 = vmatprep.subr.bf16.mxu0 %v3177
    %3360 = vmatpush1.bf16.msra.mxu0 %v3176
    %3361 = vmatprep.subr.bf16.mxu0 %v3186
    %3362 = vmatpush1.bf16.msra.mxu0 %v3185
    %3363 = vmatprep.subr.bf16.mxu0 %v3195
    %3364 = vmatpush1.bf16.msra.mxu0 %v3194
    %3365 = vmatprep.subr.bf16.mxu0 %v3204
    %3366 = vmatpush1.bf16.msra.mxu0 %v3203
    %3367 = vmatprep.subr.bf16.mxu0 %v3213
    %3368 = vmatpush1.bf16.msra.mxu0 %v3212
    %3369 = vmatprep.subr.bf16.mxu0 %v3222
    %3370 = vmatpush1.bf16.msra.mxu0 %v3221
    %3371 = vmatprep.subr.bf16.mxu0 %v3231
    %3372 = vmatpush1.bf16.msra.mxu0 %v3230
    %3373 = vmatprep.subr.bf16.mxu0 %v3240
    %3374 = vmatpush1.bf16.msra.mxu0 %v3239
    %3375 = vmatprep.subr.bf16.mxu0 %v3249
    %3376 = vmatpush1.bf16.msra.mxu0 %v3248
    %3377 = vmatprep.subr.bf16.mxu0 %v3258
    %3378 = vmatpush1.bf16.msra.mxu0 %v3257
    %3379 = vmatprep.subr.bf16.mxu0 %v3267
    %3380 = vmatpush1.bf16.msra.mxu0 %v3266
    %3381 = vmatprep.subr.bf16.mxu0 %v3276
    %3382 = vmatpush1.bf16.msra.mxu0 %v3275
    %3383 = vmatprep.subr.bf16.mxu0 %v3285
    %3384 = vmatpush1.bf16.msra.mxu0 %v3284
    %3385 = vmatprep.subr.bf16.mxu0 %v3294
    %3386 = vmatpush1.bf16.msra.mxu0 %v3293
    %3387 = vmatprep.subr.bf16.mxu0 %v3303
    %3388 = vmatpush1.bf16.msra.mxu0 %v3302
    %3389 = vmatprep.subr.bf16.mxu0 %v3312
    %3390 = vmatpush1.bf16.msra.mxu0 %v3311
    %3391 = vmatprep.mubr.bf16.mxu0 %v2950
    %3392 = vmatmul.mubr.bf16.gmra.mrb[0].mxu0 %v2949
    %v3393 = vpop.f32.mrb[0].mxu0
    %v3394 = vadd.f32 0.0, %v3393
    %v3395 = vpop.f32.mrb[0].mxu0
    %v3396 = vadd.f32 0.0, %v3395
    %v3397 = vpop.f32.mrb[0].mxu0
    %v3398 = vpop.f32.mrb[0].mxu0
    %3399 = vdwg.mxu0
    %3400 = vmatprep.subr.bf16.mxu0 %v3179
    %3401 = vmatpush1.bf16.msra.mxu0 %v3178
    %3402 = vmatprep.subr.bf16.mxu0 %v3188
    %3403 = vmatpush1.bf16.msra.mxu0 %v3187
    %3404 = vmatprep.subr.bf16.mxu0 %v3197
    %3405 = vmatpush1.bf16.msra.mxu0 %v3196
    %3406 = vmatprep.subr.bf16.mxu0 %v3206
    %3407 = vmatpush1.bf16.msra.mxu0 %v3205
    %3408 = vmatprep.subr.bf16.mxu0 %v3215
    %3409 = vmatpush1.bf16.msra.mxu0 %v3214
    %3410 = vmatprep.subr.bf16.mxu0 %v3224
    %3411 = vmatpush1.bf16.msra.mxu0 %v3223
    %3412 = vmatprep.subr.bf16.mxu0 %v3233
    %3413 = vmatpush1.bf16.msra.mxu0 %v3232
    %3414 = vmatprep.subr.bf16.mxu0 %v3242
    %3415 = vmatpush1.bf16.msra.mxu0 %v3241
    %3416 = vmatprep.subr.bf16.mxu0 %v3251
    %3417 = vmatpush1.bf16.msra.mxu0 %v3250
    %3418 = vmatprep.subr.bf16.mxu0 %v3260
    %3419 = vmatpush1.bf16.msra.mxu0 %v3259
    %3420 = vmatprep.subr.bf16.mxu0 %v3269
    %3421 = vmatpush1.bf16.msra.mxu0 %v3268
    %3422 = vmatprep.subr.bf16.mxu0 %v3278
    %3423 = vmatpush1.bf16.msra.mxu0 %v3277
    %3424 = vmatprep.subr.bf16.mxu0 %v3287
    %3425 = vmatpush1.bf16.msra.mxu0 %v3286
    %3426 = vmatprep.subr.bf16.mxu0 %v3296
    %3427 = vmatpush1.bf16.msra.mxu0 %v3295
    %3428 = vmatprep.subr.bf16.mxu0 %v3305
    %3429 = vmatpush1.bf16.msra.mxu0 %v3304
    %3430 = vmatprep.subr.bf16.mxu0 %v3314
    %3431 = vmatpush1.bf16.msra.mxu0 %v3313
    %3432 = vmatprep.mubr.bf16.mxu0 %v2950
    %3433 = vmatmul.mubr.bf16.gmra.mrb[0].mxu0 %v2949
    %v3434 = vpop.f32.mrb[0].mxu0
    %v3435 = vadd.f32 0.0, %v3434
    %v3436 = vpop.f32.mrb[0].mxu0
    %v3437 = vadd.f32 0.0, %v3436
    %v3438 = vpop.f32.mrb[0].mxu0
    %v3439 = vpop.f32.mrb[0].mxu0
    %3440 = vdwg.mxu0
    %3441 = vmatprep.subr.bf16.mxu0 %v3181
    %3442 = vmatpush1.bf16.msra.mxu0 %v3180
    %3443 = vmatprep.subr.bf16.mxu0 %v3190
    %3444 = vmatpush1.bf16.msra.mxu0 %v3189
    %3445 = vmatprep.subr.bf16.mxu0 %v3199
    %3446 = vmatpush1.bf16.msra.mxu0 %v3198
    %3447 = vmatprep.subr.bf16.mxu0 %v3208
    %3448 = vmatpush1.bf16.msra.mxu0 %v3207
    %3449 = vmatprep.subr.bf16.mxu0 %v3217
    %3450 = vmatpush1.bf16.msra.mxu0 %v3216
    %3451 = vmatprep.subr.bf16.mxu0 %v3226
    %3452 = vmatpush1.bf16.msra.mxu0 %v3225
    %3453 = vmatprep.subr.bf16.mxu0 %v3235
    %3454 = vmatpush1.bf16.msra.mxu0 %v3234
    %3455 = vmatprep.subr.bf16.mxu0 %v3244
    %3456 = vmatpush1.bf16.msra.mxu0 %v3243
    %3457 = vmatprep.subr.bf16.mxu0 %v3253
    %3458 = vmatpush1.bf16.msra.mxu0 %v3252
    %3459 = vmatprep.subr.bf16.mxu0 %v3262
    %3460 = vmatpush1.bf16.msra.mxu0 %v3261
    %3461 = vmatprep.subr.bf16.mxu0 %v3271
    %3462 = vmatpush1.bf16.msra.mxu0 %v3270
    %3463 = vmatprep.subr.bf16.mxu0 %v3280
    %3464 = vmatpush1.bf16.msra.mxu0 %v3279
    %3465 = vmatprep.subr.bf16.mxu0 %v3289
    %3466 = vmatpush1.bf16.msra.mxu0 %v3288
    %3467 = vmatprep.subr.bf16.mxu0 %v3298
    %3468 = vmatpush1.bf16.msra.mxu0 %v3297
    %3469 = vmatprep.subr.bf16.mxu0 %v3307
    %3470 = vmatpush1.bf16.msra.mxu0 %v3306
    %3471 = vmatprep.subr.bf16.mxu0 %v3316
    %3472 = vmatpush1.bf16.msra.mxu0 %v3315
    %3473 = vmatprep.mubr.bf16.mxu0 %v2950
    %3474 = vmatmul.mubr.bf16.gmra.mrb[0].mxu0 %v2949
    %v3475 = vpop.f32.mrb[0].mxu0
    %v3476 = vadd.f32 0.0, %v3475
    %v3477 = vpop.f32.mrb[0].mxu0
    %v3478 = vadd.f32 0.0, %v3477
    %v3479 = vpop.f32.mrb[0].mxu0
    %v3480 = vpop.f32.mrb[0].mxu0
    %3481 = vdwg.mxu0
    %3482 = vmatprep.subr.bf16.mxu0 0
    %3483 = vmatpush1.bf16.msra.mxu0 %v3182
    %3484 = vmatprep.subr.bf16.mxu0 0
    %3485 = vmatpush1.bf16.msra.mxu0 %v3191
    %3486 = vmatprep.subr.bf16.mxu0 0
    %3487 = vmatpush1.bf16.msra.mxu0 %v3200
    %3488 = vmatprep.subr.bf16.mxu0 0
    %3489 = vmatpush1.bf16.msra.mxu0 %v3209
    %3490 = vmatprep.subr.bf16.mxu0 0
    %3491 = vmatpush1.bf16.msra.mxu0 %v3218
    %3492 = vmatprep.subr.bf16.mxu0 0
    %3493 = vmatpush1.bf16.msra.mxu0 %v3227
    %3494 = vmatprep.subr.bf16.mxu0 0
    %3495 = vmatpush1.bf16.msra.mxu0 %v3236
    %3496 = vmatprep.subr.bf16.mxu0 0
    %3497 = vmatpush1.bf16.msra.mxu0 %v3245
    %3498 = vmatprep.subr.bf16.mxu0 0
    %3499 = vmatpush1.bf16.msra.mxu0 %v3254
    %3500 = vmatprep.subr.bf16.mxu0 0
    %3501 = vmatpush1.bf16.msra.mxu0 %v3263
    %3502 = vmatprep.subr.bf16.mxu0 0
    %3503 = vmatpush1.bf16.msra.mxu0 %v3272
    %3504 = vmatprep.subr.bf16.mxu0 0
    %3505 = vmatpush1.bf16.msra.mxu0 %v3281
    %3506 = vmatprep.subr.bf16.mxu0 0
    %3507 = vmatpush1.bf16.msra.mxu0 %v3290
    %3508 = vmatprep.subr.bf16.mxu0 0
    %3509 = vmatpush1.bf16.msra.mxu0 %v3299
    %3510 = vmatprep.subr.bf16.mxu0 0
    %3511 = vmatpush1.bf16.msra.mxu0 %v3308
    %3512 = vmatprep.subr.bf16.mxu0 0
    %3513 = vmatpush1.bf16.msra.mxu0 %v3317
    %3514 = vmatprep.mubr.bf16.mxu0 %v2950
    %3515 = vmatmul.mubr.bf16.gmra.mrb[0].mxu0 %v2949
    %v3516 = vpop.f32.mrb[0].mxu0
    %v3517 = vadd.f32 0.0, %v3516
    %v3518 = vpop.f32.mrb[0].mxu0
    %v3519 = vpop.f32.mrb[0].mxu0
    %v3520 = vpop.f32.mrb[0].mxu0
    %3521 = vdwg.mxu0
    %3522 = vmatprep.subr.bf16.mxu0 %v2994
    %3523 = vmatpush1.bf16.msra.mxu0 %v2993
    %3524 = vmatprep.subr.bf16.mxu0 %v3003
    %3525 = vmatpush1.bf16.msra.mxu0 %v3002
    %3526 = vmatprep.subr.bf16.mxu0 %v3012
    %3527 = vmatpush1.bf16.msra.mxu0 %v3011
    %3528 = vmatprep.subr.bf16.mxu0 %v3021
    %3529 = vmatpush1.bf16.msra.mxu0 %v3020
    %3530 = vmatprep.subr.bf16.mxu0 %v3030
    %3531 = vmatpush1.bf16.msra.mxu0 %v3029
    %3532 = vmatprep.subr.bf16.mxu0 %v3039
    %3533 = vmatpush1.bf16.msra.mxu0 %v3038
    %3534 = vmatprep.subr.bf16.mxu0 %v3048
    %3535 = vmatpush1.bf16.msra.mxu0 %v3047
    %3536 = vmatprep.subr.bf16.mxu0 %v3057
    %3537 = vmatpush1.bf16.msra.mxu0 %v3056
    %3538 = vmatprep.subr.bf16.mxu0 %v3066
    %3539 = vmatpush1.bf16.msra.mxu0 %v3065
    %3540 = vmatprep.subr.bf16.mxu0 %v3075
    %3541 = vmatpush1.bf16.msra.mxu0 %v3074
    %3542 = vmatprep.subr.bf16.mxu0 %v3084
    %3543 = vmatpush1.bf16.msra.mxu0 %v3083
    %3544 = vmatprep.subr.bf16.mxu0 %v3093
    %3545 = vmatpush1.bf16.msra.mxu0 %v3092
    %3546 = vmatprep.subr.bf16.mxu0 %v3102
    %3547 = vmatpush1.bf16.msra.mxu0 %v3101
    %3548 = vmatprep.subr.bf16.mxu0 %v3111
    %3549 = vmatpush1.bf16.msra.mxu0 %v3110
    %3550 = vmatprep.subr.bf16.mxu0 %v3120
    %3551 = vmatpush1.bf16.msra.mxu0 %v3119
    %3552 = vmatprep.subr.bf16.mxu0 %v3129
    %3553 = vmatpush1.bf16.msra.mxu0 %v3128
    %3554 = vmatprep.mubr.bf16.mxu0 %v2948
    %3555 = vmatmul.mubr.bf16.gmra.mrb[0].mxu0 %v2947
    %v3556 = vpop.f32.mrb[0].mxu0
    %v3557 = vadd.f32 %v3353, %v3556
    %v3558 = vpop.f32.mrb[0].mxu0
    %v3559 = vadd.f32 %v3355, %v3558
    %v3560 = vpop.f32.mrb[0].mxu0
    %v3561 = vpop.f32.mrb[0].mxu0
    %3562 = vdwg.mxu0
    %3563 = vmatprep.subr.bf16.mxu0 %v2996
    %3564 = vmatpush1.bf16.msra.mxu0 %v2995
    %3565 = vmatprep.subr.bf16.mxu0 %v3005
    %3566 = vmatpush1.bf16.msra.mxu0 %v3004
    %3567 = vmatprep.subr.bf16.mxu0 %v3014
    %3568 = vmatpush1.bf16.msra.mxu0 %v3013
    %3569 = vmatprep.subr.bf16.mxu0 %v3023
    %3570 = vmatpush1.bf16.msra.mxu0 %v3022
    %3571 = vmatprep.subr.bf16.mxu0 %v3032
    %3572 = vmatpush1.bf16.msra.mxu0 %v3031
    %3573 = vmatprep.subr.bf16.mxu0 %v3041
    %3574 = vmatpush1.bf16.msra.mxu0 %v3040
    %3575 = vmatprep.subr.bf16.mxu0 %v3050
    %3576 = vmatpush1.bf16.msra.mxu0 %v3049
    %3577 = vmatprep.subr.bf16.mxu0 %v3059
    %3578 = vmatpush1.bf16.msra.mxu0 %v3058
    %3579 = vmatprep.subr.bf16.mxu0 %v3068
    %3580 = vmatpush1.bf16.msra.mxu0 %v3067
    %3581 = vmatprep.subr.bf16.mxu0 %v3077
    %3582 = vmatpush1.bf16.msra.mxu0 %v3076
    %3583 = vmatprep.subr.bf16.mxu0 %v3086
    %3584 = vmatpush1.bf16.msra.mxu0 %v3085
    %3585 = vmatprep.subr.bf16.mxu0 %v3095
    %3586 = vmatpush1.bf16.msra.mxu0 %v3094
    %3587 = vmatprep.subr.bf16.mxu0 %v3104
    %3588 = vmatpush1.bf16.msra.mxu0 %v3103
    %3589 = vmatprep.subr.bf16.mxu0 %v3113
    %3590 = vmatpush1.bf16.msra.mxu0 %v3112
    %3591 = vmatprep.subr.bf16.mxu0 %v3122
    %3592 = vmatpush1.bf16.msra.mxu0 %v3121
    %3593 = vmatprep.subr.bf16.mxu0 %v3131
    %3594 = vmatpush1.bf16.msra.mxu0 %v3130
    %3595 = vmatprep.mubr.bf16.mxu0 %v2948
    %3596 = vmatmul.mubr.bf16.gmra.mrb[0].mxu0 %v2947
    %v3597 = vpop.f32.mrb[0].mxu0
    %v3598 = vadd.f32 %v3394, %v3597
    %v3599 = vpop.f32.mrb[0].mxu0
    %v3600 = vadd.f32 %v3396, %v3599
    %v3601 = vpop.f32.mrb[0].mxu0
    %v3602 = vpop.f32.mrb[0].mxu0
    %3603 = vdwg.mxu0
    %3604 = vmatprep.subr.bf16.mxu0 %v2998
    %3605 = vmatpush1.bf16.msra.mxu0 %v2997
    %3606 = vmatprep.subr.bf16.mxu0 %v3007
    %3607 = vmatpush1.bf16.msra.mxu0 %v3006
    %3608 = vmatprep.subr.bf16.mxu0 %v3016
    %3609 = vmatpush1.bf16.msra.mxu0 %v3015
    %3610 = vmatprep.subr.bf16.mxu0 %v3025
    %3611 = vmatpush1.bf16.msra.mxu0 %v3024
    %3612 = vmatprep.subr.bf16.mxu0 %v3034
    %3613 = vmatpush1.bf16.msra.mxu0 %v3033
    %3614 = vmatprep.subr.bf16.mxu0 %v3043
    %3615 = vmatpush1.bf16.msra.mxu0 %v3042
    %3616 = vmatprep.subr.bf16.mxu0 %v3052
    %3617 = vmatpush1.bf16.msra.mxu0 %v3051
    %3618 = vmatprep.subr.bf16.mxu0 %v3061
    %3619 = vmatpush1.bf16.msra.mxu0 %v3060
    %3620 = vmatprep.subr.bf16.mxu0 %v3070
    %3621 = vmatpush1.bf16.msra.mxu0 %v3069
    %3622 = vmatprep.subr.bf16.mxu0 %v3079
    %3623 = vmatpush1.bf16.msra.mxu0 %v3078
    %3624 = vmatprep.subr.bf16.mxu0 %v3088
    %3625 = vmatpush1.bf16.msra.mxu0 %v3087
    %3626 = vmatprep.subr.bf16.mxu0 %v3097
    %3627 = vmatpush1.bf16.msra.mxu0 %v3096
    %3628 = vmatprep.subr.bf16.mxu0 %v3106
    %3629 = vmatpush1.bf16.msra.mxu0 %v3105
    %3630 = vmatprep.subr.bf16.mxu0 %v3115
    %3631 = vmatpush1.bf16.msra.mxu0 %v3114
    %3632 = vmatprep.subr.bf16.mxu0 %v3124
    %3633 = vmatpush1.bf16.msra.mxu0 %v3123
    %3634 = vmatprep.subr.bf16.mxu0 %v3133
    %3635 = vmatpush1.bf16.msra.mxu0 %v3132
    %3636 = vmatprep.mubr.bf16.mxu0 %v2948
    %3637 = vmatmul.mubr.bf16.gmra.mrb[0].mxu0 %v2947
    %v3638 = vpop.f32.mrb[0].mxu0
    %v3639 = vadd.f32 %v3435, %v3638
    %v3640 = vpop.f32.mrb[0].mxu0
    %v3641 = vadd.f32 %v3437, %v3640
    %v3642 = vpop.f32.mrb[0].mxu0
    %v3643 = vpop.f32.mrb[0].mxu0
    %3644 = vdwg.mxu0
    %3645 = vmatprep.subr.bf16.mxu0 %v3000
    %3646 = vmatpush1.bf16.msra.mxu0 %v2999
    %3647 = vmatprep.subr.bf16.mxu0 %v3009
    %3648 = vmatpush1.bf16.msra.mxu0 %v3008
    %3649 = vmatprep.subr.bf16.mxu0 %v3018
    %3650 = vmatpush1.bf16.msra.mxu0 %v3017
    %3651 = vmatprep.subr.bf16.mxu0 %v3027
    %3652 = vmatpush1.bf16.msra.mxu0 %v3026
    %3653 = vmatprep.subr.bf16.mxu0 %v3036
    %3654 = vmatpush1.bf16.msra.mxu0 %v3035
    %3655 = vmatprep.subr.bf16.mxu0 %v3045
    %3656 = vmatpush1.bf16.msra.mxu0 %v3044
    %3657 = vmatprep.subr.bf16.mxu0 %v3054
    %3658 = vmatpush1.bf16.msra.mxu0 %v3053
    %3659 = vmatprep.subr.bf16.mxu0 %v3063
    %3660 = vmatpush1.bf16.msra.mxu0 %v3062
    %3661 = vmatprep.subr.bf16.mxu0 %v3072
    %3662 = vmatpush1.bf16.msra.mxu0 %v3071
    %3663 = vmatprep.subr.bf16.mxu0 %v3081
    %3664 = vmatpush1.bf16.msra.mxu0 %v3080
    %3665 = vmatprep.subr.bf16.mxu0 %v3090
    %3666 = vmatpush1.bf16.msra.mxu0 %v3089
    %3667 = vmatprep.subr.bf16.mxu0 %v3099
    %3668 = vmatpush1.bf16.msra.mxu0 %v3098
    %3669 = vmatprep.subr.bf16.mxu0 %v3108
    %3670 = vmatpush1.bf16.msra.mxu0 %v3107
    %3671 = vmatprep.subr.bf16.mxu0 %v3117
    %3672 = vmatpush1.bf16.msra.mxu0 %v3116
    %3673 = vmatprep.subr.bf16.mxu0 %v3126
    %3674 = vmatpush1.bf16.msra.mxu0 %v3125
    %3675 = vmatprep.subr.bf16.mxu0 %v3135
    %3676 = vmatpush1.bf16.msra.mxu0 %v3134
    %3677 = vmatprep.mubr.bf16.mxu0 %v2948
    %3678 = vmatmul.mubr.bf16.gmra.mrb[0].mxu0 %v2947
    %v3679 = vpop.f32.mrb[0].mxu0
    %v3680 = vadd.f32 %v3476, %v3679
    %v3681 = vpop.f32.mrb[0].mxu0
    %v3682 = vadd.f32 %v3478, %v3681
    %v3683 = vpop.f32.mrb[0].mxu0
    %v3684 = vpop.f32.mrb[0].mxu0
    %3685 = vdwg.mxu0
    %3686 = vmatprep.subr.bf16.mxu0 0
    %3687 = vmatpush1.bf16.msra.mxu0 %v3001
    %3688 = vmatprep.subr.bf16.mxu0 0
    %3689 = vmatpush1.bf16.msra.mxu0 %v3010
    %3690 = vmatprep.subr.bf16.mxu0 0
    %3691 = vmatpush1.bf16.msra.mxu0 %v3019
    %3692 = vmatprep.subr.bf16.mxu0 0
    %3693 = vmatpush1.bf16.msra.mxu0 %v3028
    %3694 = vmatprep.subr.bf16.mxu0 0
    %3695 = vmatpush1.bf16.msra.mxu0 %v3037
    %3696 = vmatprep.subr.bf16.mxu0 0
    %3697 = vmatpush1.bf16.msra.mxu0 %v3046
    %3698 = vmatprep.subr.bf16.mxu0 0
    %3699 = vmatpush1.bf16.msra.mxu0 %v3055
    %3700 = vmatprep.subr.bf16.mxu0 0
    %3701 = vmatpush1.bf16.msra.mxu0 %v3064
    %3702 = vmatprep.subr.bf16.mxu0 0
    %3703 = vmatpush1.bf16.msra.mxu0 %v3073
    %3704 = vmatprep.subr.bf16.mxu0 0
    %3705 = vmatpush1.bf16.msra.mxu0 %v3082
    %3706 = vmatprep.subr.bf16.mxu0 0
    %3707 = vmatpush1.bf16.msra.mxu0 %v3091
    %3708 = vmatprep.subr.bf16.mxu0 0
    %3709 = vmatpush1.bf16.msra.mxu0 %v3100
    %3710 = vmatprep.subr.bf16.mxu0 0
    %3711 = vmatpush1.bf16.msra.mxu0 %v3109
    %3712 = vmatprep.subr.bf16.mxu0 0
    %3713 = vmatpush1.bf16.msra.mxu0 %v3118
    %3714 = vmatprep.subr.bf16.mxu0 0
    %3715 = vmatpush1.bf16.msra.mxu0 %v3127
    %3716 = vmatprep.subr.bf16.mxu0 0
    %3717 = vmatpush1.bf16.msra.mxu0 %v3136
    %3718 = vmatprep.mubr.bf16.mxu0 %v2948
    %3719 = vmatmul.mubr.bf16.gmra.mrb[0].mxu0 %v2947
    %v3720 = vpop.f32.mrb[0].mxu0
    %v3721 = vadd.f32 %v3517, %v3720
    %v3722 = vpop.f32.mrb[0].mxu0
    %v3723 = vpop.f32.mrb[0].mxu0
    %v3724 = vpop.f32.mrb[0].mxu0
    %3725 = vdwg.mxu0
    %s3726 = sshll.u32 %s2955, 4
    %3727 = dma.done %s106, %s3726
    %v3728 = vld [vmem:[%s105] sm:$0xff]
    %v3729 = vld [vmem:[%s105 + $0x8] sm:$0xff]
    %v3730 = vld [vmem:[%s105 + $0x10] sm:$0xff]
    %v3731 = vld [vmem:[%s105 + $0x18] sm:$0xff]
    %v3732 = vld [vmem:[%s105 + $0x20] sm:$0xff]
    %v3733 = vld [vmem:[%s105 + $0x28] sm:$0xff]
    %v3734 = vld [vmem:[%s105 + $0x30] sm:$0xff]
    %v3735 = vld [vmem:[%s105 + $0x38] sm:$0xff]
    %v3736 = vld [vmem:[%s105 + $0x40] sm:$0xff]
    %v3737 = vld [vmem:[%s105 + $0x48] sm:$0xff]
    %v3738 = vld [vmem:[%s105 + $0x50] sm:$0xff]
    %v3739 = vld [vmem:[%s105 + $0x58] sm:$0xff]
    %v3740 = vld [vmem:[%s105 + $0x60] sm:$0xff]
    %v3741 = vld [vmem:[%s105 + $0x68] sm:$0xff]
    %v3742 = vld [vmem:[%s105 + $0x70] sm:$0xff]
    %v3743 = vld [vmem:[%s105 + $0x78] sm:$0xff]
    %v3744 = vld [vmem:[%s105 + $0x80] sm:$0xff]
    %v3745 = vld [vmem:[%s105 + $0x88] sm:$0xff]
    %v3746 = vld [vmem:[%s105 + $0x90] sm:$0xff]
    %v3747 = vld [vmem:[%s105 + $0x98] sm:$0xff]
    %v3748 = vld [vmem:[%s105 + $0xa0] sm:$0xff]
    %v3749 = vld [vmem:[%s105 + $0xa8] sm:$0xff]
    %v3750 = vld [vmem:[%s105 + $0xb0] sm:$0xff]
    %v3751 = vld [vmem:[%s105 + $0xb8] sm:$0xff]
    %v3752 = vld [vmem:[%s105 + $0xc0] sm:$0xff]
    %v3753 = vld [vmem:[%s105 + $0xc8] sm:$0xff]
    %v3754 = vld [vmem:[%s105 + $0xd0] sm:$0xff]
    %v3755 = vld [vmem:[%s105 + $0xd8] sm:$0xff]
    %v3756 = vld [vmem:[%s105 + $0xe0] sm:$0xff]
    %v3757 = vld [vmem:[%s105 + $0xe8] sm:$0xff]
    %v3758 = vld [vmem:[%s105 + $0xf0] sm:$0xff]
    %v3759 = vld [vmem:[%s105 + $0xf8] sm:$0xff]
    %v3760 = vld [vmem:[%s105 + $0x100] sm:$0xff]
    %v3761 = vld [vmem:[%s105 + $0x108] sm:$0xff]
    %v3762 = vld [vmem:[%s105 + $0x110] sm:$0xff]
    %v3763 = vld [vmem:[%s105 + $0x118] sm:$0xff]
    %v3764 = vld [vmem:[%s105 + $0x120] sm:$0xff]
    %v3765 = vld [vmem:[%s105 + $0x128] sm:$0xff]
    %v3766 = vld [vmem:[%s105 + $0x130] sm:$0xff]
    %v3767 = vld [vmem:[%s105 + $0x138] sm:$0xff]
    %v3768 = vld [vmem:[%s105 + $0x140] sm:$0xff]
    %v3769 = vld [vmem:[%s105 + $0x148] sm:$0xff]
    %v3770 = vld [vmem:[%s105 + $0x150] sm:$0xff]
    %v3771 = vld [vmem:[%s105 + $0x158] sm:$0xff]
    %v3772 = vld [vmem:[%s105 + $0x160] sm:$0xff]
    %v3773 = vld [vmem:[%s105 + $0x168] sm:$0xff]
    %v3774 = vld [vmem:[%s105 + $0x170] sm:$0xff]
    %v3775 = vld [vmem:[%s105 + $0x178] sm:$0xff]
    %v3776 = vld [vmem:[%s105 + $0x180] sm:$0xff]
    %v3777 = vld [vmem:[%s105 + $0x188] sm:$0xff]
    %v3778 = vld [vmem:[%s105 + $0x190] sm:$0xff]
    %v3779 = vld [vmem:[%s105 + $0x198] sm:$0xff]
    %v3780 = vld [vmem:[%s105 + $0x1a0] sm:$0xff]
    %v3781 = vld [vmem:[%s105 + $0x1a8] sm:$0xff]
    %v3782 = vld [vmem:[%s105 + $0x1b0] sm:$0xff]
    %v3783 = vld [vmem:[%s105 + $0x1b8] sm:$0xff]
    %v3784 = vld [vmem:[%s105 + $0x1c0] sm:$0xff]
    %v3785 = vld [vmem:[%s105 + $0x1c8] sm:$0xff]
    %v3786 = vld [vmem:[%s105 + $0x1d0] sm:$0xff]
    %v3787 = vld [vmem:[%s105 + $0x1d8] sm:$0xff]
    %v3788 = vld [vmem:[%s105 + $0x1e0] sm:$0xff]
    %v3789 = vld [vmem:[%s105 + $0x1e8] sm:$0xff]
    %v3790 = vld [vmem:[%s105 + $0x1f0] sm:$0xff]
    %v3791 = vld [vmem:[%s105 + $0x1f8] sm:$0xff]
    %v3792 = vld [vmem:[%s105 + $0x200] sm:$0xff]
    %v3793 = vld [vmem:[%s105 + $0x208] sm:$0xff]
    %v3794 = vld [vmem:[%s105 + $0x210] sm:$0xff]
    %v3795 = vld [vmem:[%s105 + $0x218] sm:$0xff]
    %v3796 = vld [vmem:[%s105 + $0x220] sm:$0xff]
    %v3797 = vld [vmem:[%s105 + $0x228] sm:$0xff]
    %v3798 = vld [vmem:[%s105 + $0x230] sm:$0xff]
    %v3799 = vld [vmem:[%s105 + $0x238] sm:$0xff]
    %v3800 = vld [vmem:[%s105 + $0x240] sm:$0xff]
    %v3801 = vld [vmem:[%s105 + $0x248] sm:$0xff]
    %v3802 = vld [vmem:[%s105 + $0x250] sm:$0xff]
    %v3803 = vld [vmem:[%s105 + $0x258] sm:$0xff]
    %v3804 = vld [vmem:[%s105 + $0x260] sm:$0xff]
    %v3805 = vld [vmem:[%s105 + $0x268] sm:$0xff]
    %v3806 = vld [vmem:[%s105 + $0x270] sm:$0xff]
    %v3807 = vld [vmem:[%s105 + $0x278] sm:$0xff]
    %v3808 = vld [vmem:[%s105 + $0x280] sm:$0xff]
    %v3809 = vld [vmem:[%s105 + $0x288] sm:$0xff]
    %v3810 = vld [vmem:[%s105 + $0x290] sm:$0xff]
    %v3811 = vld [vmem:[%s105 + $0x298] sm:$0xff]
    %v3812 = vld [vmem:[%s105 + $0x2a0] sm:$0xff]
    %v3813 = vld [vmem:[%s105 + $0x2a8] sm:$0xff]
    %v3814 = vld [vmem:[%s105 + $0x2b0] sm:$0xff]
    %v3815 = vld [vmem:[%s105 + $0x2b8] sm:$0xff]
    %v3816 = vld [vmem:[%s105 + $0x2c0] sm:$0xff]
    %v3817 = vld [vmem:[%s105 + $0x2c8] sm:$0xff]
    %v3818 = vld [vmem:[%s105 + $0x2d0] sm:$0xff]
    %v3819 = vld [vmem:[%s105 + $0x2d8] sm:$0xff]
    %v3820 = vld [vmem:[%s105 + $0x2e0] sm:$0xff]
    %v3821 = vld [vmem:[%s105 + $0x2e8] sm:$0xff]
    %v3822 = vld [vmem:[%s105 + $0x2f0] sm:$0xff]
    %v3823 = vld [vmem:[%s105 + $0x2f8] sm:$0xff]
    %v3824 = vld [vmem:[%s105 + $0x300] sm:$0xff]
    %v3825 = vld [vmem:[%s105 + $0x308] sm:$0xff]
    %v3826 = vld [vmem:[%s105 + $0x310] sm:$0xff]
    %v3827 = vld [vmem:[%s105 + $0x318] sm:$0xff]
    %v3828 = vld [vmem:[%s105 + $0x320] sm:$0xff]
    %v3829 = vld [vmem:[%s105 + $0x328] sm:$0xff]
    %v3830 = vld [vmem:[%s105 + $0x330] sm:$0xff]
    %v3831 = vld [vmem:[%s105 + $0x338] sm:$0xff]
    %v3832 = vld [vmem:[%s105 + $0x340] sm:$0xff]
    %v3833 = vld [vmem:[%s105 + $0x348] sm:$0xff]
    %v3834 = vld [vmem:[%s105 + $0x350] sm:$0xff]
    %v3835 = vld [vmem:[%s105 + $0x358] sm:$0xff]
    %v3836 = vld [vmem:[%s105 + $0x360] sm:$0xff]
    %v3837 = vld [vmem:[%s105 + $0x368] sm:$0xff]
    %v3838 = vld [vmem:[%s105 + $0x370] sm:$0xff]
    %v3839 = vld [vmem:[%s105 + $0x378] sm:$0xff]
    %v3840 = vld [vmem:[%s105 + $0x380] sm:$0xff]
    %v3841 = vld [vmem:[%s105 + $0x388] sm:$0xff]
    %v3842 = vld [vmem:[%s105 + $0x390] sm:$0xff]
    %v3843 = vld [vmem:[%s105 + $0x398] sm:$0xff]
    %v3844 = vld [vmem:[%s105 + $0x3a0] sm:$0xff]
    %v3845 = vld [vmem:[%s105 + $0x3a8] sm:$0xff]
    %v3846 = vld [vmem:[%s105 + $0x3b0] sm:$0xff]
    %v3847 = vld [vmem:[%s105 + $0x3b8] sm:$0xff]
    %v3848 = vld [vmem:[%s105 + $0x3c0] sm:$0xff]
    %v3849 = vld [vmem:[%s105 + $0x3c8] sm:$0xff]
    %v3850 = vld [vmem:[%s105 + $0x3d0] sm:$0xff]
    %v3851 = vld [vmem:[%s105 + $0x3d8] sm:$0xff]
    %v3852 = vld [vmem:[%s105 + $0x3e0] sm:$0xff]
    %v3853 = vld [vmem:[%s105 + $0x3e8] sm:$0xff]
    %v3854 = vld [vmem:[%s105 + $0x3f0] sm:$0xff]
    %v3855 = vld [vmem:[%s105 + $0x3f8] sm:$0xff]
    %v3856 = vld [vmem:[%s105 + $0x400] sm:$0xff]
    %v3857 = vld [vmem:[%s105 + $0x408] sm:$0xff]
    %v3858 = vld [vmem:[%s105 + $0x410] sm:$0xff]
    %v3859 = vld [vmem:[%s105 + $0x418] sm:$0xff]
    %v3860 = vld [vmem:[%s105 + $0x420] sm:$0xff]
    %v3861 = vld [vmem:[%s105 + $0x428] sm:$0xff]
    %v3862 = vld [vmem:[%s105 + $0x430] sm:$0xff]
    %v3863 = vld [vmem:[%s105 + $0x438] sm:$0xff]
    %v3864 = vld [vmem:[%s105 + $0x440] sm:$0xff]
    %v3865 = vld [vmem:[%s105 + $0x448] sm:$0xff]
    %v3866 = vld [vmem:[%s105 + $0x450] sm:$0xff]
    %v3867 = vld [vmem:[%s105 + $0x458] sm:$0xff]
    %v3868 = vld [vmem:[%s105 + $0x460] sm:$0xff]
    %v3869 = vld [vmem:[%s105 + $0x468] sm:$0xff]
    %v3870 = vld [vmem:[%s105 + $0x470] sm:$0xff]
    %v3871 = vld [vmem:[%s105 + $0x478] sm:$0xff]
    %3872 = vmatprep.subr.bf16.mxu0 %v3729
    %3873 = vmatpush1.bf16.msra.mxu0 %v3728
    %3874 = vmatprep.subr.bf16.mxu0 %v3738
    %3875 = vmatpush1.bf16.msra.mxu0 %v3737
    %3876 = vmatprep.subr.bf16.mxu0 %v3747
    %3877 = vmatpush1.bf16.msra.mxu0 %v3746
    %3878 = vmatprep.subr.bf16.mxu0 %v3756
    %3879 = vmatpush1.bf16.msra.mxu0 %v3755
    %3880 = vmatprep.subr.bf16.mxu0 %v3765
    %3881 = vmatpush1.bf16.msra.mxu0 %v3764
    %3882 = vmatprep.subr.bf16.mxu0 %v3774
    %3883 = vmatpush1.bf16.msra.mxu0 %v3773
    %3884 = vmatprep.subr.bf16.mxu0 %v3783
    %3885 = vmatpush1.bf16.msra.mxu0 %v3782
    %3886 = vmatprep.subr.bf16.mxu0 %v3792
    %3887 = vmatpush1.bf16.msra.mxu0 %v3791
    %3888 = vmatprep.subr.bf16.mxu0 %v3801
    %3889 = vmatpush1.bf16.msra.mxu0 %v3800
    %3890 = vmatprep.subr.bf16.mxu0 %v3810
    %3891 = vmatpush1.bf16.msra.mxu0 %v3809
    %3892 = vmatprep.subr.bf16.mxu0 %v3819
    %3893 = vmatpush1.bf16.msra.mxu0 %v3818
    %3894 = vmatprep.subr.bf16.mxu0 %v3828
    %3895 = vmatpush1.bf16.msra.mxu0 %v3827
    %3896 = vmatprep.subr.bf16.mxu0 %v3837
    %3897 = vmatpush1.bf16.msra.mxu0 %v3836
    %3898 = vmatprep.subr.bf16.mxu0 %v3846
    %3899 = vmatpush1.bf16.msra.mxu0 %v3845
    %3900 = vmatprep.subr.bf16.mxu0 %v3855
    %3901 = vmatpush1.bf16.msra.mxu0 %v3854
    %3902 = vmatprep.subr.bf16.mxu0 %v3864
    %3903 = vmatpush1.bf16.msra.mxu0 %v3863
    %3904 = vmatprep.mubr.bf16.mxu0 %v2952
    %3905 = vmatmul.mubr.bf16.gmra.mrb[0].mxu0 %v2951
    %v3906 = vpop.f32.mrb[0].mxu0
    %v3907 = vadd.f32 0.0, %v3906
    %v3908 = vpop.f32.mrb[0].mxu0
    %v3909 = vadd.f32 0.0, %v3908
    %v3910 = vpop.f32.mrb[0].mxu0
    %v3911 = vpop.f32.mrb[0].mxu0
    %3912 = vdwg.mxu0
    %3913 = vmatprep.subr.bf16.mxu0 %v3731
    %3914 = vmatpush1.bf16.msra.mxu0 %v3730
    %3915 = vmatprep.subr.bf16.mxu0 %v3740
    %3916 = vmatpush1.bf16.msra.mxu0 %v3739
    %3917 = vmatprep.subr.bf16.mxu0 %v3749
    %3918 = vmatpush1.bf16.msra.mxu0 %v3748
    %3919 = vmatprep.subr.bf16.mxu0 %v3758
    %3920 = vmatpush1.bf16.msra.mxu0 %v3757
    %3921 = vmatprep.subr.bf16.mxu0 %v3767
    %3922 = vmatpush1.bf16.msra.mxu0 %v3766
    %3923 = vmatprep.subr.bf16.mxu0 %v3776
    %3924 = vmatpush1.bf16.msra.mxu0 %v3775
    %3925 = vmatprep.subr.bf16.mxu0 %v3785
    %3926 = vmatpush1.bf16.msra.mxu0 %v3784
    %3927 = vmatprep.subr.bf16.mxu0 %v3794
    %3928 = vmatpush1.bf16.msra.mxu0 %v3793
    %3929 = vmatprep.subr.bf16.mxu0 %v3803
    %3930 = vmatpush1.bf16.msra.mxu0 %v3802
    %3931 = vmatprep.subr.bf16.mxu0 %v3812
    %3932 = vmatpush1.bf16.msra.mxu0 %v3811
    %3933 = vmatprep.subr.bf16.mxu0 %v3821
    %3934 = vmatpush1.bf16.msra.mxu0 %v3820
    %3935 = vmatprep.subr.bf16.mxu0 %v3830
    %3936 = vmatpush1.bf16.msra.mxu0 %v3829
    %3937 = vmatprep.subr.bf16.mxu0 %v3839
    %3938 = vmatpush1.bf16.msra.mxu0 %v3838
    %3939 = vmatprep.subr.bf16.mxu0 %v3848
    %3940 = vmatpush1.bf16.msra.mxu0 %v3847
    %3941 = vmatprep.subr.bf16.mxu0 %v3857
    %3942 = vmatpush1.bf16.msra.mxu0 %v3856
    %3943 = vmatprep.subr.bf16.mxu0 %v3866
    %3944 = vmatpush1.bf16.msra.mxu0 %v3865
    %3945 = vmatprep.mubr.bf16.mxu0 %v2952
    %3946 = vmatmul.mubr.bf16.gmra.mrb[0].mxu0 %v2951
    %v3947 = vpop.f32.mrb[0].mxu0
    %v3948 = vadd.f32 0.0, %v3947
    %v3949 = vpop.f32.mrb[0].mxu0
    %v3950 = vadd.f32 0.0, %v3949
    %v3951 = vpop.f32.mrb[0].mxu0
    %v3952 = vpop.f32.mrb[0].mxu0
    %3953 = vdwg.mxu0
    %3954 = vmatprep.subr.bf16.mxu0 %v3733
    %3955 = vmatpush1.bf16.msra.mxu0 %v3732
    %3956 = vmatprep.subr.bf16.mxu0 %v3742
    %3957 = vmatpush1.bf16.msra.mxu0 %v3741
    %3958 = vmatprep.subr.bf16.mxu0 %v3751
    %3959 = vmatpush1.bf16.msra.mxu0 %v3750
    %3960 = vmatprep.subr.bf16.mxu0 %v3760
    %3961 = vmatpush1.bf16.msra.mxu0 %v3759
    %3962 = vmatprep.subr.bf16.mxu0 %v3769
    %3963 = vmatpush1.bf16.msra.mxu0 %v3768
    %3964 = vmatprep.subr.bf16.mxu0 %v3778
    %3965 = vmatpush1.bf16.msra.mxu0 %v3777
    %3966 = vmatprep.subr.bf16.mxu0 %v3787
    %3967 = vmatpush1.bf16.msra.mxu0 %v3786
    %3968 = vmatprep.subr.bf16.mxu0 %v3796
    %3969 = vmatpush1.bf16.msra.mxu0 %v3795
    %3970 = vmatprep.subr.bf16.mxu0 %v3805
    %3971 = vmatpush1.bf16.msra.mxu0 %v3804
    %3972 = vmatprep.subr.bf16.mxu0 %v3814
    %3973 = vmatpush1.bf16.msra.mxu0 %v3813
    %3974 = vmatprep.subr.bf16.mxu0 %v3823
    %3975 = vmatpush1.bf16.msra.mxu0 %v3822
    %3976 = vmatprep.subr.bf16.mxu0 %v3832
    %3977 = vmatpush1.bf16.msra.mxu0 %v3831
    %3978 = vmatprep.subr.bf16.mxu0 %v3841
    %3979 = vmatpush1.bf16.msra.mxu0 %v3840
    %3980 = vmatprep.subr.bf16.mxu0 %v3850
    %3981 = vmatpush1.bf16.msra.mxu0 %v3849
    %3982 = vmatprep.subr.bf16.mxu0 %v3859
    %3983 = vmatpush1.bf16.msra.mxu0 %v3858
    %3984 = vmatprep.subr.bf16.mxu0 %v3868
    %3985 = vmatpush1.bf16.msra.mxu0 %v3867
    %3986 = vmatprep.mubr.bf16.mxu0 %v2952
    %3987 = vmatmul.mubr.bf16.gmra.mrb[0].mxu0 %v2951
    %v3988 = vpop.f32.mrb[0].mxu0
    %v3989 = vadd.f32 0.0, %v3988
    %v3990 = vpop.f32.mrb[0].mxu0
    %v3991 = vadd.f32 0.0, %v3990
    %v3992 = vpop.f32.mrb[0].mxu0
    %v3993 = vpop.f32.mrb[0].mxu0
    %3994 = vdwg.mxu0
    %3995 = vmatprep.subr.bf16.mxu0 %v3735
    %3996 = vmatpush1.bf16.msra.mxu0 %v3734
    %3997 = vmatprep.subr.bf16.mxu0 %v3744
    %3998 = vmatpush1.bf16.msra.mxu0 %v3743
    %3999 = vmatprep.subr.bf16.mxu0 %v3753
    %4000 = vmatpush1.bf16.msra.mxu0 %v3752
    %4001 = vmatprep.subr.bf16.mxu0 %v3762
    %4002 = vmatpush1.bf16.msra.mxu0 %v3761
    %4003 = vmatprep.subr.bf16.mxu0 %v3771
    %4004 = vmatpush1.bf16.msra.mxu0 %v3770
    %4005 = vmatprep.subr.bf16.mxu0 %v3780
    %4006 = vmatpush1.bf16.msra.mxu0 %v3779
    %4007 = vmatprep.subr.bf16.mxu0 %v3789
    %4008 = vmatpush1.bf16.msra.mxu0 %v3788
    %4009 = vmatprep.subr.bf16.mxu0 %v3798
    %4010 = vmatpush1.bf16.msra.mxu0 %v3797
    %4011 = vmatprep.subr.bf16.mxu0 %v3807
    %4012 = vmatpush1.bf16.msra.mxu0 %v3806
    %4013 = vmatprep.subr.bf16.mxu0 %v3816
    %4014 = vmatpush1.bf16.msra.mxu0 %v3815
    %4015 = vmatprep.subr.bf16.mxu0 %v3825
    %4016 = vmatpush1.bf16.msra.mxu0 %v3824
    %4017 = vmatprep.subr.bf16.mxu0 %v3834
    %4018 = vmatpush1.bf16.msra.mxu0 %v3833
    %4019 = vmatprep.subr.bf16.mxu0 %v3843
    %4020 = vmatpush1.bf16.msra.mxu0 %v3842
    %4021 = vmatprep.subr.bf16.mxu0 %v3852
    %4022 = vmatpush1.bf16.msra.mxu0 %v3851
    %4023 = vmatprep.subr.bf16.mxu0 %v3861
    %4024 = vmatpush1.bf16.msra.mxu0 %v3860
    %4025 = vmatprep.subr.bf16.mxu0 %v3870
    %4026 = vmatpush1.bf16.msra.mxu0 %v3869
    %4027 = vmatprep.mubr.bf16.mxu0 %v2952
    %4028 = vmatmul.mubr.bf16.gmra.mrb[0].mxu0 %v2951
    %v4029 = vpop.f32.mrb[0].mxu0
    %v4030 = vadd.f32 0.0, %v4029
    %v4031 = vpop.f32.mrb[0].mxu0
    %v4032 = vadd.f32 0.0, %v4031
    %v4033 = vpop.f32.mrb[0].mxu0
    %v4034 = vpop.f32.mrb[0].mxu0
    %4035 = vdwg.mxu0
    %4036 = vmatprep.subr.bf16.mxu0 0
    %4037 = vmatpush1.bf16.msra.mxu0 %v3736
    %4038 = vmatprep.subr.bf16.mxu0 0
    %4039 = vmatpush1.bf16.msra.mxu0 %v3745
    %4040 = vmatprep.subr.bf16.mxu0 0
    %4041 = vmatpush1.bf16.msra.mxu0 %v3754
    %4042 = vmatprep.subr.bf16.mxu0 0
    %4043 = vmatpush1.bf16.msra.mxu0 %v3763
    %4044 = vmatprep.subr.bf16.mxu0 0
    %4045 = vmatpush1.bf16.msra.mxu0 %v3772
    %4046 = vmatprep.subr.bf16.mxu0 0
    %4047 = vmatpush1.bf16.msra.mxu0 %v3781
    %4048 = vmatprep.subr.bf16.mxu0 0
    %4049 = vmatpush1.bf16.msra.mxu0 %v3790
    %4050 = vmatprep.subr.bf16.mxu0 0
    %4051 = vmatpush1.bf16.msra.mxu0 %v3799
    %4052 = vmatprep.subr.bf16.mxu0 0
    %4053 = vmatpush1.bf16.msra.mxu0 %v3808
    %4054 = vmatprep.subr.bf16.mxu0 0
    %4055 = vmatpush1.bf16.msra.mxu0 %v3817
    %4056 = vmatprep.subr.bf16.mxu0 0
    %4057 = vmatpush1.bf16.msra.mxu0 %v3826
    %4058 = vmatprep.subr.bf16.mxu0 0
    %4059 = vmatpush1.bf16.msra.mxu0 %v3835
    %4060 = vmatprep.subr.bf16.mxu0 0
    %4061 = vmatpush1.bf16.msra.mxu0 %v3844
    %4062 = vmatprep.subr.bf16.mxu0 0
    %4063 = vmatpush1.bf16.msra.mxu0 %v3853
    %4064 = vmatprep.subr.bf16.mxu0 0
    %4065 = vmatpush1.bf16.msra.mxu0 %v3862
    %4066 = vmatprep.subr.bf16.mxu0 0
    %4067 = vmatpush1.bf16.msra.mxu0 %v3871
    %4068 = vmatprep.mubr.bf16.mxu0 %v2952
    %4069 = vmatmul.mubr.bf16.gmra.mrb[0].mxu0 %v2951
    %v4070 = vpop.f32.mrb[0].mxu0
    %v4071 = vadd.f32 0.0, %v4070
    %v4072 = vpop.f32.mrb[0].mxu0
    %v4073 = vpop.f32.mrb[0].mxu0
    %v4074 = vpop.f32.mrb[0].mxu0
    %4075 = vdwg.mxu0
    %v4076 = vadd.f32 %v3557, %v3907
    %v4077 = vadd.f32 %v3559, %v3909
    %v4078 = vadd.f32 %v3598, %v3948
    %v4079 = vadd.f32 %v3600, %v3950
    %v4080 = vadd.f32 %v3639, %v3989
    %v4081 = vadd.f32 %v3641, %v3991
    %v4082 = vadd.f32 %v3680, %v4030
    %v4083 = vadd.f32 %v3682, %v4032
    %v4084 = vadd.f32 %v3721, %v4071
    %s4085 = sshll.u32 %s2955, 4
    %4086 = dma.done %s163, %s4085
    %v4087 = vld [vmem:[%s162] sm:$0xff]
    %v4088 = vld [vmem:[%s162 + $0x8] sm:$0xff]
    %v4089 = vld [vmem:[%s162 + $0x10] sm:$0xff]
    %v4090 = vld [vmem:[%s162 + $0x18] sm:$0xff]
    %v4091 = vld [vmem:[%s162 + $0x20] sm:$0xff]
    %v4092 = vld [vmem:[%s162 + $0x28] sm:$0xff]
    %v4093 = vld [vmem:[%s162 + $0x30] sm:$0xff]
    %v4094 = vld [vmem:[%s162 + $0x38] sm:$0xff]
    %v4095 = vld [vmem:[%s162 + $0x40] sm:$0xff]
    %v4096 = vld [vmem:[%s162 + $0x48] sm:$0xff]
    %v4097 = vld [vmem:[%s162 + $0x50] sm:$0xff]
    %v4098 = vld [vmem:[%s162 + $0x58] sm:$0xff]
    %v4099 = vld [vmem:[%s162 + $0x60] sm:$0xff]
    %v4100 = vld [vmem:[%s162 + $0x68] sm:$0xff]
    %v4101 = vld [vmem:[%s162 + $0x70] sm:$0xff]
    %v4102 = vld [vmem:[%s162 + $0x78] sm:$0xff]
    %v4103 = vld [vmem:[%s162 + $0x80] sm:$0xff]
    %v4104 = vld [vmem:[%s162 + $0x88] sm:$0xff]
    %v4105 = vld [vmem:[%s162 + $0x90] sm:$0xff]
    %v4106 = vld [vmem:[%s162 + $0x98] sm:$0xff]
    %v4107 = vld [vmem:[%s162 + $0xa0] sm:$0xff]
    %v4108 = vld [vmem:[%s162 + $0xa8] sm:$0xff]
    %v4109 = vld [vmem:[%s162 + $0xb0] sm:$0xff]
    %v4110 = vld [vmem:[%s162 + $0xb8] sm:$0xff]
    %v4111 = vld [vmem:[%s162 + $0xc0] sm:$0xff]
    %v4112 = vld [vmem:[%s162 + $0xc8] sm:$0xff]
    %v4113 = vld [vmem:[%s162 + $0xd0] sm:$0xff]
    %v4114 = vld [vmem:[%s162 + $0xd8] sm:$0xff]
    %v4115 = vld [vmem:[%s162 + $0xe0] sm:$0xff]
    %v4116 = vld [vmem:[%s162 + $0xe8] sm:$0xff]
    %v4117 = vld [vmem:[%s162 + $0xf0] sm:$0xff]
    %v4118 = vld [vmem:[%s162 + $0xf8] sm:$0xff]
    %v4119 = vld [vmem:[%s162 + $0x100] sm:$0xff]
    %v4120 = vld [vmem:[%s162 + $0x108] sm:$0xff]
    %v4121 = vld [vmem:[%s162 + $0x110] sm:$0xff]
    %v4122 = vld [vmem:[%s162 + $0x118] sm:$0xff]
    %v4123 = vld [vmem:[%s162 + $0x120] sm:$0xff]
    %v4124 = vld [vmem:[%s162 + $0x128] sm:$0xff]
    %v4125 = vld [vmem:[%s162 + $0x130] sm:$0xff]
    %v4126 = vld [vmem:[%s162 + $0x138] sm:$0xff]
    %v4127 = vld [vmem:[%s162 + $0x140] sm:$0xff]
    %v4128 = vld [vmem:[%s162 + $0x148] sm:$0xff]
    %v4129 = vld [vmem:[%s162 + $0x150] sm:$0xff]
    %v4130 = vld [vmem:[%s162 + $0x158] sm:$0xff]
    %v4131 = vld [vmem:[%s162 + $0x160] sm:$0xff]
    %v4132 = vld [vmem:[%s162 + $0x168] sm:$0xff]
    %v4133 = vld [vmem:[%s162 + $0x170] sm:$0xff]
    %v4134 = vld [vmem:[%s162 + $0x178] sm:$0xff]
    %v4135 = vld [vmem:[%s162 + $0x180] sm:$0xff]
    %v4136 = vld [vmem:[%s162 + $0x188] sm:$0xff]
    %v4137 = vld [vmem:[%s162 + $0x190] sm:$0xff]
    %v4138 = vld [vmem:[%s162 + $0x198] sm:$0xff]
    %v4139 = vld [vmem:[%s162 + $0x1a0] sm:$0xff]
    %v4140 = vld [vmem:[%s162 + $0x1a8] sm:$0xff]
    %v4141 = vld [vmem:[%s162 + $0x1b0] sm:$0xff]
    %v4142 = vld [vmem:[%s162 + $0x1b8] sm:$0xff]
    %v4143 = vld [vmem:[%s162 + $0x1c0] sm:$0xff]
    %v4144 = vld [vmem:[%s162 + $0x1c8] sm:$0xff]
    %v4145 = vld [vmem:[%s162 + $0x1d0] sm:$0xff]
    %v4146 = vld [vmem:[%s162 + $0x1d8] sm:$0xff]
    %v4147 = vld [vmem:[%s162 + $0x1e0] sm:$0xff]
    %v4148 = vld [vmem:[%s162 + $0x1e8] sm:$0xff]
    %v4149 = vld [vmem:[%s162 + $0x1f0] sm:$0xff]
    %v4150 = vld [vmem:[%s162 + $0x1f8] sm:$0xff]
    %v4151 = vld [vmem:[%s162 + $0x200] sm:$0xff]
    %v4152 = vld [vmem:[%s162 + $0x208] sm:$0xff]
    %v4153 = vld [vmem:[%s162 + $0x210] sm:$0xff]
    %v4154 = vld [vmem:[%s162 + $0x218] sm:$0xff]
    %v4155 = vld [vmem:[%s162 + $0x220] sm:$0xff]
    %v4156 = vld [vmem:[%s162 + $0x228] sm:$0xff]
    %v4157 = vld [vmem:[%s162 + $0x230] sm:$0xff]
    %v4158 = vld [vmem:[%s162 + $0x238] sm:$0xff]
    %v4159 = vld [vmem:[%s162 + $0x240] sm:$0xff]
    %v4160 = vld [vmem:[%s162 + $0x248] sm:$0xff]
    %v4161 = vld [vmem:[%s162 + $0x250] sm:$0xff]
    %v4162 = vld [vmem:[%s162 + $0x258] sm:$0xff]
    %v4163 = vld [vmem:[%s162 + $0x260] sm:$0xff]
    %v4164 = vld [vmem:[%s162 + $0x268] sm:$0xff]
    %v4165 = vld [vmem:[%s162 + $0x270] sm:$0xff]
    %v4166 = vld [vmem:[%s162 + $0x278] sm:$0xff]
    %v4167 = vld [vmem:[%s162 + $0x280] sm:$0xff]
    %v4168 = vld [vmem:[%s162 + $0x288] sm:$0xff]
    %v4169 = vld [vmem:[%s162 + $0x290] sm:$0xff]
    %v4170 = vld [vmem:[%s162 + $0x298] sm:$0xff]
    %v4171 = vld [vmem:[%s162 + $0x2a0] sm:$0xff]
    %v4172 = vld [vmem:[%s162 + $0x2a8] sm:$0xff]
    %v4173 = vld [vmem:[%s162 + $0x2b0] sm:$0xff]
    %v4174 = vld [vmem:[%s162 + $0x2b8] sm:$0xff]
    %v4175 = vld [vmem:[%s162 + $0x2c0] sm:$0xff]
    %v4176 = vld [vmem:[%s162 + $0x2c8] sm:$0xff]
    %v4177 = vld [vmem:[%s162 + $0x2d0] sm:$0xff]
    %v4178 = vld [vmem:[%s162 + $0x2d8] sm:$0xff]
    %v4179 = vld [vmem:[%s162 + $0x2e0] sm:$0xff]
    %v4180 = vld [vmem:[%s162 + $0x2e8] sm:$0xff]
    %v4181 = vld [vmem:[%s162 + $0x2f0] sm:$0xff]
    %v4182 = vld [vmem:[%s162 + $0x2f8] sm:$0xff]
    %v4183 = vld [vmem:[%s162 + $0x300] sm:$0xff]
    %v4184 = vld [vmem:[%s162 + $0x308] sm:$0xff]
    %v4185 = vld [vmem:[%s162 + $0x310] sm:$0xff]
    %v4186 = vld [vmem:[%s162 + $0x318] sm:$0xff]
    %v4187 = vld [vmem:[%s162 + $0x320] sm:$0xff]
    %v4188 = vld [vmem:[%s162 + $0x328] sm:$0xff]
    %v4189 = vld [vmem:[%s162 + $0x330] sm:$0xff]
    %v4190 = vld [vmem:[%s162 + $0x338] sm:$0xff]
    %v4191 = vld [vmem:[%s162 + $0x340] sm:$0xff]
    %v4192 = vld [vmem:[%s162 + $0x348] sm:$0xff]
    %v4193 = vld [vmem:[%s162 + $0x350] sm:$0xff]
    %v4194 = vld [vmem:[%s162 + $0x358] sm:$0xff]
    %v4195 = vld [vmem:[%s162 + $0x360] sm:$0xff]
    %v4196 = vld [vmem:[%s162 + $0x368] sm:$0xff]
    %v4197 = vld [vmem:[%s162 + $0x370] sm:$0xff]
    %v4198 = vld [vmem:[%s162 + $0x378] sm:$0xff]
    %v4199 = vld [vmem:[%s162 + $0x380] sm:$0xff]
    %v4200 = vld [vmem:[%s162 + $0x388] sm:$0xff]
    %v4201 = vld [vmem:[%s162 + $0x390] sm:$0xff]
    %v4202 = vld [vmem:[%s162 + $0x398] sm:$0xff]
    %v4203 = vld [vmem:[%s162 + $0x3a0] sm:$0xff]
    %v4204 = vld [vmem:[%s162 + $0x3a8] sm:$0xff]
    %v4205 = vld [vmem:[%s162 + $0x3b0] sm:$0xff]
    %v4206 = vld [vmem:[%s162 + $0x3b8] sm:$0xff]
    %v4207 = vld [vmem:[%s162 + $0x3c0] sm:$0xff]
    %v4208 = vld [vmem:[%s162 + $0x3c8] sm:$0xff]
    %v4209 = vld [vmem:[%s162 + $0x3d0] sm:$0xff]
    %v4210 = vld [vmem:[%s162 + $0x3d8] sm:$0xff]
    %v4211 = vld [vmem:[%s162 + $0x3e0] sm:$0xff]
    %v4212 = vld [vmem:[%s162 + $0x3e8] sm:$0xff]
    %v4213 = vld [vmem:[%s162 + $0x3f0] sm:$0xff]
    %v4214 = vld [vmem:[%s162 + $0x3f8] sm:$0xff]
    %v4215 = vld [vmem:[%s162 + $0x400] sm:$0xff]
    %v4216 = vld [vmem:[%s162 + $0x408] sm:$0xff]
    %v4217 = vld [vmem:[%s162 + $0x410] sm:$0xff]
    %v4218 = vld [vmem:[%s162 + $0x418] sm:$0xff]
    %v4219 = vld [vmem:[%s162 + $0x420] sm:$0xff]
    %v4220 = vld [vmem:[%s162 + $0x428] sm:$0xff]
    %v4221 = vld [vmem:[%s162 + $0x430] sm:$0xff]
    %v4222 = vld [vmem:[%s162 + $0x438] sm:$0xff]
    %v4223 = vld [vmem:[%s162 + $0x440] sm:$0xff]
    %v4224 = vld [vmem:[%s162 + $0x448] sm:$0xff]
    %v4225 = vld [vmem:[%s162 + $0x450] sm:$0xff]
    %v4226 = vld [vmem:[%s162 + $0x458] sm:$0xff]
    %v4227 = vld [vmem:[%s162 + $0x460] sm:$0xff]
    %v4228 = vld [vmem:[%s162 + $0x468] sm:$0xff]
    %v4229 = vld [vmem:[%s162 + $0x470] sm:$0xff]
    %v4230 = vld [vmem:[%s162 + $0x478] sm:$0xff]
    %4231 = vmatprep.subr.bf16.mxu0 %v4088
    %4232 = vmatpush1.bf16.msra.mxu0 %v4087
    %4233 = vmatprep.subr.bf16.mxu0 %v4097
    %4234 = vmatpush1.bf16.msra.mxu0 %v4096
    %4235 = vmatprep.subr.bf16.mxu0 %v4106
    %4236 = vmatpush1.bf16.msra.mxu0 %v4105
    %4237 = vmatprep.subr.bf16.mxu0 %v4115
    %4238 = vmatpush1.bf16.msra.mxu0 %v4114
    %4239 = vmatprep.subr.bf16.mxu0 %v4124
    %4240 = vmatpush1.bf16.msra.mxu0 %v4123
    %4241 = vmatprep.subr.bf16.mxu0 %v4133
    %4242 = vmatpush1.bf16.msra.mxu0 %v4132
    %4243 = vmatprep.subr.bf16.mxu0 %v4142
    %4244 = vmatpush1.bf16.msra.mxu0 %v4141
    %4245 = vmatprep.subr.bf16.mxu0 %v4151
    %4246 = vmatpush1.bf16.msra.mxu0 %v4150
    %4247 = vmatprep.subr.bf16.mxu0 %v4160
    %4248 = vmatpush1.bf16.msra.mxu0 %v4159
    %4249 = vmatprep.subr.bf16.mxu0 %v4169
    %4250 = vmatpush1.bf16.msra.mxu0 %v4168
    %4251 = vmatprep.subr.bf16.mxu0 %v4178
    %4252 = vmatpush1.bf16.msra.mxu0 %v4177
    %4253 = vmatprep.subr.bf16.mxu0 %v4187
    %4254 = vmatpush1.bf16.msra.mxu0 %v4186
    %4255 = vmatprep.subr.bf16.mxu0 %v4196
    %4256 = vmatpush1.bf16.msra.mxu0 %v4195
    %4257 = vmatprep.subr.bf16.mxu0 %v4205
    %4258 = vmatpush1.bf16.msra.mxu0 %v4204
    %4259 = vmatprep.subr.bf16.mxu0 %v4214
    %4260 = vmatpush1.bf16.msra.mxu0 %v4213
    %4261 = vmatprep.subr.bf16.mxu0 %v4223
    %4262 = vmatpush1.bf16.msra.mxu0 %v4222
    %4263 = vmatprep.mubr.bf16.mxu0 %v2954
    %4264 = vmatmul.mubr.bf16.gmra.mrb[0].mxu0 %v2953
    %v4265 = vpop.f32.mrb[0].mxu0
    %v4266 = vadd.f32 0.0, %v4265
    %v4267 = vpop.f32.mrb[0].mxu0
    %v4268 = vadd.f32 0.0, %v4267
    %v4269 = vpop.f32.mrb[0].mxu0
    %v4270 = vpop.f32.mrb[0].mxu0
    %4271 = vdwg.mxu0
    %4272 = vmatprep.subr.bf16.mxu0 %v4090
    %4273 = vmatpush1.bf16.msra.mxu0 %v4089
    %4274 = vmatprep.subr.bf16.mxu0 %v4099
    %4275 = vmatpush1.bf16.msra.mxu0 %v4098
    %4276 = vmatprep.subr.bf16.mxu0 %v4108
    %4277 = vmatpush1.bf16.msra.mxu0 %v4107
    %4278 = vmatprep.subr.bf16.mxu0 %v4117
    %4279 = vmatpush1.bf16.msra.mxu0 %v4116
    %4280 = vmatprep.subr.bf16.mxu0 %v4126
    %4281 = vmatpush1.bf16.msra.mxu0 %v4125
    %4282 = vmatprep.subr.bf16.mxu0 %v4135
    %4283 = vmatpush1.bf16.msra.mxu0 %v4134
    %4284 = vmatprep.subr.bf16.mxu0 %v4144
    %4285 = vmatpush1.bf16.msra.mxu0 %v4143
    %4286 = vmatprep.subr.bf16.mxu0 %v4153
    %4287 = vmatpush1.bf16.msra.mxu0 %v4152
    %4288 = vmatprep.subr.bf16.mxu0 %v4162
    %4289 = vmatpush1.bf16.msra.mxu0 %v4161
    %4290 = vmatprep.subr.bf16.mxu0 %v4171
    %4291 = vmatpush1.bf16.msra.mxu0 %v4170
    %4292 = vmatprep.subr.bf16.mxu0 %v4180
    %4293 = vmatpush1.bf16.msra.mxu0 %v4179
    %4294 = vmatprep.subr.bf16.mxu0 %v4189
    %4295 = vmatpush1.bf16.msra.mxu0 %v4188
    %4296 = vmatprep.subr.bf16.mxu0 %v4198
    %4297 = vmatpush1.bf16.msra.mxu0 %v4197
    %4298 = vmatprep.subr.bf16.mxu0 %v4207
    %4299 = vmatpush1.bf16.msra.mxu0 %v4206
    %4300 = vmatprep.subr.bf16.mxu0 %v4216
    %4301 = vmatpush1.bf16.msra.mxu0 %v4215
    %4302 = vmatprep.subr.bf16.mxu0 %v4225
    %4303 = vmatpush1.bf16.msra.mxu0 %v4224
    %4304 = vmatprep.mubr.bf16.mxu0 %v2954
    %4305 = vmatmul.mubr.bf16.gmra.mrb[0].mxu0 %v2953
    %v4306 = vpop.f32.mrb[0].mxu0
    %v4307 = vadd.f32 0.0, %v4306
    %v4308 = vpop.f32.mrb[0].mxu0
    %v4309 = vadd.f32 0.0, %v4308
    %v4310 = vpop.f32.mrb[0].mxu0
    %v4311 = vpop.f32.mrb[0].mxu0
    %4312 = vdwg.mxu0
    %4313 = vmatprep.subr.bf16.mxu0 %v4092
    %4314 = vmatpush1.bf16.msra.mxu0 %v4091
    %4315 = vmatprep.subr.bf16.mxu0 %v4101
    %4316 = vmatpush1.bf16.msra.mxu0 %v4100
    %4317 = vmatprep.subr.bf16.mxu0 %v4110
    %4318 = vmatpush1.bf16.msra.mxu0 %v4109
    %4319 = vmatprep.subr.bf16.mxu0 %v4119
    %4320 = vmatpush1.bf16.msra.mxu0 %v4118
    %4321 = vmatprep.subr.bf16.mxu0 %v4128
    %4322 = vmatpush1.bf16.msra.mxu0 %v4127
    %4323 = vmatprep.subr.bf16.mxu0 %v4137
    %4324 = vmatpush1.bf16.msra.mxu0 %v4136
    %4325 = vmatprep.subr.bf16.mxu0 %v4146
    %4326 = vmatpush1.bf16.msra.mxu0 %v4145
    %4327 = vmatprep.subr.bf16.mxu0 %v4155
    %4328 = vmatpush1.bf16.msra.mxu0 %v4154
    %4329 = vmatprep.subr.bf16.mxu0 %v4164
    %4330 = vmatpush1.bf16.msra.mxu0 %v4163
    %4331 = vmatprep.subr.bf16.mxu0 %v4173
    %4332 = vmatpush1.bf16.msra.mxu0 %v4172
    %4333 = vmatprep.subr.bf16.mxu0 %v4182
    %4334 = vmatpush1.bf16.msra.mxu0 %v4181
    %4335 = vmatprep.subr.bf16.mxu0 %v4191
    %4336 = vmatpush1.bf16.msra.mxu0 %v4190
    %4337 = vmatprep.subr.bf16.mxu0 %v4200
    %4338 = vmatpush1.bf16.msra.mxu0 %v4199
    %4339 = vmatprep.subr.bf16.mxu0 %v4209
    %4340 = vmatpush1.bf16.msra.mxu0 %v4208
    %4341 = vmatprep.subr.bf16.mxu0 %v4218
    %4342 = vmatpush1.bf16.msra.mxu0 %v4217
    %4343 = vmatprep.subr.bf16.mxu0 %v4227
    %4344 = vmatpush1.bf16.msra.mxu0 %v4226
    %4345 = vmatprep.mubr.bf16.mxu0 %v2954
    %4346 = vmatmul.mubr.bf16.gmra.mrb[0].mxu0 %v2953
    %v4347 = vpop.f32.mrb[0].mxu0
    %v4348 = vadd.f32 0.0, %v4347
    %v4349 = vpop.f32.mrb[0].mxu0
    %v4350 = vadd.f32 0.0, %v4349
    %v4351 = vpop.f32.mrb[0].mxu0
    %v4352 = vpop.f32.mrb[0].mxu0
    %4353 = vdwg.mxu0
    %4354 = vmatprep.subr.bf16.mxu0 %v4094
    %4355 = vmatpush1.bf16.msra.mxu0 %v4093
    %4356 = vmatprep.subr.bf16.mxu0 %v4103
    %4357 = vmatpush1.bf16.msra.mxu0 %v4102
    %4358 = vmatprep.subr.bf16.mxu0 %v4112
    %4359 = vmatpush1.bf16.msra.mxu0 %v4111
    %4360 = vmatprep.subr.bf16.mxu0 %v4121
    %4361 = vmatpush1.bf16.msra.mxu0 %v4120
    %4362 = vmatprep.subr.bf16.mxu0 %v4130
    %4363 = vmatpush1.bf16.msra.mxu0 %v4129
    %4364 = vmatprep.subr.bf16.mxu0 %v4139
    %4365 = vmatpush1.bf16.msra.mxu0 %v4138
    %4366 = vmatprep.subr.bf16.mxu0 %v4148
    %4367 = vmatpush1.bf16.msra.mxu0 %v4147
    %4368 = vmatprep.subr.bf16.mxu0 %v4157
    %4369 = vmatpush1.bf16.msra.mxu0 %v4156
    %4370 = vmatprep.subr.bf16.mxu0 %v4166
    %4371 = vmatpush1.bf16.msra.mxu0 %v4165
    %4372 = vmatprep.subr.bf16.mxu0 %v4175
    %4373 = vmatpush1.bf16.msra.mxu0 %v4174
    %4374 = vmatprep.subr.bf16.mxu0 %v4184
    %4375 = vmatpush1.bf16.msra.mxu0 %v4183
    %4376 = vmatprep.subr.bf16.mxu0 %v4193
    %4377 = vmatpush1.bf16.msra.mxu0 %v4192
    %4378 = vmatprep.subr.bf16.mxu0 %v4202
    %4379 = vmatpush1.bf16.msra.mxu0 %v4201
    %4380 = vmatprep.subr.bf16.mxu0 %v4211
    %4381 = vmatpush1.bf16.msra.mxu0 %v4210
    %4382 = vmatprep.subr.bf16.mxu0 %v4220
    %4383 = vmatpush1.bf16.msra.mxu0 %v4219
    %4384 = vmatprep.subr.bf16.mxu0 %v4229
    %4385 = vmatpush1.bf16.msra.mxu0 %v4228
    %4386 = vmatprep.mubr.bf16.mxu0 %v2954
    %4387 = vmatmul.mubr.bf16.gmra.mrb[0].mxu0 %v2953
    %v4388 = vpop.f32.mrb[0].mxu0
    %v4389 = vadd.f32 0.0, %v4388
    %v4390 = vpop.f32.mrb[0].mxu0
    %v4391 = vadd.f32 0.0, %v4390
    %v4392 = vpop.f32.mrb[0].mxu0
    %v4393 = vpop.f32.mrb[0].mxu0
    %4394 = vdwg.mxu0
    %4395 = vmatprep.subr.bf16.mxu0 0
    %4396 = vmatpush1.bf16.msra.mxu0 %v4095
    %4397 = vmatprep.subr.bf16.mxu0 0
    %4398 = vmatpush1.bf16.msra.mxu0 %v4104
    %4399 = vmatprep.subr.bf16.mxu0 0
    %4400 = vmatpush1.bf16.msra.mxu0 %v4113
    %4401 = vmatprep.subr.bf16.mxu0 0
    %4402 = vmatpush1.bf16.msra.mxu0 %v4122
    %4403 = vmatprep.subr.bf16.mxu0 0
    %4404 = vmatpush1.bf16.msra.mxu0 %v4131
    %4405 = vmatprep.subr.bf16.mxu0 0
    %4406 = vmatpush1.bf16.msra.mxu0 %v4140
    %4407 = vmatprep.subr.bf16.mxu0 0
    %4408 = vmatpush1.bf16.msra.mxu0 %v4149
    %4409 = vmatprep.subr.bf16.mxu0 0
    %4410 = vmatpush1.bf16.msra.mxu0 %v4158
    %4411 = vmatprep.subr.bf16.mxu0 0
    %4412 = vmatpush1.bf16.msra.mxu0 %v4167
    %4413 = vmatprep.subr.bf16.mxu0 0
    %4414 = vmatpush1.bf16.msra.mxu0 %v4176
    %4415 = vmatprep.subr.bf16.mxu0 0
    %4416 = vmatpush1.bf16.msra.mxu0 %v4185
    %4417 = vmatprep.subr.bf16.mxu0 0
    %4418 = vmatpush1.bf16.msra.mxu0 %v4194
    %4419 = vmatprep.subr.bf16.mxu0 0
    %4420 = vmatpush1.bf16.msra.mxu0 %v4203
    %4421 = vmatprep.subr.bf16.mxu0 0
    %4422 = vmatpush1.bf16.msra.mxu0 %v4212
    %4423 = vmatprep.subr.bf16.mxu0 0
    %4424 = vmatpush1.bf16.msra.mxu0 %v4221
    %4425 = vmatprep.subr.bf16.mxu0 0
    %4426 = vmatpush1.bf16.msra.mxu0 %v4230
    %4427 = vmatprep.mubr.bf16.mxu0 %v2954
    %4428 = vmatmul.mubr.bf16.gmra.mrb[0].mxu0 %v2953
    %v4429 = vpop.f32.mrb[0].mxu0
    %v4430 = vadd.f32 0.0, %v4429
    %v4431 = vpop.f32.mrb[0].mxu0
    %v4432 = vpop.f32.mrb[0].mxu0
    %v4433 = vpop.f32.mrb[0].mxu0
    %4434 = vdwg.mxu0
    %v4435 = vadd.f32 %v4076, %v4266
    %v4436 = vadd.f32 %v4077, %v4268
    %v4437 = vadd.f32 %v4078, %v4307
    %v4438 = vadd.f32 %v4079, %v4309
    %v4439 = vadd.f32 %v4080, %v4348
    %v4440 = vadd.f32 %v4081, %v4350
    %v4441 = vadd.f32 %v4082, %v4389
    %v4442 = vadd.f32 %v4083, %v4391
    %v4443 = vadd.f32 %v4084, %v4430
    %v4444 = vld [vmem:[#allocation10] sm:$0xff]
    %v4445 = vld [vmem:[#allocation10 + $0x8] sm:$0x1]
    %v4448 = vlaneseq
    %v4449 = vshrl.u32 %v4448, 7
    %v4450 = vsub.s32 0, %v4449
    %v4451 = vrot.slane %v4444, %v4450
    %v4452 = vlaneseq
    %v4453 = vshrl.u32 %v4452, 7
    %v4454 = vsub.s32 1, %v4453
    %v4455 = vrot.slane %v4444, %v4454
    %v4456 = vlaneseq
    %v4457 = vshrl.u32 %v4456, 7
    %v4458 = vsub.s32 2, %v4457
    %v4459 = vrot.slane %v4444, %v4458
    %v4460 = vlaneseq
    %v4461 = vshrl.u32 %v4460, 7
    %v4462 = vsub.s32 3, %v4461
    %v4463 = vrot.slane %v4444, %v4462
    %v4464 = vlaneseq
    %v4465 = vshrl.u32 %v4464, 7
    %v4466 = vsub.s32 4, %v4465
    %v4467 = vrot.slane %v4444, %v4466
    %v4468 = vlaneseq
    %v4469 = vshrl.u32 %v4468, 7
    %v4470 = vsub.s32 5, %v4469
    %v4471 = vrot.slane %v4444, %v4470
    %v4472 = vlaneseq
    %v4473 = vshrl.u32 %v4472, 7
    %v4474 = vsub.s32 6, %v4473
    %v4475 = vrot.slane %v4444, %v4474
    %v4476 = vlaneseq
    %v4477 = vshrl.u32 %v4476, 7
    %v4478 = vsub.s32 7, %v4477
    %v4479 = vrot.slane %v4444, %v4478
    %v4480 = vlaneseq
    %v4481 = vshrl.u32 %v4480, 7
    %v4482 = vsub.s32 0, %v4481
    %v4483 = vrot.slane %v4445, %v4482
    %v4493 = vadd.f32 %v4435, %v4451
    %v4494 = vadd.f32 %v4436, %v4455
    %v4495 = vadd.f32 %v4437, %v4459
    %v4496 = vadd.f32 %v4438, %v4463
    %v4497 = vadd.f32 %v4439, %v4467
    %v4498 = vadd.f32 %v4440, %v4471
    %v4499 = vadd.f32 %v4441, %v4475
    %v4500 = vadd.f32 %v4442, %v4479
    %v4501 = vadd.f32 %v4443, %v4483
    %4502 = vst [vmem:[#allocation12] sm:$0xff] %v4493
    %4503 = vst [vmem:[#allocation12 + $0x8] sm:$0xff] %v4494
    %4504 = vst [vmem:[#allocation12 + $0x10] sm:$0xff] %v4495
    %4505 = vst [vmem:[#allocation12 + $0x18] sm:$0xff] %v4496
    %4506 = vst [vmem:[#allocation12 + $0x20] sm:$0xff] %v4497
    %4507 = vst [vmem:[#allocation12 + $0x28] sm:$0xff] %v4498
    %4508 = vst [vmem:[#allocation12 + $0x30] sm:$0xff] %v4499
    %4509 = vst [vmem:[#allocation12 + $0x38] sm:$0xff] %v4500
    %4510 = vst [vmem:[#allocation12 + $0x40] sm:$0xff] %v4501
    // Predicated region
    $region34: #{tpu_custom_call.1} parent=1 // pred_check
      _
    $region35: #{tpu_custom_call.1} parent=1 // pred_check_branch
      %4512 = sbr.rel (0) target = $region37
    $region36: #{tpu_custom_call.1} parent=1 // pred_region
      %s4514 = ssub.s32 1152, 1152
      %4515 = vsyncadd [#allocation6], %s4514
      %s4517 = sshll.u32 [#allocation12], 4
      %s4518 = int_to_ptr.vmem [resolvable:$true] %s4517
      %4520 = dma.vmem_to_hbm [thread:$0]  %s4518, 1152, %s7, [#allocation6]
    $region37: #{tpu_custom_call.1} parent=1 // pred_fallthru
      _
    // Predicated region
    $region38: #{tpu_custom_call.1} parent=1 // pred_check
      _
    $region39: #{tpu_custom_call.1} parent=1 // pred_check_branch
      %4522 = sbr.rel (0) target = $region41
    $region40: #{tpu_custom_call.1} parent=1 // pred_region
      %4523 = dma.done [#allocation6], 1152
    $region41: #{tpu_custom_call.1} parent=1 // pred_fallthru
      _
    %4524 = vsyncpa [#allocation5], 1
    %4525 = vsyncpa [#allocation8], 1
    %4526 = vsyncpa [#allocation11], 1
    %4527 = vsyncpa [#allocation6], 1
  %4528 = vsyncmov [#allocation3]
  %s4529 = vpop.sfrf %4528
  %p4530 = scmp.eq.s32.totalorder %s4529, 0
  %p4531 = pneg %p4530
  %4533 = shalt.err (%p4531)
  %s4534 = scalar_lea.sflag [#allocation3], 1
  %4535 = vsyncmov %s4534
  %s4536 = vpop.sfrf %4535
  %p4537 = scmp.eq.s32.totalorder %s4536, 0
  %p4538 = pneg %p4537
  %4540 = shalt.err (%p4538)
  %s4541 = scalar_lea.sflag [#allocation3], 2
  %4542 = vsyncmov %s4541
  %s4543 = vpop.sfrf %4542
  %p4544 = scmp.eq.s32.totalorder %s4543, 0
  %p4545 = pneg %p4544
  %4547 = shalt.err (%p4545)

</llo_original>
